<compile_context>
chip_gen: v7x
topology: tpu7x:2x2x1
jax: 0.10.0
libtpu: 0.0.40
codegen_flags: <defaults>
</compile_context>

<pallas_src>
import math

import jax
import jax.numpy as jnp
from jax.experimental import pallas as pl
from jax.experimental.pallas import tpu as pltpu

N_EMBD = 64  # fixed by the module


def _head_kernel(x_ref, wqkv_ref, o_ref):
    """One grid step: Bb batch elements of fused-QKV single-head attention.

    x_ref:    (Bb, T, E)  f32
    wqkv_ref: (E, 3H)     f32   (1/sqrt(H) already folded into the Q columns)
    o_ref:    (Bb, T, H)  f32
    """
    Bb, T, E = x_ref.shape
    H = o_ref.shape[-1]

    # Fused Q/K/V projection as a single MXU pass over the flattened (Bb*T, E)
    # slab: N = 3H output lanes instead of three under-filled N = H matmuls,
    # and Bb*T rows fill the wide MXU on v6e/v7x.  bf16 operands, f32 accum.
    x = x_ref[...].reshape(Bb * T, E).astype(jnp.bfloat16)
    w = wqkv_ref[...].astype(jnp.bfloat16)
    qkv = jnp.dot(x, w, preferred_element_type=jnp.float32)       # (Bb*T, 3H) f32
    qkv = qkv.reshape(Bb, T, 3 * H)                                # leading-dim split only

    q = qkv[..., 0 * H:1 * H]      # already scaled by 1/sqrt(H) via the wrapper
    k = qkv[..., 1 * H:2 * H]
    v = qkv[..., 2 * H:3 * H]

    # scores[b, q, k]: contraction over the last dim of both operands, so the
    # k-transpose is folded into the MXU operand path (no materialized .T).
    scores = jnp.einsum(
        "bqh,bkh->bqk",
        q.astype(jnp.bfloat16), k.astype(jnp.bfloat16),
        preferred_element_type=jnp.float32)                        # (Bb, T, T) f32

    # NOTE: the reference PyTorch forward calls the NON-in-place masked_fill and
    # discards its result, so the causal mask has no effect on the output.
    # Reproduced exactly: plain softmax over the unmasked scores (f32 math).
    m = jnp.max(scores, axis=-1, keepdims=True)
    e = jnp.exp(scores - m)
    denom = jnp.sum(e, axis=-1, keepdims=True)
    attn = e * pl.reciprocal(denom, approx=True)   # EUP reciprocal + VALU mul, no divide

    out = jnp.einsum(
        "bqk,bkh->bqh",
        attn.astype(jnp.bfloat16), v.astype(jnp.bfloat16),
        preferred_element_type=jnp.float32)                        # (Bb, T, H) f32

    # NOTE(perf): H=32 < 128 so this store is lane-masked; making it lane-dense
    # would require an in-kernel sublane->lane fold (relayout copy) or a wrapper
    # transpose, and the store path is not the binding unit at these shapes, so
    # the straightforward (Bb, T, H) block is kept.
    o_ref[...] = out.astype(o_ref.dtype)


def _pick_block_batch(B, T, H):
    """Batch elements per grid step.

    Pick the largest Bb that (a) divides B, (b) keeps >= 2 grid steps when possible
    so both TensorCores get work under "parallel", and (c) keeps the per-step live
    VMEM (dominated by the (Bb, T, T) f32 scores + exp tiles, plus the double-
    buffered x / out blocks) comfortably under a ~24 MiB budget (fits v7x's 64 MiB
    VMEM with headroom).
    """
    budget = 24 * 1024 * 1024
    for bb in (16, 8, 4, 2):
        if B % bb != 0:
            continue
        if B // bb < 2 and B > bb:
            continue
        live = bb * T * T * 4 * 2                      # scores + exp (f32)
        live += 2 * bb * T * (N_EMBD + H) * 4          # double-buffered x in, out
        live += bb * T * (3 * H) * 4                   # qkv
        if live <= budget:
            return bb
    return 1


def head_forward(x, wq, wk, wv):
    """x: (B, T, n_embd) f32; w*: (n_embd, head_size) f32 -> (B, T, head_size) f32."""
    B, T, E = x.shape
    H = wq.shape[1]
    assert E == N_EMBD
    assert wq.shape == (E, H) and wk.shape == (E, H) and wv.shape == (E, H)

    # One-time weight prep (tiny (E, 3H) array): fold the 1/sqrt(head_size)
    # softmax scale into the Q projection and fuse Q/K/V into a single weight,
    # so the kernel does one well-filled matmul and zero per-element scaling.
    scale = 1.0 / math.sqrt(H)
    wqkv = jnp.concatenate([wq * scale, wk, wv], axis=1)           # (E, 3H)

    Bb = _pick_block_batch(B, T, H)
    grid = (B // Bb,)

    # NOTE: at long sequence lengths (T >= ~2K) the monolithic (Bb, T, T) scores
    # tile stops fitting VMEM even at Bb=1; that regime needs a flash-style
    # online-softmax KV loop instead of this single-tile kernel.
    return pl.pallas_call(
        _head_kernel,
        out_shape=jax.ShapeDtypeStruct((B, T, H), jnp.float32),
        grid=grid,
        in_specs=[
            pl.BlockSpec((Bb, T, E), lambda b: (b, 0, 0)),   # Bb batch elems per step
            pl.BlockSpec((E, 3 * H), lambda b: (0, 0)),      # fused weight, stays resident
        ],
        out_specs=pl.BlockSpec((Bb, T, H), lambda b: (b, 0, 0)),
        compiler_params=pltpu.CompilerParams(
            dimension_semantics=("parallel",),
            vmem_limit_bytes=48 << 20,
        ),
    )(x, wqkv)


def head_reference(x, wq, wk, wv):
    H = wq.shape[1]
    q = jnp.einsum("bte,eh->bth", x, wq)
    k = jnp.einsum("bte,eh->bth", x, wk)
    v = jnp.einsum("bte,eh->bth", x, wv)
    scores = jnp.einsum("bqh,bkh->bqk", q, k) / math.sqrt(H)
    attn = jax.nn.softmax(scores, axis=-1)
    return jnp.einsum("bqk,bkh->bqh", attn, v)


if __name__ == "__main__":
    B, T, HEAD_SIZE = 8, 128, 32   # lane-aligned T; B chosen so the grid has >= 2 steps

    key = jax.random.PRNGKey(0)
    kx, kq, kk, kv = jax.random.split(key, 4)

    x = jax.random.normal(kx, (B, T, N_EMBD), dtype=jnp.float32)
    # Deterministic "Linear(bias=False)"-style init: U(-1/sqrt(n_embd), 1/sqrt(n_embd)).
    bound = 1.0 / math.sqrt(N_EMBD)
    wq = jax.random.uniform(kq, (N_EMBD, HEAD_SIZE), jnp.float32, -bound, bound)
    wk = jax.random.uniform(kk, (N_EMBD, HEAD_SIZE), jnp.float32, -bound, bound)
    wv = jax.random.uniform(kv, (N_EMBD, HEAD_SIZE), jnp.float32, -bound, bound)

    out = jax.block_until_ready(head_forward(x, wq, wk, wv))
    ref = jax.block_until_ready(head_reference(x, wq, wk, wv))

    assert out.shape == (B, T, HEAD_SIZE)
    # bf16 MXU operands with f32 accumulation: comfortably within 1e-2 of the f32 reference.
    assert jnp.allclose(out, ref, rtol=1e-2, atol=1e-2), "mismatch vs JAX reference"

    print("KERNEL_OK")
</pallas_src>

<mosaic_0001>
module attributes {stable_mosaic.version = 11 : i64} {
  func.func @_head_kernel(%arg0: i32, %arg1: memref<8x128x64xf32, #tpu.memory_space<vmem>>, %arg2: memref<64x96xf32, #tpu.memory_space<vmem>>, %arg3: memref<8x128x32xf32, #tpu.memory_space<vmem>>) attributes {dimension_semantics = [#tpu.dimension_semantics<parallel>], iteration_bounds = array<i64: 1>, scalar_prefetch = 0 : i64, scratch_operands = 0 : i64, tpu.core_type = #tpu.core_type<tc>, window_params = [{transform_indices = @transform_0, window_bounds = array<i64: 8, 128, 64>}, {pipeline_mode = #tpu.pipeline_mode<synchronous>, transform_indices = @transform_1, window_bounds = array<i64: 64, 96>}, {transform_indices = @transform_2, window_bounds = array<i64: 8, 128, 32>}]} {
    %c0 = arith.constant 0 : index
    %c0_0 = arith.constant 0 : index
    %c0_1 = arith.constant 0 : index
    %0 = vector.load %arg1[%c0, %c0_0, %c0_1] : memref<8x128x64xf32, #tpu.memory_space<vmem>>, vector<8x128x64xf32>
    %1 = vector.shape_cast %0 : vector<8x128x64xf32> to vector<1024x64xf32>
    %2 = arith.truncf %1 : vector<1024x64xf32> to vector<1024x64xbf16>
    %c0_2 = arith.constant 0 : index
    %c0_3 = arith.constant 0 : index
    %3 = vector.load %arg2[%c0_2, %c0_3] : memref<64x96xf32, #tpu.memory_space<vmem>>, vector<64x96xf32>
    %4 = arith.truncf %3 : vector<64x96xf32> to vector<64x96xbf16>
    %cst = arith.constant dense<0.000000e+00> : vector<1024x96xf32>
    %5 = tpu.matmul %2, %4, %cst {dimension_numbers = #tpu.dot_dimension_numbers<[1], [0], [0], [1], [0, 0, 1, 1], [], []>} : vector<1024x64xbf16>, vector<64x96xbf16>, vector<1024x96xf32> -> vector<1024x96xf32>
    %6 = vector.shape_cast %5 : vector<1024x96xf32> to vector<8x128x96xf32>
    %7 = vector.extract_strided_slice %6 {offsets = [0, 0, 0], sizes = [8, 128, 32], strides = [1, 1, 1]} : vector<8x128x96xf32> to vector<8x128x32xf32>
    %8 = vector.extract_strided_slice %6 {offsets = [0, 0, 32], sizes = [8, 128, 32], strides = [1, 1, 1]} : vector<8x128x96xf32> to vector<8x128x32xf32>
    %9 = vector.extract_strided_slice %6 {offsets = [0, 0, 64], sizes = [8, 128, 32], strides = [1, 1, 1]} : vector<8x128x96xf32> to vector<8x128x32xf32>
    %10 = arith.truncf %7 : vector<8x128x32xf32> to vector<8x128x32xbf16>
    %11 = arith.truncf %8 : vector<8x128x32xf32> to vector<8x128x32xbf16>
    "tpu.trace_start"() <{level = 10 : i32, message = "bqh,bkh->bqk"}> : () -> ()
    %cst_4 = arith.constant dense<0.000000e+00> : vector<8x128x128xf32>
    %12 = tpu.matmul %10, %11, %cst_4 {dimension_numbers = #tpu.dot_dimension_numbers<[2], [2], [1], [1], [0, 0, 0, 1, 1, 1], [0], [0]>} : vector<8x128x32xbf16>, vector<8x128x32xbf16>, vector<8x128x128xf32> -> vector<8x128x128xf32>
    "tpu.trace_stop"() : () -> ()
    %cst_5 = arith.constant dense<0xFF800000> : vector<8x128xf32>
    %13 = vector.multi_reduction <maximumf>, %12, %cst_5 [2] : vector<8x128x128xf32> to vector<8x128xf32>
    %14 = vector.shape_cast %13 : vector<8x128xf32> to vector<8x128x1xf32>
    %15 = vector.broadcast %14 : vector<8x128x1xf32> to vector<8x128x128xf32>
    %16 = arith.subf %12, %15 : vector<8x128x128xf32>
    %17 = math.exp %16 : vector<8x128x128xf32>
    %cst_6 = arith.constant dense<0.000000e+00> : vector<8x128xf32>
    %18 = vector.multi_reduction <add>, %17, %cst_6 [2] : vector<8x128x128xf32> to vector<8x128xf32>
    %19 = vector.shape_cast %18 : vector<8x128xf32> to vector<8x128x1xf32>
    %20 = tpu.reciprocal %19 {approx = true} : vector<8x128x1xf32> -> vector<8x128x1xf32>
    %21 = vector.broadcast %20 : vector<8x128x1xf32> to vector<8x128x128xf32>
    %22 = arith.mulf %17, %21 : vector<8x128x128xf32>
    %23 = arith.truncf %22 : vector<8x128x128xf32> to vector<8x128x128xbf16>
    %24 = arith.truncf %9 : vector<8x128x32xf32> to vector<8x128x32xbf16>
    "tpu.trace_start"() <{level = 10 : i32, message = "bqk,bkh->bqh"}> : () -> ()
    %cst_7 = arith.constant dense<0.000000e+00> : vector<8x128x32xf32>
    %25 = tpu.matmul %23, %24, %cst_7 {dimension_numbers = #tpu.dot_dimension_numbers<[2], [1], [1], [2], [0, 0, 0, 1, 1, 2], [0], [0]>} : vector<8x128x128xbf16>, vector<8x128x32xbf16>, vector<8x128x32xf32> -> vector<8x128x32xf32>
    "tpu.trace_stop"() : () -> ()
    %c0_8 = arith.constant 0 : index
    %c0_9 = arith.constant 0 : index
    %c0_10 = arith.constant 0 : index
    %26 = vector.load %arg3[%c0_8, %c0_9, %c0_10] : memref<8x128x32xf32, #tpu.memory_space<vmem>>, vector<8x128x32xf32>
    tpu.vector_store %arg3[%c0_8, %c0_9, %c0_10], %25 {strides = array<i32>} : memref<8x128x32xf32, #tpu.memory_space<vmem>>, vector<8x128x32xf32>,
    return
  }
  func.func @transform_0(%arg0: i32) -> (i32, i32, i32) {
    %c0_i32 = arith.constant 0 : i32
    %c0_i32_0 = arith.constant 0 : i32
    %c0_i32_1 = arith.constant 0 : i32
    return %arg0, %c0_i32, %c0_i32_0 : i32, i32, i32
  }
  func.func @transform_1(%arg0: i32) -> (i32, i32) {
    %c0_i32 = arith.constant 0 : i32
    %c0_i32_0 = arith.constant 0 : i32
    %c0_i32_1 = arith.constant 0 : i32
    return %c0_i32, %c0_i32_0 : i32, i32
  }
  func.func @transform_2(%arg0: i32) -> (i32, i32, i32) {
    %c0_i32 = arith.constant 0 : i32
    %c0_i32_0 = arith.constant 0 : i32
    %c0_i32_1 = arith.constant 0 : i32
    return %arg0, %c0_i32, %c0_i32_0 : i32, i32, i32
  }
}

</mosaic_0001>

<llo_original>
// kernel: tpu_custom_call.1
$region0: #{tpu_custom_call.1}
  #allocation0 [shape = 'u32[]', space=smem, size = 0x4, offset = 0x4, fixed_abs, tag = 'smem constant byte address 0x4 - core index']
  #allocation1 [shape = 'u32[144,128]{1,0:T(1,128)}', space=vmem, size = 0x12000, scoped, tag = 'internal scratch']
  %s0 = inlined_call_operand.vmem [shape: f32[8,128,64], index: 0, kind: input, shape index: {}]
  %s1 = inlined_call_operand.vmem [shape: f32[64,96], index: 1, kind: input, shape index: {}]
  %s2 = inlined_call_operand.vmem [shape: f32[8,128,32], index: 2, kind: output, shape index: {}]
  %s3 = sld [smem:[#allocation0]]
  $region18: #{tpu_custom_call.1} parent=0
    _
  %s5 = ssub.s32 1, %s3
  %s6 = scalar_select 0, %s5, %s3
  // Predicated region
  $region2: #{tpu_custom_call.1} parent=0 // pred_check
    _
  $region3: #{tpu_custom_call.1} parent=0 // pred_check_branch
    %8 = sbr.rel (0) target = $region5
  $region4: #{tpu_custom_call.1} parent=0 // pred_region
    _
  $region5: #{tpu_custom_call.1} parent=0 // pred_fallthru
    _
  // Predicated region
  $region6: #{tpu_custom_call.1} parent=0 // pred_check
    _
  $region7: #{tpu_custom_call.1} parent=0 // pred_check_branch
    %10 = sbr.rel (0) target = $region9
  $region8: #{tpu_custom_call.1} parent=0 // pred_region
    _
  $region9: #{tpu_custom_call.1} parent=0 // pred_fallthru
    _
  %v12 = vld [vmem:[%s0] sm:$0xff]
  %v13 = vld [vmem:[%s0 + $0x8] sm:$0xff]
  %v14 = vld [vmem:[%s0 + $0x10] sm:$0xff]
  %v15 = vld [vmem:[%s0 + $0x18] sm:$0xff]
  %v16 = vld [vmem:[%s0 + $0x20] sm:$0xff]
  %v17 = vld [vmem:[%s0 + $0x28] sm:$0xff]
  %v18 = vld [vmem:[%s0 + $0x30] sm:$0xff]
  %v19 = vld [vmem:[%s0 + $0x38] sm:$0xff]
  %v20 = vld [vmem:[%s0 + $0x40] sm:$0xff]
  %v21 = vld [vmem:[%s0 + $0x48] sm:$0xff]
  %v22 = vld [vmem:[%s0 + $0x50] sm:$0xff]
  %v23 = vld [vmem:[%s0 + $0x58] sm:$0xff]
  %v24 = vld [vmem:[%s0 + $0x60] sm:$0xff]
  %v25 = vld [vmem:[%s0 + $0x68] sm:$0xff]
  %v26 = vld [vmem:[%s0 + $0x70] sm:$0xff]
  %v27 = vld [vmem:[%s0 + $0x78] sm:$0xff]
  %v28 = vld [vmem:[%s0 + $0x80] sm:$0xff]
  %v29 = vld [vmem:[%s0 + $0x88] sm:$0xff]
  %v30 = vld [vmem:[%s0 + $0x90] sm:$0xff]
  %v31 = vld [vmem:[%s0 + $0x98] sm:$0xff]
  %v32 = vld [vmem:[%s0 + $0xa0] sm:$0xff]
  %v33 = vld [vmem:[%s0 + $0xa8] sm:$0xff]
  %v34 = vld [vmem:[%s0 + $0xb0] sm:$0xff]
  %v35 = vld [vmem:[%s0 + $0xb8] sm:$0xff]
  %v36 = vld [vmem:[%s0 + $0xc0] sm:$0xff]
  %v37 = vld [vmem:[%s0 + $0xc8] sm:$0xff]
  %v38 = vld [vmem:[%s0 + $0xd0] sm:$0xff]
  %v39 = vld [vmem:[%s0 + $0xd8] sm:$0xff]
  %v40 = vld [vmem:[%s0 + $0xe0] sm:$0xff]
  %v41 = vld [vmem:[%s0 + $0xe8] sm:$0xff]
  %v42 = vld [vmem:[%s0 + $0xf0] sm:$0xff]
  %v43 = vld [vmem:[%s0 + $0xf8] sm:$0xff]
  %v44 = vld [vmem:[%s0 + $0x100] sm:$0xff]
  %v45 = vld [vmem:[%s0 + $0x108] sm:$0xff]
  %v46 = vld [vmem:[%s0 + $0x110] sm:$0xff]
  %v47 = vld [vmem:[%s0 + $0x118] sm:$0xff]
  %v48 = vld [vmem:[%s0 + $0x120] sm:$0xff]
  %v49 = vld [vmem:[%s0 + $0x128] sm:$0xff]
  %v50 = vld [vmem:[%s0 + $0x130] sm:$0xff]
  %v51 = vld [vmem:[%s0 + $0x138] sm:$0xff]
  %v52 = vld [vmem:[%s0 + $0x140] sm:$0xff]
  %v53 = vld [vmem:[%s0 + $0x148] sm:$0xff]
  %v54 = vld [vmem:[%s0 + $0x150] sm:$0xff]
  %v55 = vld [vmem:[%s0 + $0x158] sm:$0xff]
  %v56 = vld [vmem:[%s0 + $0x160] sm:$0xff]
  %v57 = vld [vmem:[%s0 + $0x168] sm:$0xff]
  %v58 = vld [vmem:[%s0 + $0x170] sm:$0xff]
  %v59 = vld [vmem:[%s0 + $0x178] sm:$0xff]
  %v60 = vld [vmem:[%s0 + $0x180] sm:$0xff]
  %v61 = vld [vmem:[%s0 + $0x188] sm:$0xff]
  %v62 = vld [vmem:[%s0 + $0x190] sm:$0xff]
  %v63 = vld [vmem:[%s0 + $0x198] sm:$0xff]
  %v64 = vld [vmem:[%s0 + $0x1a0] sm:$0xff]
  %v65 = vld [vmem:[%s0 + $0x1a8] sm:$0xff]
  %v66 = vld [vmem:[%s0 + $0x1b0] sm:$0xff]
  %v67 = vld [vmem:[%s0 + $0x1b8] sm:$0xff]
  %v68 = vld [vmem:[%s0 + $0x1c0] sm:$0xff]
  %v69 = vld [vmem:[%s0 + $0x1c8] sm:$0xff]
  %v70 = vld [vmem:[%s0 + $0x1d0] sm:$0xff]
  %v71 = vld [vmem:[%s0 + $0x1d8] sm:$0xff]
  %v72 = vld [vmem:[%s0 + $0x1e0] sm:$0xff]
  %v73 = vld [vmem:[%s0 + $0x1e8] sm:$0xff]
  %v74 = vld [vmem:[%s0 + $0x1f0] sm:$0xff]
  %v75 = vld [vmem:[%s0 + $0x1f8] sm:$0xff]
  %v76 = vld [vmem:[%s0 + $0x200] sm:$0xff]
  %v77 = vld [vmem:[%s0 + $0x208] sm:$0xff]
  %v78 = vld [vmem:[%s0 + $0x210] sm:$0xff]
  %v79 = vld [vmem:[%s0 + $0x218] sm:$0xff]
  %v80 = vld [vmem:[%s0 + $0x220] sm:$0xff]
  %v81 = vld [vmem:[%s0 + $0x228] sm:$0xff]
  %v82 = vld [vmem:[%s0 + $0x230] sm:$0xff]
  %v83 = vld [vmem:[%s0 + $0x238] sm:$0xff]
  %v84 = vld [vmem:[%s0 + $0x240] sm:$0xff]
  %v85 = vld [vmem:[%s0 + $0x248] sm:$0xff]
  %v86 = vld [vmem:[%s0 + $0x250] sm:$0xff]
  %v87 = vld [vmem:[%s0 + $0x258] sm:$0xff]
  %v88 = vld [vmem:[%s0 + $0x260] sm:$0xff]
  %v89 = vld [vmem:[%s0 + $0x268] sm:$0xff]
  %v90 = vld [vmem:[%s0 + $0x270] sm:$0xff]
  %v91 = vld [vmem:[%s0 + $0x278] sm:$0xff]
  %v92 = vld [vmem:[%s0 + $0x280] sm:$0xff]
  %v93 = vld [vmem:[%s0 + $0x288] sm:$0xff]
  %v94 = vld [vmem:[%s0 + $0x290] sm:$0xff]
  %v95 = vld [vmem:[%s0 + $0x298] sm:$0xff]
  %v96 = vld [vmem:[%s0 + $0x2a0] sm:$0xff]
  %v97 = vld [vmem:[%s0 + $0x2a8] sm:$0xff]
  %v98 = vld [vmem:[%s0 + $0x2b0] sm:$0xff]
  %v99 = vld [vmem:[%s0 + $0x2b8] sm:$0xff]
  %v100 = vld [vmem:[%s0 + $0x2c0] sm:$0xff]
  %v101 = vld [vmem:[%s0 + $0x2c8] sm:$0xff]
  %v102 = vld [vmem:[%s0 + $0x2d0] sm:$0xff]
  %v103 = vld [vmem:[%s0 + $0x2d8] sm:$0xff]
  %v104 = vld [vmem:[%s0 + $0x2e0] sm:$0xff]
  %v105 = vld [vmem:[%s0 + $0x2e8] sm:$0xff]
  %v106 = vld [vmem:[%s0 + $0x2f0] sm:$0xff]
  %v107 = vld [vmem:[%s0 + $0x2f8] sm:$0xff]
  %v108 = vld [vmem:[%s0 + $0x300] sm:$0xff]
  %v109 = vld [vmem:[%s0 + $0x308] sm:$0xff]
  %v110 = vld [vmem:[%s0 + $0x310] sm:$0xff]
  %v111 = vld [vmem:[%s0 + $0x318] sm:$0xff]
  %v112 = vld [vmem:[%s0 + $0x320] sm:$0xff]
  %v113 = vld [vmem:[%s0 + $0x328] sm:$0xff]
  %v114 = vld [vmem:[%s0 + $0x330] sm:$0xff]
  %v115 = vld [vmem:[%s0 + $0x338] sm:$0xff]
  %v116 = vld [vmem:[%s0 + $0x340] sm:$0xff]
  %v117 = vld [vmem:[%s0 + $0x348] sm:$0xff]
  %v118 = vld [vmem:[%s0 + $0x350] sm:$0xff]
  %v119 = vld [vmem:[%s0 + $0x358] sm:$0xff]
  %v120 = vld [vmem:[%s0 + $0x360] sm:$0xff]
  %v121 = vld [vmem:[%s0 + $0x368] sm:$0xff]
  %v122 = vld [vmem:[%s0 + $0x370] sm:$0xff]
  %v123 = vld [vmem:[%s0 + $0x378] sm:$0xff]
  %v124 = vld [vmem:[%s0 + $0x380] sm:$0xff]
  %v125 = vld [vmem:[%s0 + $0x388] sm:$0xff]
  %v126 = vld [vmem:[%s0 + $0x390] sm:$0xff]
  %v127 = vld [vmem:[%s0 + $0x398] sm:$0xff]
  %v128 = vld [vmem:[%s0 + $0x3a0] sm:$0xff]
  %v129 = vld [vmem:[%s0 + $0x3a8] sm:$0xff]
  %v130 = vld [vmem:[%s0 + $0x3b0] sm:$0xff]
  %v131 = vld [vmem:[%s0 + $0x3b8] sm:$0xff]
  %v132 = vld [vmem:[%s0 + $0x3c0] sm:$0xff]
  %v133 = vld [vmem:[%s0 + $0x3c8] sm:$0xff]
  %v134 = vld [vmem:[%s0 + $0x3d0] sm:$0xff]
  %v135 = vld [vmem:[%s0 + $0x3d8] sm:$0xff]
  %v136 = vld [vmem:[%s0 + $0x3e0] sm:$0xff]
  %v137 = vld [vmem:[%s0 + $0x3e8] sm:$0xff]
  %v138 = vld [vmem:[%s0 + $0x3f0] sm:$0xff]
  %v139 = vld [vmem:[%s0 + $0x3f8] sm:$0xff]
  %v140 = vpack.c.bf16 %v13, %v12
  %v141 = vpack.c.bf16 %v15, %v14
  %v142 = vpack.c.bf16 %v17, %v16
  %v143 = vpack.c.bf16 %v19, %v18
  %v144 = vpack.c.bf16 %v21, %v20
  %v145 = vpack.c.bf16 %v23, %v22
  %v146 = vpack.c.bf16 %v25, %v24
  %v147 = vpack.c.bf16 %v27, %v26
  %v148 = vpack.c.bf16 %v29, %v28
  %v149 = vpack.c.bf16 %v31, %v30
  %v150 = vpack.c.bf16 %v33, %v32
  %v151 = vpack.c.bf16 %v35, %v34
  %v152 = vpack.c.bf16 %v37, %v36
  %v153 = vpack.c.bf16 %v39, %v38
  %v154 = vpack.c.bf16 %v41, %v40
  %v155 = vpack.c.bf16 %v43, %v42
  %v156 = vpack.c.bf16 %v45, %v44
  %v157 = vpack.c.bf16 %v47, %v46
  %v158 = vpack.c.bf16 %v49, %v48
  %v159 = vpack.c.bf16 %v51, %v50
  %v160 = vpack.c.bf16 %v53, %v52
  %v161 = vpack.c.bf16 %v55, %v54
  %v162 = vpack.c.bf16 %v57, %v56
  %v163 = vpack.c.bf16 %v59, %v58
  %v164 = vpack.c.bf16 %v61, %v60
  %v165 = vpack.c.bf16 %v63, %v62
  %v166 = vpack.c.bf16 %v65, %v64
  %v167 = vpack.c.bf16 %v67, %v66
  %v168 = vpack.c.bf16 %v69, %v68
  %v169 = vpack.c.bf16 %v71, %v70
  %v170 = vpack.c.bf16 %v73, %v72
  %v171 = vpack.c.bf16 %v75, %v74
  %v172 = vpack.c.bf16 %v77, %v76
  %v173 = vpack.c.bf16 %v79, %v78
  %v174 = vpack.c.bf16 %v81, %v80
  %v175 = vpack.c.bf16 %v83, %v82
  %v176 = vpack.c.bf16 %v85, %v84
  %v177 = vpack.c.bf16 %v87, %v86
  %v178 = vpack.c.bf16 %v89, %v88
  %v179 = vpack.c.bf16 %v91, %v90
  %v180 = vpack.c.bf16 %v93, %v92
  %v181 = vpack.c.bf16 %v95, %v94
  %v182 = vpack.c.bf16 %v97, %v96
  %v183 = vpack.c.bf16 %v99, %v98
  %v184 = vpack.c.bf16 %v101, %v100
  %v185 = vpack.c.bf16 %v103, %v102
  %v186 = vpack.c.bf16 %v105, %v104
  %v187 = vpack.c.bf16 %v107, %v106
  %v188 = vpack.c.bf16 %v109, %v108
  %v189 = vpack.c.bf16 %v111, %v110
  %v190 = vpack.c.bf16 %v113, %v112
  %v191 = vpack.c.bf16 %v115, %v114
  %v192 = vpack.c.bf16 %v117, %v116
  %v193 = vpack.c.bf16 %v119, %v118
  %v194 = vpack.c.bf16 %v121, %v120
  %v195 = vpack.c.bf16 %v123, %v122
  %v196 = vpack.c.bf16 %v125, %v124
  %v197 = vpack.c.bf16 %v127, %v126
  %v198 = vpack.c.bf16 %v129, %v128
  %v199 = vpack.c.bf16 %v131, %v130
  %v200 = vpack.c.bf16 %v133, %v132
  %v201 = vpack.c.bf16 %v135, %v134
  %v202 = vpack.c.bf16 %v137, %v136
  %v203 = vpack.c.bf16 %v139, %v138
  %v204 = vld [vmem:[%s1] sm:$0xff]
  %v205 = vld [vmem:[%s1 + $0x8] sm:$0xff]
  %v206 = vld [vmem:[%s1 + $0x10] sm:$0xff]
  %v207 = vld [vmem:[%s1 + $0x18] sm:$0xff]
  %v208 = vld [vmem:[%s1 + $0x20] sm:$0xff]
  %v209 = vld [vmem:[%s1 + $0x28] sm:$0xff]
  %v210 = vld [vmem:[%s1 + $0x30] sm:$0xff]
  %v211 = vld [vmem:[%s1 + $0x38] sm:$0xff]
  %v212 = vpack.c.bf16 %v205, %v204
  %v213 = vpack.c.bf16 %v207, %v206
  %v214 = vpack.c.bf16 %v209, %v208
  %v215 = vpack.c.bf16 %v211, %v210
  %vm216 = vcmask 523264
  %v218 = vsel %vm216, %v140, 0
  %v221 = vsel %vm216, %v141, 0
  %v224 = vsel %vm216, %v142, 0
  %v227 = vsel %vm216, %v143, 0
  %v230 = vsel %vm216, %v144, 0
  %v233 = vsel %vm216, %v145, 0
  %v236 = vsel %vm216, %v146, 0
  %v239 = vsel %vm216, %v147, 0
  %v242 = vsel %vm216, %v148, 0
  %v245 = vsel %vm216, %v149, 0
  %v248 = vsel %vm216, %v150, 0
  %v251 = vsel %vm216, %v151, 0
  %v254 = vsel %vm216, %v152, 0
  %v257 = vsel %vm216, %v153, 0
  %v260 = vsel %vm216, %v154, 0
  %v263 = vsel %vm216, %v155, 0
  %v266 = vsel %vm216, %v156, 0
  %v269 = vsel %vm216, %v157, 0
  %v272 = vsel %vm216, %v158, 0
  %v275 = vsel %vm216, %v159, 0
  %v278 = vsel %vm216, %v160, 0
  %v281 = vsel %vm216, %v161, 0
  %v284 = vsel %vm216, %v162, 0
  %v287 = vsel %vm216, %v163, 0
  %v290 = vsel %vm216, %v164, 0
  %v293 = vsel %vm216, %v165, 0
  %v296 = vsel %vm216, %v166, 0
  %v299 = vsel %vm216, %v167, 0
  %v302 = vsel %vm216, %v168, 0
  %v305 = vsel %vm216, %v169, 0
  %v308 = vsel %vm216, %v170, 0
  %v311 = vsel %vm216, %v171, 0
  %v314 = vsel %vm216, %v172, 0
  %v317 = vsel %vm216, %v173, 0
  %v320 = vsel %vm216, %v174, 0
  %v323 = vsel %vm216, %v175, 0
  %v326 = vsel %vm216, %v176, 0
  %v329 = vsel %vm216, %v177, 0
  %v332 = vsel %vm216, %v178, 0
  %v335 = vsel %vm216, %v179, 0
  %v338 = vsel %vm216, %v180, 0
  %v341 = vsel %vm216, %v181, 0
  %v344 = vsel %vm216, %v182, 0
  %v347 = vsel %vm216, %v183, 0
  %v350 = vsel %vm216, %v184, 0
  %v353 = vsel %vm216, %v185, 0
  %v356 = vsel %vm216, %v186, 0
  %v359 = vsel %vm216, %v187, 0
  %v362 = vsel %vm216, %v188, 0
  %v365 = vsel %vm216, %v189, 0
  %v368 = vsel %vm216, %v190, 0
  %v371 = vsel %vm216, %v191, 0
  %v374 = vsel %vm216, %v192, 0
  %v377 = vsel %vm216, %v193, 0
  %v380 = vsel %vm216, %v194, 0
  %v383 = vsel %vm216, %v195, 0
  %v386 = vsel %vm216, %v196, 0
  %v389 = vsel %vm216, %v197, 0
  %v392 = vsel %vm216, %v198, 0
  %v395 = vsel %vm216, %v199, 0
  %v398 = vsel %vm216, %v200, 0
  %v401 = vsel %vm216, %v201, 0
  %v404 = vsel %vm216, %v202, 0
  %v407 = vsel %vm216, %v203, 0
  %409 = vmatprep.subr.bf16.mxu0 0
  %410 = vmatpush1.bf16.msra.mxu0 %v212
  %411 = vmatprep.subr.bf16.mxu0 0
  %412 = vmatpush1.bf16.msra.mxu0 %v213
  %413 = vmatprep.subr.bf16.mxu0 0
  %414 = vmatpush1.bf16.msra.mxu0 %v214
  %415 = vmatprep.subr.bf16.mxu0 0
  %416 = vmatpush1.bf16.msra.mxu0 %v215
  %417 = vmatprep.subr.bf16.mxu0 0
  %418 = vmatpush1.bf16.msra.mxu0 0
  %419 = vmatprep.subr.bf16.mxu0 0
  %420 = vmatpush1.bf16.msra.mxu0 0
  %421 = vmatprep.subr.bf16.mxu0 0
  %422 = vmatpush1.bf16.msra.mxu0 0
  %423 = vmatprep.subr.bf16.mxu0 0
  %424 = vmatpush1.bf16.msra.mxu0 0
  %425 = vmatprep.subr.bf16.mxu0 0
  %426 = vmatpush1.bf16.msra.mxu0 0
  %427 = vmatprep.subr.bf16.mxu0 0
  %428 = vmatpush1.bf16.msra.mxu0 0
  %429 = vmatprep.subr.bf16.mxu0 0
  %430 = vmatpush1.bf16.msra.mxu0 0
  %431 = vmatprep.subr.bf16.mxu0 0
  %432 = vmatpush1.bf16.msra.mxu0 0
  %433 = vmatprep.subr.bf16.mxu0 0
  %434 = vmatpush1.bf16.msra.mxu0 0
  %435 = vmatprep.subr.bf16.mxu0 0
  %436 = vmatpush1.bf16.msra.mxu0 0
  %437 = vmatprep.subr.bf16.mxu0 0
  %438 = vmatpush1.bf16.msra.mxu0 0
  %439 = vmatprep.subr.bf16.mxu0 0
  %440 = vmatpush1.bf16.msra.mxu0 0
  %441 = vmatprep.mubr.bf16.mxu0 0
  %442 = vmatmul.mubr.bf16.gmra.mrb[0].mxu0 %v218
  %v443 = vpop.f32.mrb[0].mxu0
  %v444 = vadd.f32 0.0, %v443
  %v445 = vpop.f32.mrb[0].mxu0
  %v446 = vpop.f32.mrb[0].mxu0
  %v447 = vadd.f32 0.0, %v446
  %v448 = vpop.f32.mrb[0].mxu0
  %449 = vmatprep.mubr.bf16.mxu0 0
  %450 = vmatmul.mubr.bf16.gmra.mrb[0].mxu0 %v221
  %v451 = vpop.f32.mrb[0].mxu0
  %v452 = vadd.f32 0.0, %v451
  %v453 = vpop.f32.mrb[0].mxu0
  %v454 = vpop.f32.mrb[0].mxu0
  %v455 = vadd.f32 0.0, %v454
  %v456 = vpop.f32.mrb[0].mxu0
  %457 = vmatprep.mubr.bf16.mxu0 0
  %458 = vmatmul.mubr.bf16.gmra.mrb[0].mxu0 %v224
  %v459 = vpop.f32.mrb[0].mxu0
  %v460 = vadd.f32 0.0, %v459
  %v461 = vpop.f32.mrb[0].mxu0
  %v462 = vpop.f32.mrb[0].mxu0
  %v463 = vadd.f32 0.0, %v462
  %v464 = vpop.f32.mrb[0].mxu0
  %465 = vmatprep.mubr.bf16.mxu0 0
  %466 = vmatmul.mubr.bf16.gmra.mrb[0].mxu0 %v227
  %v467 = vpop.f32.mrb[0].mxu0
  %v468 = vadd.f32 0.0, %v467
  %v469 = vpop.f32.mrb[0].mxu0
  %v470 = vpop.f32.mrb[0].mxu0
  %v471 = vadd.f32 0.0, %v470
  %v472 = vpop.f32.mrb[0].mxu0
  %473 = vmatprep.mubr.bf16.mxu0 0
  %474 = vmatmul.mubr.bf16.gmra.mrb[0].mxu0 %v230
  %v475 = vpop.f32.mrb[0].mxu0
  %v476 = vadd.f32 0.0, %v475
  %v477 = vpop.f32.mrb[0].mxu0
  %v478 = vpop.f32.mrb[0].mxu0
  %v479 = vadd.f32 0.0, %v478
  %v480 = vpop.f32.mrb[0].mxu0
  %481 = vmatprep.mubr.bf16.mxu0 0
  %482 = vmatmul.mubr.bf16.gmra.mrb[0].mxu0 %v233
  %v483 = vpop.f32.mrb[0].mxu0
  %v484 = vadd.f32 0.0, %v483
  %v485 = vpop.f32.mrb[0].mxu0
  %v486 = vpop.f32.mrb[0].mxu0
  %v487 = vadd.f32 0.0, %v486
  %v488 = vpop.f32.mrb[0].mxu0
  %489 = vmatprep.mubr.bf16.mxu0 0
  %490 = vmatmul.mubr.bf16.gmra.mrb[0].mxu0 %v236
  %v491 = vpop.f32.mrb[0].mxu0
  %v492 = vadd.f32 0.0, %v491
  %v493 = vpop.f32.mrb[0].mxu0
  %v494 = vpop.f32.mrb[0].mxu0
  %v495 = vadd.f32 0.0, %v494
  %v496 = vpop.f32.mrb[0].mxu0
  %497 = vmatprep.mubr.bf16.mxu0 0
  %498 = vmatmul.mubr.bf16.gmra.mrb[0].mxu0 %v239
  %v499 = vpop.f32.mrb[0].mxu0
  %v500 = vadd.f32 0.0, %v499
  %v501 = vpop.f32.mrb[0].mxu0
  %v502 = vpop.f32.mrb[0].mxu0
  %v503 = vadd.f32 0.0, %v502
  %v504 = vpop.f32.mrb[0].mxu0
  %505 = vmatprep.mubr.bf16.mxu0 0
  %506 = vmatmul.mubr.bf16.gmra.mrb[0].mxu0 %v242
  %v507 = vpop.f32.mrb[0].mxu0
  %v508 = vadd.f32 0.0, %v507
  %v509 = vpop.f32.mrb[0].mxu0
  %v510 = vpop.f32.mrb[0].mxu0
  %v511 = vadd.f32 0.0, %v510
  %v512 = vpop.f32.mrb[0].mxu0
  %513 = vmatprep.mubr.bf16.mxu0 0
  %514 = vmatmul.mubr.bf16.gmra.mrb[0].mxu0 %v245
  %v515 = vpop.f32.mrb[0].mxu0
  %v516 = vadd.f32 0.0, %v515
  %v517 = vpop.f32.mrb[0].mxu0
  %v518 = vpop.f32.mrb[0].mxu0
  %v519 = vadd.f32 0.0, %v518
  %v520 = vpop.f32.mrb[0].mxu0
  %521 = vmatprep.mubr.bf16.mxu0 0
  %522 = vmatmul.mubr.bf16.gmra.mrb[0].mxu0 %v248
  %v523 = vpop.f32.mrb[0].mxu0
  %v524 = vadd.f32 0.0, %v523
  %v525 = vpop.f32.mrb[0].mxu0
  %v526 = vpop.f32.mrb[0].mxu0
  %v527 = vadd.f32 0.0, %v526
  %v528 = vpop.f32.mrb[0].mxu0
  %529 = vmatprep.mubr.bf16.mxu0 0
  %530 = vmatmul.mubr.bf16.gmra.mrb[0].mxu0 %v251
  %v531 = vpop.f32.mrb[0].mxu0
  %v532 = vadd.f32 0.0, %v531
  %v533 = vpop.f32.mrb[0].mxu0
  %v534 = vpop.f32.mrb[0].mxu0
  %v535 = vadd.f32 0.0, %v534
  %v536 = vpop.f32.mrb[0].mxu0
  %537 = vmatprep.mubr.bf16.mxu0 0
  %538 = vmatmul.mubr.bf16.gmra.mrb[0].mxu0 %v254
  %v539 = vpop.f32.mrb[0].mxu0
  %v540 = vadd.f32 0.0, %v539
  %v541 = vpop.f32.mrb[0].mxu0
  %v542 = vpop.f32.mrb[0].mxu0
  %v543 = vadd.f32 0.0, %v542
  %v544 = vpop.f32.mrb[0].mxu0
  %545 = vmatprep.mubr.bf16.mxu0 0
  %546 = vmatmul.mubr.bf16.gmra.mrb[0].mxu0 %v257
  %v547 = vpop.f32.mrb[0].mxu0
  %v548 = vadd.f32 0.0, %v547
  %v549 = vpop.f32.mrb[0].mxu0
  %v550 = vpop.f32.mrb[0].mxu0
  %v551 = vadd.f32 0.0, %v550
  %v552 = vpop.f32.mrb[0].mxu0
  %553 = vmatprep.mubr.bf16.mxu0 0
  %554 = vmatmul.mubr.bf16.gmra.mrb[0].mxu0 %v260
  %v555 = vpop.f32.mrb[0].mxu0
  %v556 = vadd.f32 0.0, %v555
  %v557 = vpop.f32.mrb[0].mxu0
  %v558 = vpop.f32.mrb[0].mxu0
  %v559 = vadd.f32 0.0, %v558
  %v560 = vpop.f32.mrb[0].mxu0
  %561 = vmatprep.mubr.bf16.mxu0 0
  %562 = vmatmul.mubr.bf16.gmra.mrb[0].mxu0 %v263
  %v563 = vpop.f32.mrb[0].mxu0
  %v564 = vadd.f32 0.0, %v563
  %v565 = vpop.f32.mrb[0].mxu0
  %v566 = vpop.f32.mrb[0].mxu0
  %v567 = vadd.f32 0.0, %v566
  %v568 = vpop.f32.mrb[0].mxu0
  %569 = vmatprep.mubr.bf16.mxu0 0
  %570 = vmatmul.mubr.bf16.gmra.mrb[0].mxu0 %v266
  %v571 = vpop.f32.mrb[0].mxu0
  %v572 = vadd.f32 0.0, %v571
  %v573 = vpop.f32.mrb[0].mxu0
  %v574 = vpop.f32.mrb[0].mxu0
  %v575 = vadd.f32 0.0, %v574
  %v576 = vpop.f32.mrb[0].mxu0
  %577 = vmatprep.mubr.bf16.mxu0 0
  %578 = vmatmul.mubr.bf16.gmra.mrb[0].mxu0 %v269
  %v579 = vpop.f32.mrb[0].mxu0
  %v580 = vadd.f32 0.0, %v579
  %v581 = vpop.f32.mrb[0].mxu0
  %v582 = vpop.f32.mrb[0].mxu0
  %v583 = vadd.f32 0.0, %v582
  %v584 = vpop.f32.mrb[0].mxu0
  %585 = vmatprep.mubr.bf16.mxu0 0
  %586 = vmatmul.mubr.bf16.gmra.mrb[0].mxu0 %v272
  %v587 = vpop.f32.mrb[0].mxu0
  %v588 = vadd.f32 0.0, %v587
  %v589 = vpop.f32.mrb[0].mxu0
  %v590 = vpop.f32.mrb[0].mxu0
  %v591 = vadd.f32 0.0, %v590
  %v592 = vpop.f32.mrb[0].mxu0
  %593 = vmatprep.mubr.bf16.mxu0 0
  %594 = vmatmul.mubr.bf16.gmra.mrb[0].mxu0 %v275
  %v595 = vpop.f32.mrb[0].mxu0
  %v596 = vadd.f32 0.0, %v595
  %v597 = vpop.f32.mrb[0].mxu0
  %v598 = vpop.f32.mrb[0].mxu0
  %v599 = vadd.f32 0.0, %v598
  %v600 = vpop.f32.mrb[0].mxu0
  %601 = vmatprep.mubr.bf16.mxu0 0
  %602 = vmatmul.mubr.bf16.gmra.mrb[0].mxu0 %v278
  %v603 = vpop.f32.mrb[0].mxu0
  %v604 = vadd.f32 0.0, %v603
  %v605 = vpop.f32.mrb[0].mxu0
  %v606 = vpop.f32.mrb[0].mxu0
  %v607 = vadd.f32 0.0, %v606
  %v608 = vpop.f32.mrb[0].mxu0
  %609 = vmatprep.mubr.bf16.mxu0 0
  %610 = vmatmul.mubr.bf16.gmra.mrb[0].mxu0 %v281
  %v611 = vpop.f32.mrb[0].mxu0
  %v612 = vadd.f32 0.0, %v611
  %v613 = vpop.f32.mrb[0].mxu0
  %v614 = vpop.f32.mrb[0].mxu0
  %v615 = vadd.f32 0.0, %v614
  %v616 = vpop.f32.mrb[0].mxu0
  %617 = vmatprep.mubr.bf16.mxu0 0
  %618 = vmatmul.mubr.bf16.gmra.mrb[0].mxu0 %v284
  %v619 = vpop.f32.mrb[0].mxu0
  %v620 = vadd.f32 0.0, %v619
  %v621 = vpop.f32.mrb[0].mxu0
  %v622 = vpop.f32.mrb[0].mxu0
  %v623 = vadd.f32 0.0, %v622
  %v624 = vpop.f32.mrb[0].mxu0
  %625 = vmatprep.mubr.bf16.mxu0 0
  %626 = vmatmul.mubr.bf16.gmra.mrb[0].mxu0 %v287
  %v627 = vpop.f32.mrb[0].mxu0
  %v628 = vadd.f32 0.0, %v627
  %v629 = vpop.f32.mrb[0].mxu0
  %v630 = vpop.f32.mrb[0].mxu0
  %v631 = vadd.f32 0.0, %v630
  %v632 = vpop.f32.mrb[0].mxu0
  %633 = vmatprep.mubr.bf16.mxu0 0
  %634 = vmatmul.mubr.bf16.gmra.mrb[0].mxu0 %v290
  %v635 = vpop.f32.mrb[0].mxu0
  %v636 = vadd.f32 0.0, %v635
  %v637 = vpop.f32.mrb[0].mxu0
  %v638 = vpop.f32.mrb[0].mxu0
  %v639 = vadd.f32 0.0, %v638
  %v640 = vpop.f32.mrb[0].mxu0
  %641 = vmatprep.mubr.bf16.mxu0 0
  %642 = vmatmul.mubr.bf16.gmra.mrb[0].mxu0 %v293
  %v643 = vpop.f32.mrb[0].mxu0
  %v644 = vadd.f32 0.0, %v643
  %v645 = vpop.f32.mrb[0].mxu0
  %v646 = vpop.f32.mrb[0].mxu0
  %v647 = vadd.f32 0.0, %v646
  %v648 = vpop.f32.mrb[0].mxu0
  %649 = vmatprep.mubr.bf16.mxu0 0
  %650 = vmatmul.mubr.bf16.gmra.mrb[0].mxu0 %v296
  %v651 = vpop.f32.mrb[0].mxu0
  %v652 = vadd.f32 0.0, %v651
  %v653 = vpop.f32.mrb[0].mxu0
  %v654 = vpop.f32.mrb[0].mxu0
  %v655 = vadd.f32 0.0, %v654
  %v656 = vpop.f32.mrb[0].mxu0
  %657 = vmatprep.mubr.bf16.mxu0 0
  %658 = vmatmul.mubr.bf16.gmra.mrb[0].mxu0 %v299
  %v659 = vpop.f32.mrb[0].mxu0
  %v660 = vadd.f32 0.0, %v659
  %v661 = vpop.f32.mrb[0].mxu0
  %v662 = vpop.f32.mrb[0].mxu0
  %v663 = vadd.f32 0.0, %v662
  %v664 = vpop.f32.mrb[0].mxu0
  %665 = vmatprep.mubr.bf16.mxu0 0
  %666 = vmatmul.mubr.bf16.gmra.mrb[0].mxu0 %v302
  %v667 = vpop.f32.mrb[0].mxu0
  %v668 = vadd.f32 0.0, %v667
  %v669 = vpop.f32.mrb[0].mxu0
  %v670 = vpop.f32.mrb[0].mxu0
  %v671 = vadd.f32 0.0, %v670
  %v672 = vpop.f32.mrb[0].mxu0
  %673 = vmatprep.mubr.bf16.mxu0 0
  %674 = vmatmul.mubr.bf16.gmra.mrb[0].mxu0 %v305
  %v675 = vpop.f32.mrb[0].mxu0
  %v676 = vadd.f32 0.0, %v675
  %v677 = vpop.f32.mrb[0].mxu0
  %v678 = vpop.f32.mrb[0].mxu0
  %v679 = vadd.f32 0.0, %v678
  %v680 = vpop.f32.mrb[0].mxu0
  %681 = vmatprep.mubr.bf16.mxu0 0
  %682 = vmatmul.mubr.bf16.gmra.mrb[0].mxu0 %v308
  %v683 = vpop.f32.mrb[0].mxu0
  %v684 = vadd.f32 0.0, %v683
  %v685 = vpop.f32.mrb[0].mxu0
  %v686 = vpop.f32.mrb[0].mxu0
  %v687 = vadd.f32 0.0, %v686
  %v688 = vpop.f32.mrb[0].mxu0
  %689 = vmatprep.mubr.bf16.mxu0 0
  %690 = vmatmul.mubr.bf16.gmra.mrb[0].mxu0 %v311
  %v691 = vpop.f32.mrb[0].mxu0
  %v692 = vadd.f32 0.0, %v691
  %v693 = vpop.f32.mrb[0].mxu0
  %v694 = vpop.f32.mrb[0].mxu0
  %v695 = vadd.f32 0.0, %v694
  %v696 = vpop.f32.mrb[0].mxu0
  %697 = vmatprep.mubr.bf16.mxu0 0
  %698 = vmatmul.mubr.bf16.gmra.mrb[0].mxu0 %v314
  %v699 = vpop.f32.mrb[0].mxu0
  %v700 = vadd.f32 0.0, %v699
  %v701 = vpop.f32.mrb[0].mxu0
  %v702 = vpop.f32.mrb[0].mxu0
  %v703 = vadd.f32 0.0, %v702
  %v704 = vpop.f32.mrb[0].mxu0
  %705 = vmatprep.mubr.bf16.mxu0 0
  %706 = vmatmul.mubr.bf16.gmra.mrb[0].mxu0 %v317
  %v707 = vpop.f32.mrb[0].mxu0
  %v708 = vadd.f32 0.0, %v707
  %v709 = vpop.f32.mrb[0].mxu0
  %v710 = vpop.f32.mrb[0].mxu0
  %v711 = vadd.f32 0.0, %v710
  %v712 = vpop.f32.mrb[0].mxu0
  %713 = vmatprep.mubr.bf16.mxu0 0
  %714 = vmatmul.mubr.bf16.gmra.mrb[0].mxu0 %v320
  %v715 = vpop.f32.mrb[0].mxu0
  %v716 = vadd.f32 0.0, %v715
  %v717 = vpop.f32.mrb[0].mxu0
  %v718 = vpop.f32.mrb[0].mxu0
  %v719 = vadd.f32 0.0, %v718
  %v720 = vpop.f32.mrb[0].mxu0
  %721 = vmatprep.mubr.bf16.mxu0 0
  %722 = vmatmul.mubr.bf16.gmra.mrb[0].mxu0 %v323
  %v723 = vpop.f32.mrb[0].mxu0
  %v724 = vadd.f32 0.0, %v723
  %v725 = vpop.f32.mrb[0].mxu0
  %v726 = vpop.f32.mrb[0].mxu0
  %v727 = vadd.f32 0.0, %v726
  %v728 = vpop.f32.mrb[0].mxu0
  %729 = vmatprep.mubr.bf16.mxu0 0
  %730 = vmatmul.mubr.bf16.gmra.mrb[0].mxu0 %v326
  %v731 = vpop.f32.mrb[0].mxu0
  %v732 = vadd.f32 0.0, %v731
  %v733 = vpop.f32.mrb[0].mxu0
  %v734 = vpop.f32.mrb[0].mxu0
  %v735 = vadd.f32 0.0, %v734
  %v736 = vpop.f32.mrb[0].mxu0
  %737 = vmatprep.mubr.bf16.mxu0 0
  %738 = vmatmul.mubr.bf16.gmra.mrb[0].mxu0 %v329
  %v739 = vpop.f32.mrb[0].mxu0
  %v740 = vadd.f32 0.0, %v739
  %v741 = vpop.f32.mrb[0].mxu0
  %v742 = vpop.f32.mrb[0].mxu0
  %v743 = vadd.f32 0.0, %v742
  %v744 = vpop.f32.mrb[0].mxu0
  %745 = vmatprep.mubr.bf16.mxu0 0
  %746 = vmatmul.mubr.bf16.gmra.mrb[0].mxu0 %v332
  %v747 = vpop.f32.mrb[0].mxu0
  %v748 = vadd.f32 0.0, %v747
  %v749 = vpop.f32.mrb[0].mxu0
  %v750 = vpop.f32.mrb[0].mxu0
  %v751 = vadd.f32 0.0, %v750
  %v752 = vpop.f32.mrb[0].mxu0
  %753 = vmatprep.mubr.bf16.mxu0 0
  %754 = vmatmul.mubr.bf16.gmra.mrb[0].mxu0 %v335
  %v755 = vpop.f32.mrb[0].mxu0
  %v756 = vadd.f32 0.0, %v755
  %v757 = vpop.f32.mrb[0].mxu0
  %v758 = vpop.f32.mrb[0].mxu0
  %v759 = vadd.f32 0.0, %v758
  %v760 = vpop.f32.mrb[0].mxu0
  %761 = vmatprep.mubr.bf16.mxu0 0
  %762 = vmatmul.mubr.bf16.gmra.mrb[0].mxu0 %v338
  %v763 = vpop.f32.mrb[0].mxu0
  %v764 = vadd.f32 0.0, %v763
  %v765 = vpop.f32.mrb[0].mxu0
  %v766 = vpop.f32.mrb[0].mxu0
  %v767 = vadd.f32 0.0, %v766
  %v768 = vpop.f32.mrb[0].mxu0
  %769 = vmatprep.mubr.bf16.mxu0 0
  %770 = vmatmul.mubr.bf16.gmra.mrb[0].mxu0 %v341
  %v771 = vpop.f32.mrb[0].mxu0
  %v772 = vadd.f32 0.0, %v771
  %v773 = vpop.f32.mrb[0].mxu0
  %v774 = vpop.f32.mrb[0].mxu0
  %v775 = vadd.f32 0.0, %v774
  %v776 = vpop.f32.mrb[0].mxu0
  %777 = vmatprep.mubr.bf16.mxu0 0
  %778 = vmatmul.mubr.bf16.gmra.mrb[0].mxu0 %v344
  %v779 = vpop.f32.mrb[0].mxu0
  %v780 = vadd.f32 0.0, %v779
  %v781 = vpop.f32.mrb[0].mxu0
  %v782 = vpop.f32.mrb[0].mxu0
  %v783 = vadd.f32 0.0, %v782
  %v784 = vpop.f32.mrb[0].mxu0
  %785 = vmatprep.mubr.bf16.mxu0 0
  %786 = vmatmul.mubr.bf16.gmra.mrb[0].mxu0 %v347
  %v787 = vpop.f32.mrb[0].mxu0
  %v788 = vadd.f32 0.0, %v787
  %v789 = vpop.f32.mrb[0].mxu0
  %v790 = vpop.f32.mrb[0].mxu0
  %v791 = vadd.f32 0.0, %v790
  %v792 = vpop.f32.mrb[0].mxu0
  %793 = vmatprep.mubr.bf16.mxu0 0
  %794 = vmatmul.mubr.bf16.gmra.mrb[0].mxu0 %v350
  %v795 = vpop.f32.mrb[0].mxu0
  %v796 = vadd.f32 0.0, %v795
  %v797 = vpop.f32.mrb[0].mxu0
  %v798 = vpop.f32.mrb[0].mxu0
  %v799 = vadd.f32 0.0, %v798
  %v800 = vpop.f32.mrb[0].mxu0
  %801 = vmatprep.mubr.bf16.mxu0 0
  %802 = vmatmul.mubr.bf16.gmra.mrb[0].mxu0 %v353
  %v803 = vpop.f32.mrb[0].mxu0
  %v804 = vadd.f32 0.0, %v803
  %v805 = vpop.f32.mrb[0].mxu0
  %v806 = vpop.f32.mrb[0].mxu0
  %v807 = vadd.f32 0.0, %v806
  %v808 = vpop.f32.mrb[0].mxu0
  %809 = vmatprep.mubr.bf16.mxu0 0
  %810 = vmatmul.mubr.bf16.gmra.mrb[0].mxu0 %v356
  %v811 = vpop.f32.mrb[0].mxu0
  %v812 = vadd.f32 0.0, %v811
  %v813 = vpop.f32.mrb[0].mxu0
  %v814 = vpop.f32.mrb[0].mxu0
  %v815 = vadd.f32 0.0, %v814
  %v816 = vpop.f32.mrb[0].mxu0
  %817 = vmatprep.mubr.bf16.mxu0 0
  %818 = vmatmul.mubr.bf16.gmra.mrb[0].mxu0 %v359
  %v819 = vpop.f32.mrb[0].mxu0
  %v820 = vadd.f32 0.0, %v819
  %v821 = vpop.f32.mrb[0].mxu0
  %v822 = vpop.f32.mrb[0].mxu0
  %v823 = vadd.f32 0.0, %v822
  %v824 = vpop.f32.mrb[0].mxu0
  %825 = vmatprep.mubr.bf16.mxu0 0
  %826 = vmatmul.mubr.bf16.gmra.mrb[0].mxu0 %v362
  %v827 = vpop.f32.mrb[0].mxu0
  %v828 = vadd.f32 0.0, %v827
  %v829 = vpop.f32.mrb[0].mxu0
  %v830 = vpop.f32.mrb[0].mxu0
  %v831 = vadd.f32 0.0, %v830
  %v832 = vpop.f32.mrb[0].mxu0
  %833 = vmatprep.mubr.bf16.mxu0 0
  %834 = vmatmul.mubr.bf16.gmra.mrb[0].mxu0 %v365
  %v835 = vpop.f32.mrb[0].mxu0
  %v836 = vadd.f32 0.0, %v835
  %v837 = vpop.f32.mrb[0].mxu0
  %v838 = vpop.f32.mrb[0].mxu0
  %v839 = vadd.f32 0.0, %v838
  %v840 = vpop.f32.mrb[0].mxu0
  %841 = vmatprep.mubr.bf16.mxu0 0
  %842 = vmatmul.mubr.bf16.gmra.mrb[0].mxu0 %v368
  %v843 = vpop.f32.mrb[0].mxu0
  %v844 = vadd.f32 0.0, %v843
  %v845 = vpop.f32.mrb[0].mxu0
  %v846 = vpop.f32.mrb[0].mxu0
  %v847 = vadd.f32 0.0, %v846
  %v848 = vpop.f32.mrb[0].mxu0
  %849 = vmatprep.mubr.bf16.mxu0 0
  %850 = vmatmul.mubr.bf16.gmra.mrb[0].mxu0 %v371
  %v851 = vpop.f32.mrb[0].mxu0
  %v852 = vadd.f32 0.0, %v851
  %v853 = vpop.f32.mrb[0].mxu0
  %v854 = vpop.f32.mrb[0].mxu0
  %v855 = vadd.f32 0.0, %v854
  %v856 = vpop.f32.mrb[0].mxu0
  %857 = vmatprep.mubr.bf16.mxu0 0
  %858 = vmatmul.mubr.bf16.gmra.mrb[0].mxu0 %v374
  %v859 = vpop.f32.mrb[0].mxu0
  %v860 = vadd.f32 0.0, %v859
  %v861 = vpop.f32.mrb[0].mxu0
  %v862 = vpop.f32.mrb[0].mxu0
  %v863 = vadd.f32 0.0, %v862
  %v864 = vpop.f32.mrb[0].mxu0
  %865 = vmatprep.mubr.bf16.mxu0 0
  %866 = vmatmul.mubr.bf16.gmra.mrb[0].mxu0 %v377
  %v867 = vpop.f32.mrb[0].mxu0
  %v868 = vadd.f32 0.0, %v867
  %v869 = vpop.f32.mrb[0].mxu0
  %v870 = vpop.f32.mrb[0].mxu0
  %v871 = vadd.f32 0.0, %v870
  %v872 = vpop.f32.mrb[0].mxu0
  %873 = vmatprep.mubr.bf16.mxu0 0
  %874 = vmatmul.mubr.bf16.gmra.mrb[0].mxu0 %v380
  %v875 = vpop.f32.mrb[0].mxu0
  %v876 = vadd.f32 0.0, %v875
  %v877 = vpop.f32.mrb[0].mxu0
  %v878 = vpop.f32.mrb[0].mxu0
  %v879 = vadd.f32 0.0, %v878
  %v880 = vpop.f32.mrb[0].mxu0
  %881 = vmatprep.mubr.bf16.mxu0 0
  %882 = vmatmul.mubr.bf16.gmra.mrb[0].mxu0 %v383
  %v883 = vpop.f32.mrb[0].mxu0
  %v884 = vadd.f32 0.0, %v883
  %v885 = vpop.f32.mrb[0].mxu0
  %v886 = vpop.f32.mrb[0].mxu0
  %v887 = vadd.f32 0.0, %v886
  %v888 = vpop.f32.mrb[0].mxu0
  %889 = vmatprep.mubr.bf16.mxu0 0
  %890 = vmatmul.mubr.bf16.gmra.mrb[0].mxu0 %v386
  %v891 = vpop.f32.mrb[0].mxu0
  %v892 = vadd.f32 0.0, %v891
  %v893 = vpop.f32.mrb[0].mxu0
  %v894 = vpop.f32.mrb[0].mxu0
  %v895 = vadd.f32 0.0, %v894
  %v896 = vpop.f32.mrb[0].mxu0
  %897 = vmatprep.mubr.bf16.mxu0 0
  %898 = vmatmul.mubr.bf16.gmra.mrb[0].mxu0 %v389
  %v899 = vpop.f32.mrb[0].mxu0
  %v900 = vadd.f32 0.0, %v899
  %v901 = vpop.f32.mrb[0].mxu0
  %v902 = vpop.f32.mrb[0].mxu0
  %v903 = vadd.f32 0.0, %v902
  %v904 = vpop.f32.mrb[0].mxu0
  %905 = vmatprep.mubr.bf16.mxu0 0
  %906 = vmatmul.mubr.bf16.gmra.mrb[0].mxu0 %v392
  %v907 = vpop.f32.mrb[0].mxu0
  %v908 = vadd.f32 0.0, %v907
  %v909 = vpop.f32.mrb[0].mxu0
  %v910 = vpop.f32.mrb[0].mxu0
  %v911 = vadd.f32 0.0, %v910
  %v912 = vpop.f32.mrb[0].mxu0
  %913 = vmatprep.mubr.bf16.mxu0 0
  %914 = vmatmul.mubr.bf16.gmra.mrb[0].mxu0 %v395
  %v915 = vpop.f32.mrb[0].mxu0
  %v916 = vadd.f32 0.0, %v915
  %v917 = vpop.f32.mrb[0].mxu0
  %v918 = vpop.f32.mrb[0].mxu0
  %v919 = vadd.f32 0.0, %v918
  %v920 = vpop.f32.mrb[0].mxu0
  %921 = vmatprep.mubr.bf16.mxu0 0
  %922 = vmatmul.mubr.bf16.gmra.mrb[0].mxu0 %v398
  %v923 = vpop.f32.mrb[0].mxu0
  %v924 = vadd.f32 0.0, %v923
  %v925 = vpop.f32.mrb[0].mxu0
  %v926 = vpop.f32.mrb[0].mxu0
  %v927 = vadd.f32 0.0, %v926
  %v928 = vpop.f32.mrb[0].mxu0
  %929 = vmatprep.mubr.bf16.mxu0 0
  %930 = vmatmul.mubr.bf16.gmra.mrb[0].mxu0 %v401
  %v931 = vpop.f32.mrb[0].mxu0
  %v932 = vadd.f32 0.0, %v931
  %v933 = vpop.f32.mrb[0].mxu0
  %v934 = vpop.f32.mrb[0].mxu0
  %v935 = vadd.f32 0.0, %v934
  %v936 = vpop.f32.mrb[0].mxu0
  %937 = vmatprep.mubr.bf16.mxu0 0
  %938 = vmatmul.mubr.bf16.gmra.mrb[0].mxu0 %v404
  %v939 = vpop.f32.mrb[0].mxu0
  %v940 = vadd.f32 0.0, %v939
  %v941 = vpop.f32.mrb[0].mxu0
  %v942 = vpop.f32.mrb[0].mxu0
  %v943 = vadd.f32 0.0, %v942
  %v944 = vpop.f32.mrb[0].mxu0
  %945 = vmatprep.mubr.bf16.mxu0 0
  %946 = vmatmul.mubr.bf16.gmra.mrb[0].mxu0 %v407
  %v947 = vpop.f32.mrb[0].mxu0
  %v948 = vadd.f32 0.0, %v947
  %v949 = vpop.f32.mrb[0].mxu0
  %v950 = vpop.f32.mrb[0].mxu0
  %v951 = vadd.f32 0.0, %v950
  %v952 = vpop.f32.mrb[0].mxu0
  %953 = vdwg.mxu0
  %v954 = vpack.c.bf16 %v447, %v444
  %v955 = vpack.c.bf16 %v455, %v452
  %v956 = vpack.c.bf16 %v463, %v460
  %v957 = vpack.c.bf16 %v471, %v468
  %v958 = vpack.c.bf16 %v479, %v476
  %v959 = vpack.c.bf16 %v487, %v484
  %v960 = vpack.c.bf16 %v495, %v492
  %v961 = vpack.c.bf16 %v503, %v500
  %v962 = vpack.c.bf16 %v511, %v508
  %v963 = vpack.c.bf16 %v519, %v516
  %v964 = vpack.c.bf16 %v527, %v524
  %v965 = vpack.c.bf16 %v535, %v532
  %v966 = vpack.c.bf16 %v543, %v540
  %v967 = vpack.c.bf16 %v551, %v548
  %v968 = vpack.c.bf16 %v559, %v556
  %v969 = vpack.c.bf16 %v567, %v564
  %v970 = vpack.c.bf16 %v575, %v572
  %v971 = vpack.c.bf16 %v583, %v580
  %v972 = vpack.c.bf16 %v591, %v588
  %v973 = vpack.c.bf16 %v599, %v596
  %v974 = vpack.c.bf16 %v607, %v604
  %v975 = vpack.c.bf16 %v615, %v612
  %v976 = vpack.c.bf16 %v623, %v620
  %v977 = vpack.c.bf16 %v631, %v628
  %v978 = vpack.c.bf16 %v639, %v636
  %v979 = vpack.c.bf16 %v647, %v644
  %v980 = vpack.c.bf16 %v655, %v652
  %v981 = vpack.c.bf16 %v663, %v660
  %v982 = vpack.c.bf16 %v671, %v668
  %v983 = vpack.c.bf16 %v679, %v676
  %v984 = vpack.c.bf16 %v687, %v684
  %v985 = vpack.c.bf16 %v695, %v692
  %v986 = vpack.c.bf16 %v703, %v700
  %v987 = vpack.c.bf16 %v711, %v708
  %v988 = vpack.c.bf16 %v719, %v716
  %v989 = vpack.c.bf16 %v727, %v724
  %v990 = vpack.c.bf16 %v735, %v732
  %v991 = vpack.c.bf16 %v743, %v740
  %v992 = vpack.c.bf16 %v751, %v748
  %v993 = vpack.c.bf16 %v759, %v756
  %v994 = vpack.c.bf16 %v767, %v764
  %v995 = vpack.c.bf16 %v775, %v772
  %v996 = vpack.c.bf16 %v783, %v780
  %v997 = vpack.c.bf16 %v791, %v788
  %v998 = vpack.c.bf16 %v799, %v796
  %v999 = vpack.c.bf16 %v807, %v804
  %v1000 = vpack.c.bf16 %v815, %v812
  %v1001 = vpack.c.bf16 %v823, %v820
  %v1002 = vpack.c.bf16 %v831, %v828
  %v1003 = vpack.c.bf16 %v839, %v836
  %v1004 = vpack.c.bf16 %v847, %v844
  %v1005 = vpack.c.bf16 %v855, %v852
  %v1006 = vpack.c.bf16 %v863, %v860
  %v1007 = vpack.c.bf16 %v871, %v868
  %v1008 = vpack.c.bf16 %v879, %v876
  %v1009 = vpack.c.bf16 %v887, %v884
  %v1010 = vpack.c.bf16 %v895, %v892
  %v1011 = vpack.c.bf16 %v903, %v900
  %v1012 = vpack.c.bf16 %v911, %v908
  %v1013 = vpack.c.bf16 %v919, %v916
  %v1014 = vpack.c.bf16 %v927, %v924
  %v1015 = vpack.c.bf16 %v935, %v932
  %v1016 = vpack.c.bf16 %v943, %v940
  %v1017 = vpack.c.bf16 %v951, %v948
  %1026 = vrot.lane.b32.xlu0 %v954, 96
  %v1027 = vpop.permute.xlu0 %1026
  %1028 = vrot.lane.b32.xlu0 %v955, 96
  %v1029 = vpop.permute.xlu0 %1028
  %1030 = vrot.lane.b32.xlu0 %v956, 96
  %v1031 = vpop.permute.xlu0 %1030
  %1032 = vrot.lane.b32.xlu0 %v957, 96
  %v1033 = vpop.permute.xlu0 %1032
  %1034 = vrot.lane.b32.xlu0 %v958, 96
  %v1035 = vpop.permute.xlu0 %1034
  %1036 = vrot.lane.b32.xlu0 %v959, 96
  %v1037 = vpop.permute.xlu0 %1036
  %1038 = vrot.lane.b32.xlu0 %v960, 96
  %v1039 = vpop.permute.xlu0 %1038
  %1040 = vrot.lane.b32.xlu0 %v961, 96
  %v1041 = vpop.permute.xlu0 %1040
  %vm1042 = vcmask 261120
  %v1044 = vsel %vm1042, %v954, 0
  %v1047 = vsel %vm1042, %v955, 0
  %v1050 = vsel %vm1042, %v956, 0
  %v1053 = vsel %vm1042, %v957, 0
  %v1056 = vsel %vm1042, %v958, 0
  %v1059 = vsel %vm1042, %v959, 0
  %v1062 = vsel %vm1042, %v960, 0
  %v1065 = vsel %vm1042, %v961, 0
  %v1068 = vsel %vm1042, %v1027, 0
  %v1071 = vsel %vm1042, %v1029, 0
  %v1074 = vsel %vm1042, %v1031, 0
  %v1077 = vsel %vm1042, %v1033, 0
  %v1080 = vsel %vm1042, %v1035, 0
  %v1083 = vsel %vm1042, %v1037, 0
  %v1086 = vsel %vm1042, %v1039, 0
  %v1089 = vsel %vm1042, %v1041, 0
  %1091 = vmatprep.subr.bf16.mxu0 0
  %1092 = vmatpush1.bf16.xpose.msra.mxu0 %v1068
  %1093 = vmatprep.subr.bf16.mxu0 0
  %1094 = vmatpush1.bf16.xpose.msra.mxu0 %v1071
  %1095 = vmatprep.subr.bf16.mxu0 0
  %1096 = vmatpush1.bf16.xpose.msra.mxu0 %v1074
  %1097 = vmatprep.subr.bf16.mxu0 0
  %1098 = vmatpush1.bf16.xpose.msra.mxu0 %v1077
  %1099 = vmatprep.subr.bf16.mxu0 0
  %1100 = vmatpush1.bf16.xpose.msra.mxu0 %v1080
  %1101 = vmatprep.subr.bf16.mxu0 0
  %1102 = vmatpush1.bf16.xpose.msra.mxu0 %v1083
  %1103 = vmatprep.subr.bf16.mxu0 0
  %1104 = vmatpush1.bf16.xpose.msra.mxu0 %v1086
  %1105 = vmatprep.subr.bf16.mxu0 0
  %1106 = vmatpush1.bf16.xpose.msra.mxu0 %v1089
  %1107 = vmatprep.subr.bf16.mxu0 0
  %1108 = vmatpush1.bf16.xpose.msra.mxu0 0
  %1109 = vmatprep.subr.bf16.mxu0 0
  %1110 = vmatpush1.bf16.xpose.msra.mxu0 0
  %1111 = vmatprep.subr.bf16.mxu0 0
  %1112 = vmatpush1.bf16.xpose.msra.mxu0 0
  %1113 = vmatprep.subr.bf16.mxu0 0
  %1114 = vmatpush1.bf16.xpose.msra.mxu0 0
  %1115 = vmatprep.subr.bf16.mxu0 0
  %1116 = vmatpush1.bf16.xpose.msra.mxu0 0
  %1117 = vmatprep.subr.bf16.mxu0 0
  %1118 = vmatpush1.bf16.xpose.msra.mxu0 0
  %1119 = vmatprep.subr.bf16.mxu0 0
  %1120 = vmatpush1.bf16.xpose.msra.mxu0 0
  %1121 = vmatprep.subr.bf16.mxu0 0
  %1122 = vmatpush1.bf16.xpose.msra.mxu0 0
  %1123 = vmatprep.mubr.bf16.mxu0 0
  %1124 = vmatmul.mubr.bf16.gmra.mrb[0].mxu0 %v1044
  %v1125 = vpop.f32.mrb[0].mxu0
  %v1126 = vadd.f32 0.0, %v1125
  %v1127 = vpop.f32.mrb[0].mxu0
  %v1128 = vpop.f32.mrb[0].mxu0
  %v1129 = vadd.f32 0.0, %v1128
  %v1130 = vpop.f32.mrb[0].mxu0
  %1131 = vmatprep.mubr.bf16.mxu0 0
  %1132 = vmatmul.mubr.bf16.gmra.mrb[0].mxu0 %v1047
  %v1133 = vpop.f32.mrb[0].mxu0
  %v1134 = vadd.f32 0.0, %v1133
  %v1135 = vpop.f32.mrb[0].mxu0
  %v1136 = vpop.f32.mrb[0].mxu0
  %v1137 = vadd.f32 0.0, %v1136
  %v1138 = vpop.f32.mrb[0].mxu0
  %1139 = vmatprep.mubr.bf16.mxu0 0
  %1140 = vmatmul.mubr.bf16.gmra.mrb[0].mxu0 %v1050
  %v1141 = vpop.f32.mrb[0].mxu0
  %v1142 = vadd.f32 0.0, %v1141
  %v1143 = vpop.f32.mrb[0].mxu0
  %v1144 = vpop.f32.mrb[0].mxu0
  %v1145 = vadd.f32 0.0, %v1144
  %v1146 = vpop.f32.mrb[0].mxu0
  %1147 = vmatprep.mubr.bf16.mxu0 0
  %1148 = vmatmul.mubr.bf16.gmra.mrb[0].mxu0 %v1053
  %v1149 = vpop.f32.mrb[0].mxu0
  %v1150 = vadd.f32 0.0, %v1149
  %v1151 = vpop.f32.mrb[0].mxu0
  %v1152 = vpop.f32.mrb[0].mxu0
  %v1153 = vadd.f32 0.0, %v1152
  %v1154 = vpop.f32.mrb[0].mxu0
  %1155 = vmatprep.mubr.bf16.mxu0 0
  %1156 = vmatmul.mubr.bf16.gmra.mrb[0].mxu0 %v1056
  %v1157 = vpop.f32.mrb[0].mxu0
  %v1158 = vadd.f32 0.0, %v1157
  %v1159 = vpop.f32.mrb[0].mxu0
  %v1160 = vpop.f32.mrb[0].mxu0
  %v1161 = vadd.f32 0.0, %v1160
  %v1162 = vpop.f32.mrb[0].mxu0
  %1163 = vmatprep.mubr.bf16.mxu0 0
  %1164 = vmatmul.mubr.bf16.gmra.mrb[0].mxu0 %v1059
  %v1165 = vpop.f32.mrb[0].mxu0
  %v1166 = vadd.f32 0.0, %v1165
  %v1167 = vpop.f32.mrb[0].mxu0
  %v1168 = vpop.f32.mrb[0].mxu0
  %v1169 = vadd.f32 0.0, %v1168
  %v1170 = vpop.f32.mrb[0].mxu0
  %1171 = vmatprep.mubr.bf16.mxu0 0
  %1172 = vmatmul.mubr.bf16.gmra.mrb[0].mxu0 %v1062
  %v1173 = vpop.f32.mrb[0].mxu0
  %v1174 = vadd.f32 0.0, %v1173
  %v1175 = vpop.f32.mrb[0].mxu0
  %v1176 = vpop.f32.mrb[0].mxu0
  %v1177 = vadd.f32 0.0, %v1176
  %v1178 = vpop.f32.mrb[0].mxu0
  %1179 = vmatprep.mubr.bf16.mxu0 0
  %1180 = vmatmul.mubr.bf16.gmra.mrb[0].mxu0 %v1065
  %v1181 = vpop.f32.mrb[0].mxu0
  %v1182 = vadd.f32 0.0, %v1181
  %v1183 = vpop.f32.mrb[0].mxu0
  %v1184 = vpop.f32.mrb[0].mxu0
  %v1185 = vadd.f32 0.0, %v1184
  %v1186 = vpop.f32.mrb[0].mxu0
  %1187 = vdwg.mxu0
  %1196 = vrot.lane.b32.xlu0 %v962, 96
  %v1197 = vpop.permute.xlu0 %1196
  %1198 = vrot.lane.b32.xlu0 %v963, 96
  %v1199 = vpop.permute.xlu0 %1198
  %1200 = vrot.lane.b32.xlu0 %v964, 96
  %v1201 = vpop.permute.xlu0 %1200
  %1202 = vrot.lane.b32.xlu0 %v965, 96
  %v1203 = vpop.permute.xlu0 %1202
  %1204 = vrot.lane.b32.xlu0 %v966, 96
  %v1205 = vpop.permute.xlu0 %1204
  %1206 = vrot.lane.b32.xlu0 %v967, 96
  %v1207 = vpop.permute.xlu0 %1206
  %1208 = vrot.lane.b32.xlu0 %v968, 96
  %v1209 = vpop.permute.xlu0 %1208
  %1210 = vrot.lane.b32.xlu0 %v969, 96
  %v1211 = vpop.permute.xlu0 %1210
  %v1213 = vsel %vm1042, %v962, 0
  %v1216 = vsel %vm1042, %v963, 0
  %v1219 = vsel %vm1042, %v964, 0
  %v1222 = vsel %vm1042, %v965, 0
  %v1225 = vsel %vm1042, %v966, 0
  %v1228 = vsel %vm1042, %v967, 0
  %v1231 = vsel %vm1042, %v968, 0
  %v1234 = vsel %vm1042, %v969, 0
  %v1237 = vsel %vm1042, %v1197, 0
  %v1240 = vsel %vm1042, %v1199, 0
  %v1243 = vsel %vm1042, %v1201, 0
  %v1246 = vsel %vm1042, %v1203, 0
  %v1249 = vsel %vm1042, %v1205, 0
  %v1252 = vsel %vm1042, %v1207, 0
  %v1255 = vsel %vm1042, %v1209, 0
  %v1258 = vsel %vm1042, %v1211, 0
  %1260 = vmatprep.subr.bf16.mxu0 0
  %1261 = vmatpush1.bf16.xpose.msra.mxu0 %v1237
  %1262 = vmatprep.subr.bf16.mxu0 0
  %1263 = vmatpush1.bf16.xpose.msra.mxu0 %v1240
  %1264 = vmatprep.subr.bf16.mxu0 0
  %1265 = vmatpush1.bf16.xpose.msra.mxu0 %v1243
  %1266 = vmatprep.subr.bf16.mxu0 0
  %1267 = vmatpush1.bf16.xpose.msra.mxu0 %v1246
  %1268 = vmatprep.subr.bf16.mxu0 0
  %1269 = vmatpush1.bf16.xpose.msra.mxu0 %v1249
  %1270 = vmatprep.subr.bf16.mxu0 0
  %1271 = vmatpush1.bf16.xpose.msra.mxu0 %v1252
  %1272 = vmatprep.subr.bf16.mxu0 0
  %1273 = vmatpush1.bf16.xpose.msra.mxu0 %v1255
  %1274 = vmatprep.subr.bf16.mxu0 0
  %1275 = vmatpush1.bf16.xpose.msra.mxu0 %v1258
  %1276 = vmatprep.subr.bf16.mxu0 0
  %1277 = vmatpush1.bf16.xpose.msra.mxu0 0
  %1278 = vmatprep.subr.bf16.mxu0 0
  %1279 = vmatpush1.bf16.xpose.msra.mxu0 0
  %1280 = vmatprep.subr.bf16.mxu0 0
  %1281 = vmatpush1.bf16.xpose.msra.mxu0 0
  %1282 = vmatprep.subr.bf16.mxu0 0
  %1283 = vmatpush1.bf16.xpose.msra.mxu0 0
  %1284 = vmatprep.subr.bf16.mxu0 0
  %1285 = vmatpush1.bf16.xpose.msra.mxu0 0
  %1286 = vmatprep.subr.bf16.mxu0 0
  %1287 = vmatpush1.bf16.xpose.msra.mxu0 0
  %1288 = vmatprep.subr.bf16.mxu0 0
  %1289 = vmatpush1.bf16.xpose.msra.mxu0 0
  %1290 = vmatprep.subr.bf16.mxu0 0
  %1291 = vmatpush1.bf16.xpose.msra.mxu0 0
  %1292 = vmatprep.mubr.bf16.mxu0 0
  %1293 = vmatmul.mubr.bf16.gmra.mrb[0].mxu0 %v1213
  %v1294 = vpop.f32.mrb[0].mxu0
  %v1295 = vadd.f32 0.0, %v1294
  %v1296 = vpop.f32.mrb[0].mxu0
  %v1297 = vpop.f32.mrb[0].mxu0
  %v1298 = vadd.f32 0.0, %v1297
  %v1299 = vpop.f32.mrb[0].mxu0
  %1300 = vmatprep.mubr.bf16.mxu0 0
  %1301 = vmatmul.mubr.bf16.gmra.mrb[0].mxu0 %v1216
  %v1302 = vpop.f32.mrb[0].mxu0
  %v1303 = vadd.f32 0.0, %v1302
  %v1304 = vpop.f32.mrb[0].mxu0
  %v1305 = vpop.f32.mrb[0].mxu0
  %v1306 = vadd.f32 0.0, %v1305
  %v1307 = vpop.f32.mrb[0].mxu0
  %1308 = vmatprep.mubr.bf16.mxu0 0
  %1309 = vmatmul.mubr.bf16.gmra.mrb[0].mxu0 %v1219
  %v1310 = vpop.f32.mrb[0].mxu0
  %v1311 = vadd.f32 0.0, %v1310
  %v1312 = vpop.f32.mrb[0].mxu0
  %v1313 = vpop.f32.mrb[0].mxu0
  %v1314 = vadd.f32 0.0, %v1313
  %v1315 = vpop.f32.mrb[0].mxu0
  %1316 = vmatprep.mubr.bf16.mxu0 0
  %1317 = vmatmul.mubr.bf16.gmra.mrb[0].mxu0 %v1222
  %v1318 = vpop.f32.mrb[0].mxu0
  %v1319 = vadd.f32 0.0, %v1318
  %v1320 = vpop.f32.mrb[0].mxu0
  %v1321 = vpop.f32.mrb[0].mxu0
  %v1322 = vadd.f32 0.0, %v1321
  %v1323 = vpop.f32.mrb[0].mxu0
  %1324 = vmatprep.mubr.bf16.mxu0 0
  %1325 = vmatmul.mubr.bf16.gmra.mrb[0].mxu0 %v1225
  %v1326 = vpop.f32.mrb[0].mxu0
  %v1327 = vadd.f32 0.0, %v1326
  %v1328 = vpop.f32.mrb[0].mxu0
  %v1329 = vpop.f32.mrb[0].mxu0
  %v1330 = vadd.f32 0.0, %v1329
  %v1331 = vpop.f32.mrb[0].mxu0
  %1332 = vmatprep.mubr.bf16.mxu0 0
  %1333 = vmatmul.mubr.bf16.gmra.mrb[0].mxu0 %v1228
  %v1334 = vpop.f32.mrb[0].mxu0
  %v1335 = vadd.f32 0.0, %v1334
  %v1336 = vpop.f32.mrb[0].mxu0
  %v1337 = vpop.f32.mrb[0].mxu0
  %v1338 = vadd.f32 0.0, %v1337
  %v1339 = vpop.f32.mrb[0].mxu0
  %1340 = vmatprep.mubr.bf16.mxu0 0
  %1341 = vmatmul.mubr.bf16.gmra.mrb[0].mxu0 %v1231
  %v1342 = vpop.f32.mrb[0].mxu0
  %v1343 = vadd.f32 0.0, %v1342
  %v1344 = vpop.f32.mrb[0].mxu0
  %v1345 = vpop.f32.mrb[0].mxu0
  %v1346 = vadd.f32 0.0, %v1345
  %v1347 = vpop.f32.mrb[0].mxu0
  %1348 = vmatprep.mubr.bf16.mxu0 0
  %1349 = vmatmul.mubr.bf16.gmra.mrb[0].mxu0 %v1234
  %v1350 = vpop.f32.mrb[0].mxu0
  %v1351 = vadd.f32 0.0, %v1350
  %v1352 = vpop.f32.mrb[0].mxu0
  %v1353 = vpop.f32.mrb[0].mxu0
  %v1354 = vadd.f32 0.0, %v1353
  %v1355 = vpop.f32.mrb[0].mxu0
  %1356 = vdwg.mxu0
  %1365 = vrot.lane.b32.xlu0 %v970, 96
  %v1366 = vpop.permute.xlu0 %1365
  %1367 = vrot.lane.b32.xlu0 %v971, 96
  %v1368 = vpop.permute.xlu0 %1367
  %1369 = vrot.lane.b32.xlu0 %v972, 96
  %v1370 = vpop.permute.xlu0 %1369
  %1371 = vrot.lane.b32.xlu0 %v973, 96
  %v1372 = vpop.permute.xlu0 %1371
  %1373 = vrot.lane.b32.xlu0 %v974, 96
  %v1374 = vpop.permute.xlu0 %1373
  %1375 = vrot.lane.b32.xlu0 %v975, 96
  %v1376 = vpop.permute.xlu0 %1375
  %1377 = vrot.lane.b32.xlu0 %v976, 96
  %v1378 = vpop.permute.xlu0 %1377
  %1379 = vrot.lane.b32.xlu0 %v977, 96
  %v1380 = vpop.permute.xlu0 %1379
  %v1382 = vsel %vm1042, %v970, 0
  %v1385 = vsel %vm1042, %v971, 0
  %v1388 = vsel %vm1042, %v972, 0
  %v1391 = vsel %vm1042, %v973, 0
  %v1394 = vsel %vm1042, %v974, 0
  %v1397 = vsel %vm1042, %v975, 0
  %v1400 = vsel %vm1042, %v976, 0
  %v1403 = vsel %vm1042, %v977, 0
  %v1406 = vsel %vm1042, %v1366, 0
  %v1409 = vsel %vm1042, %v1368, 0
  %v1412 = vsel %vm1042, %v1370, 0
  %v1415 = vsel %vm1042, %v1372, 0
  %v1418 = vsel %vm1042, %v1374, 0
  %v1421 = vsel %vm1042, %v1376, 0
  %v1424 = vsel %vm1042, %v1378, 0
  %v1427 = vsel %vm1042, %v1380, 0
  %1429 = vmatprep.subr.bf16.mxu0 0
  %1430 = vmatpush1.bf16.xpose.msra.mxu0 %v1406
  %1431 = vmatprep.subr.bf16.mxu0 0
  %1432 = vmatpush1.bf16.xpose.msra.mxu0 %v1409
  %1433 = vmatprep.subr.bf16.mxu0 0
  %1434 = vmatpush1.bf16.xpose.msra.mxu0 %v1412
  %1435 = vmatprep.subr.bf16.mxu0 0
  %1436 = vmatpush1.bf16.xpose.msra.mxu0 %v1415
  %1437 = vmatprep.subr.bf16.mxu0 0
  %1438 = vmatpush1.bf16.xpose.msra.mxu0 %v1418
  %1439 = vmatprep.subr.bf16.mxu0 0
  %1440 = vmatpush1.bf16.xpose.msra.mxu0 %v1421
  %1441 = vmatprep.subr.bf16.mxu0 0
  %1442 = vmatpush1.bf16.xpose.msra.mxu0 %v1424
  %1443 = vmatprep.subr.bf16.mxu0 0
  %1444 = vmatpush1.bf16.xpose.msra.mxu0 %v1427
  %1445 = vmatprep.subr.bf16.mxu0 0
  %1446 = vmatpush1.bf16.xpose.msra.mxu0 0
  %1447 = vmatprep.subr.bf16.mxu0 0
  %1448 = vmatpush1.bf16.xpose.msra.mxu0 0
  %1449 = vmatprep.subr.bf16.mxu0 0
  %1450 = vmatpush1.bf16.xpose.msra.mxu0 0
  %1451 = vmatprep.subr.bf16.mxu0 0
  %1452 = vmatpush1.bf16.xpose.msra.mxu0 0
  %1453 = vmatprep.subr.bf16.mxu0 0
  %1454 = vmatpush1.bf16.xpose.msra.mxu0 0
  %1455 = vmatprep.subr.bf16.mxu0 0
  %1456 = vmatpush1.bf16.xpose.msra.mxu0 0
  %1457 = vmatprep.subr.bf16.mxu0 0
  %1458 = vmatpush1.bf16.xpose.msra.mxu0 0
  %1459 = vmatprep.subr.bf16.mxu0 0
  %1460 = vmatpush1.bf16.xpose.msra.mxu0 0
  %1461 = vmatprep.mubr.bf16.mxu0 0
  %1462 = vmatmul.mubr.bf16.gmra.mrb[0].mxu0 %v1382
  %v1463 = vpop.f32.mrb[0].mxu0
  %v1464 = vadd.f32 0.0, %v1463
  %v1465 = vpop.f32.mrb[0].mxu0
  %v1466 = vpop.f32.mrb[0].mxu0
  %v1467 = vadd.f32 0.0, %v1466
  %v1468 = vpop.f32.mrb[0].mxu0
  %1469 = vmatprep.mubr.bf16.mxu0 0
  %1470 = vmatmul.mubr.bf16.gmra.mrb[0].mxu0 %v1385
  %v1471 = vpop.f32.mrb[0].mxu0
  %v1472 = vadd.f32 0.0, %v1471
  %v1473 = vpop.f32.mrb[0].mxu0
  %v1474 = vpop.f32.mrb[0].mxu0
  %v1475 = vadd.f32 0.0, %v1474
  %v1476 = vpop.f32.mrb[0].mxu0
  %1477 = vmatprep.mubr.bf16.mxu0 0
  %1478 = vmatmul.mubr.bf16.gmra.mrb[0].mxu0 %v1388
  %v1479 = vpop.f32.mrb[0].mxu0
  %v1480 = vadd.f32 0.0, %v1479
  %v1481 = vpop.f32.mrb[0].mxu0
  %v1482 = vpop.f32.mrb[0].mxu0
  %v1483 = vadd.f32 0.0, %v1482
  %v1484 = vpop.f32.mrb[0].mxu0
  %1485 = vmatprep.mubr.bf16.mxu0 0
  %1486 = vmatmul.mubr.bf16.gmra.mrb[0].mxu0 %v1391
  %v1487 = vpop.f32.mrb[0].mxu0
  %v1488 = vadd.f32 0.0, %v1487
  %v1489 = vpop.f32.mrb[0].mxu0
  %v1490 = vpop.f32.mrb[0].mxu0
  %v1491 = vadd.f32 0.0, %v1490
  %v1492 = vpop.f32.mrb[0].mxu0
  %1493 = vmatprep.mubr.bf16.mxu0 0
  %1494 = vmatmul.mubr.bf16.gmra.mrb[0].mxu0 %v1394
  %v1495 = vpop.f32.mrb[0].mxu0
  %v1496 = vadd.f32 0.0, %v1495
  %v1497 = vpop.f32.mrb[0].mxu0
  %v1498 = vpop.f32.mrb[0].mxu0
  %v1499 = vadd.f32 0.0, %v1498
  %v1500 = vpop.f32.mrb[0].mxu0
  %1501 = vmatprep.mubr.bf16.mxu0 0
  %1502 = vmatmul.mubr.bf16.gmra.mrb[0].mxu0 %v1397
  %v1503 = vpop.f32.mrb[0].mxu0
  %v1504 = vadd.f32 0.0, %v1503
  %v1505 = vpop.f32.mrb[0].mxu0
  %v1506 = vpop.f32.mrb[0].mxu0
  %v1507 = vadd.f32 0.0, %v1506
  %v1508 = vpop.f32.mrb[0].mxu0
  %1509 = vmatprep.mubr.bf16.mxu0 0
  %1510 = vmatmul.mubr.bf16.gmra.mrb[0].mxu0 %v1400
  %v1511 = vpop.f32.mrb[0].mxu0
  %v1512 = vadd.f32 0.0, %v1511
  %v1513 = vpop.f32.mrb[0].mxu0
  %v1514 = vpop.f32.mrb[0].mxu0
  %v1515 = vadd.f32 0.0, %v1514
  %v1516 = vpop.f32.mrb[0].mxu0
  %1517 = vmatprep.mubr.bf16.mxu0 0
  %1518 = vmatmul.mubr.bf16.gmra.mrb[0].mxu0 %v1403
  %v1519 = vpop.f32.mrb[0].mxu0
  %v1520 = vadd.f32 0.0, %v1519
  %v1521 = vpop.f32.mrb[0].mxu0
  %v1522 = vpop.f32.mrb[0].mxu0
  %v1523 = vadd.f32 0.0, %v1522
  %v1524 = vpop.f32.mrb[0].mxu0
  %1525 = vdwg.mxu0
  %1534 = vrot.lane.b32.xlu0 %v978, 96
  %v1535 = vpop.permute.xlu0 %1534
  %1536 = vrot.lane.b32.xlu0 %v979, 96
  %v1537 = vpop.permute.xlu0 %1536
  %1538 = vrot.lane.b32.xlu0 %v980, 96
  %v1539 = vpop.permute.xlu0 %1538
  %1540 = vrot.lane.b32.xlu0 %v981, 96
  %v1541 = vpop.permute.xlu0 %1540
  %1542 = vrot.lane.b32.xlu0 %v982, 96
  %v1543 = vpop.permute.xlu0 %1542
  %1544 = vrot.lane.b32.xlu0 %v983, 96
  %v1545 = vpop.permute.xlu0 %1544
  %1546 = vrot.lane.b32.xlu0 %v984, 96
  %v1547 = vpop.permute.xlu0 %1546
  %1548 = vrot.lane.b32.xlu0 %v985, 96
  %v1549 = vpop.permute.xlu0 %1548
  %v1551 = vsel %vm1042, %v978, 0
  %v1554 = vsel %vm1042, %v979, 0
  %v1557 = vsel %vm1042, %v980, 0
  %v1560 = vsel %vm1042, %v981, 0
  %v1563 = vsel %vm1042, %v982, 0
  %v1566 = vsel %vm1042, %v983, 0
  %v1569 = vsel %vm1042, %v984, 0
  %v1572 = vsel %vm1042, %v985, 0
  %v1575 = vsel %vm1042, %v1535, 0
  %v1578 = vsel %vm1042, %v1537, 0
  %v1581 = vsel %vm1042, %v1539, 0
  %v1584 = vsel %vm1042, %v1541, 0
  %v1587 = vsel %vm1042, %v1543, 0
  %v1590 = vsel %vm1042, %v1545, 0
  %v1593 = vsel %vm1042, %v1547, 0
  %v1596 = vsel %vm1042, %v1549, 0
  %1598 = vmatprep.subr.bf16.mxu0 0
  %1599 = vmatpush1.bf16.xpose.msra.mxu0 %v1575
  %1600 = vmatprep.subr.bf16.mxu0 0
  %1601 = vmatpush1.bf16.xpose.msra.mxu0 %v1578
  %1602 = vmatprep.subr.bf16.mxu0 0
  %1603 = vmatpush1.bf16.xpose.msra.mxu0 %v1581
  %1604 = vmatprep.subr.bf16.mxu0 0
  %1605 = vmatpush1.bf16.xpose.msra.mxu0 %v1584
  %1606 = vmatprep.subr.bf16.mxu0 0
  %1607 = vmatpush1.bf16.xpose.msra.mxu0 %v1587
  %1608 = vmatprep.subr.bf16.mxu0 0
  %1609 = vmatpush1.bf16.xpose.msra.mxu0 %v1590
  %1610 = vmatprep.subr.bf16.mxu0 0
  %1611 = vmatpush1.bf16.xpose.msra.mxu0 %v1593
  %1612 = vmatprep.subr.bf16.mxu0 0
  %1613 = vmatpush1.bf16.xpose.msra.mxu0 %v1596
  %1614 = vmatprep.subr.bf16.mxu0 0
  %1615 = vmatpush1.bf16.xpose.msra.mxu0 0
  %1616 = vmatprep.subr.bf16.mxu0 0
  %1617 = vmatpush1.bf16.xpose.msra.mxu0 0
  %1618 = vmatprep.subr.bf16.mxu0 0
  %1619 = vmatpush1.bf16.xpose.msra.mxu0 0
  %1620 = vmatprep.subr.bf16.mxu0 0
  %1621 = vmatpush1.bf16.xpose.msra.mxu0 0
  %1622 = vmatprep.subr.bf16.mxu0 0
  %1623 = vmatpush1.bf16.xpose.msra.mxu0 0
  %1624 = vmatprep.subr.bf16.mxu0 0
  %1625 = vmatpush1.bf16.xpose.msra.mxu0 0
  %1626 = vmatprep.subr.bf16.mxu0 0
  %1627 = vmatpush1.bf16.xpose.msra.mxu0 0
  %1628 = vmatprep.subr.bf16.mxu0 0
  %1629 = vmatpush1.bf16.xpose.msra.mxu0 0
  %1630 = vmatprep.mubr.bf16.mxu0 0
  %1631 = vmatmul.mubr.bf16.gmra.mrb[0].mxu0 %v1551
  %v1632 = vpop.f32.mrb[0].mxu0
  %v1633 = vadd.f32 0.0, %v1632
  %v1634 = vpop.f32.mrb[0].mxu0
  %v1635 = vpop.f32.mrb[0].mxu0
  %v1636 = vadd.f32 0.0, %v1635
  %v1637 = vpop.f32.mrb[0].mxu0
  %1638 = vmatprep.mubr.bf16.mxu0 0
  %1639 = vmatmul.mubr.bf16.gmra.mrb[0].mxu0 %v1554
  %v1640 = vpop.f32.mrb[0].mxu0
  %v1641 = vadd.f32 0.0, %v1640
  %v1642 = vpop.f32.mrb[0].mxu0
  %v1643 = vpop.f32.mrb[0].mxu0
  %v1644 = vadd.f32 0.0, %v1643
  %v1645 = vpop.f32.mrb[0].mxu0
  %1646 = vmatprep.mubr.bf16.mxu0 0
  %1647 = vmatmul.mubr.bf16.gmra.mrb[0].mxu0 %v1557
  %v1648 = vpop.f32.mrb[0].mxu0
  %v1649 = vadd.f32 0.0, %v1648
  %v1650 = vpop.f32.mrb[0].mxu0
  %v1651 = vpop.f32.mrb[0].mxu0
  %v1652 = vadd.f32 0.0, %v1651
  %v1653 = vpop.f32.mrb[0].mxu0
  %1654 = vmatprep.mubr.bf16.mxu0 0
  %1655 = vmatmul.mubr.bf16.gmra.mrb[0].mxu0 %v1560
  %v1656 = vpop.f32.mrb[0].mxu0
  %v1657 = vadd.f32 0.0, %v1656
  %v1658 = vpop.f32.mrb[0].mxu0
  %v1659 = vpop.f32.mrb[0].mxu0
  %v1660 = vadd.f32 0.0, %v1659
  %v1661 = vpop.f32.mrb[0].mxu0
  %1662 = vmatprep.mubr.bf16.mxu0 0
  %1663 = vmatmul.mubr.bf16.gmra.mrb[0].mxu0 %v1563
  %v1664 = vpop.f32.mrb[0].mxu0
  %v1665 = vadd.f32 0.0, %v1664
  %v1666 = vpop.f32.mrb[0].mxu0
  %v1667 = vpop.f32.mrb[0].mxu0
  %v1668 = vadd.f32 0.0, %v1667
  %v1669 = vpop.f32.mrb[0].mxu0
  %1670 = vmatprep.mubr.bf16.mxu0 0
  %1671 = vmatmul.mubr.bf16.gmra.mrb[0].mxu0 %v1566
  %v1672 = vpop.f32.mrb[0].mxu0
  %v1673 = vadd.f32 0.0, %v1672
  %v1674 = vpop.f32.mrb[0].mxu0
  %v1675 = vpop.f32.mrb[0].mxu0
  %v1676 = vadd.f32 0.0, %v1675
  %v1677 = vpop.f32.mrb[0].mxu0
  %1678 = vmatprep.mubr.bf16.mxu0 0
  %1679 = vmatmul.mubr.bf16.gmra.mrb[0].mxu0 %v1569
  %v1680 = vpop.f32.mrb[0].mxu0
  %v1681 = vadd.f32 0.0, %v1680
  %v1682 = vpop.f32.mrb[0].mxu0
  %v1683 = vpop.f32.mrb[0].mxu0
  %v1684 = vadd.f32 0.0, %v1683
  %v1685 = vpop.f32.mrb[0].mxu0
  %1686 = vmatprep.mubr.bf16.mxu0 0
  %1687 = vmatmul.mubr.bf16.gmra.mrb[0].mxu0 %v1572
  %v1688 = vpop.f32.mrb[0].mxu0
  %v1689 = vadd.f32 0.0, %v1688
  %v1690 = vpop.f32.mrb[0].mxu0
  %v1691 = vpop.f32.mrb[0].mxu0
  %v1692 = vadd.f32 0.0, %v1691
  %v1693 = vpop.f32.mrb[0].mxu0
  %1694 = vdwg.mxu0
  %1703 = vrot.lane.b32.xlu0 %v986, 96
  %v1704 = vpop.permute.xlu0 %1703
  %1705 = vrot.lane.b32.xlu0 %v987, 96
  %v1706 = vpop.permute.xlu0 %1705
  %1707 = vrot.lane.b32.xlu0 %v988, 96
  %v1708 = vpop.permute.xlu0 %1707
  %1709 = vrot.lane.b32.xlu0 %v989, 96
  %v1710 = vpop.permute.xlu0 %1709
  %1711 = vrot.lane.b32.xlu0 %v990, 96
  %v1712 = vpop.permute.xlu0 %1711
  %1713 = vrot.lane.b32.xlu0 %v991, 96
  %v1714 = vpop.permute.xlu0 %1713
  %1715 = vrot.lane.b32.xlu0 %v992, 96
  %v1716 = vpop.permute.xlu0 %1715
  %1717 = vrot.lane.b32.xlu0 %v993, 96
  %v1718 = vpop.permute.xlu0 %1717
  %v1720 = vsel %vm1042, %v986, 0
  %v1723 = vsel %vm1042, %v987, 0
  %v1726 = vsel %vm1042, %v988, 0
  %v1729 = vsel %vm1042, %v989, 0
  %v1732 = vsel %vm1042, %v990, 0
  %v1735 = vsel %vm1042, %v991, 0
  %v1738 = vsel %vm1042, %v992, 0
  %v1741 = vsel %vm1042, %v993, 0
  %v1744 = vsel %vm1042, %v1704, 0
  %v1747 = vsel %vm1042, %v1706, 0
  %v1750 = vsel %vm1042, %v1708, 0
  %v1753 = vsel %vm1042, %v1710, 0
  %v1756 = vsel %vm1042, %v1712, 0
  %v1759 = vsel %vm1042, %v1714, 0
  %v1762 = vsel %vm1042, %v1716, 0
  %v1765 = vsel %vm1042, %v1718, 0
  %1767 = vmatprep.subr.bf16.mxu0 0
  %1768 = vmatpush1.bf16.xpose.msra.mxu0 %v1744
  %1769 = vmatprep.subr.bf16.mxu0 0
  %1770 = vmatpush1.bf16.xpose.msra.mxu0 %v1747
  %1771 = vmatprep.subr.bf16.mxu0 0
  %1772 = vmatpush1.bf16.xpose.msra.mxu0 %v1750
  %1773 = vmatprep.subr.bf16.mxu0 0
  %1774 = vmatpush1.bf16.xpose.msra.mxu0 %v1753
  %1775 = vmatprep.subr.bf16.mxu0 0
  %1776 = vmatpush1.bf16.xpose.msra.mxu0 %v1756
  %1777 = vmatprep.subr.bf16.mxu0 0
  %1778 = vmatpush1.bf16.xpose.msra.mxu0 %v1759
  %1779 = vmatprep.subr.bf16.mxu0 0
  %1780 = vmatpush1.bf16.xpose.msra.mxu0 %v1762
  %1781 = vmatprep.subr.bf16.mxu0 0
  %1782 = vmatpush1.bf16.xpose.msra.mxu0 %v1765
  %1783 = vmatprep.subr.bf16.mxu0 0
  %1784 = vmatpush1.bf16.xpose.msra.mxu0 0
  %1785 = vmatprep.subr.bf16.mxu0 0
  %1786 = vmatpush1.bf16.xpose.msra.mxu0 0
  %1787 = vmatprep.subr.bf16.mxu0 0
  %1788 = vmatpush1.bf16.xpose.msra.mxu0 0
  %1789 = vmatprep.subr.bf16.mxu0 0
  %1790 = vmatpush1.bf16.xpose.msra.mxu0 0
  %1791 = vmatprep.subr.bf16.mxu0 0
  %1792 = vmatpush1.bf16.xpose.msra.mxu0 0
  %1793 = vmatprep.subr.bf16.mxu0 0
  %1794 = vmatpush1.bf16.xpose.msra.mxu0 0
  %1795 = vmatprep.subr.bf16.mxu0 0
  %1796 = vmatpush1.bf16.xpose.msra.mxu0 0
  %1797 = vmatprep.subr.bf16.mxu0 0
  %1798 = vmatpush1.bf16.xpose.msra.mxu0 0
  %1799 = vmatprep.mubr.bf16.mxu0 0
  %1800 = vmatmul.mubr.bf16.gmra.mrb[0].mxu0 %v1720
  %v1801 = vpop.f32.mrb[0].mxu0
  %v1802 = vadd.f32 0.0, %v1801
  %v1803 = vpop.f32.mrb[0].mxu0
  %v1804 = vpop.f32.mrb[0].mxu0
  %v1805 = vadd.f32 0.0, %v1804
  %v1806 = vpop.f32.mrb[0].mxu0
  %1807 = vmatprep.mubr.bf16.mxu0 0
  %1808 = vmatmul.mubr.bf16.gmra.mrb[0].mxu0 %v1723
  %v1809 = vpop.f32.mrb[0].mxu0
  %v1810 = vadd.f32 0.0, %v1809
  %v1811 = vpop.f32.mrb[0].mxu0
  %v1812 = vpop.f32.mrb[0].mxu0
  %v1813 = vadd.f32 0.0, %v1812
  %v1814 = vpop.f32.mrb[0].mxu0
  %1815 = vmatprep.mubr.bf16.mxu0 0
  %1816 = vmatmul.mubr.bf16.gmra.mrb[0].mxu0 %v1726
  %v1817 = vpop.f32.mrb[0].mxu0
  %v1818 = vadd.f32 0.0, %v1817
  %v1819 = vpop.f32.mrb[0].mxu0
  %v1820 = vpop.f32.mrb[0].mxu0
  %v1821 = vadd.f32 0.0, %v1820
  %v1822 = vpop.f32.mrb[0].mxu0
  %1823 = vmatprep.mubr.bf16.mxu0 0
  %1824 = vmatmul.mubr.bf16.gmra.mrb[0].mxu0 %v1729
  %v1825 = vpop.f32.mrb[0].mxu0
  %v1826 = vadd.f32 0.0, %v1825
  %v1827 = vpop.f32.mrb[0].mxu0
  %v1828 = vpop.f32.mrb[0].mxu0
  %v1829 = vadd.f32 0.0, %v1828
  %v1830 = vpop.f32.mrb[0].mxu0
  %1831 = vmatprep.mubr.bf16.mxu0 0
  %1832 = vmatmul.mubr.bf16.gmra.mrb[0].mxu0 %v1732
  %v1833 = vpop.f32.mrb[0].mxu0
  %v1834 = vadd.f32 0.0, %v1833
  %v1835 = vpop.f32.mrb[0].mxu0
  %v1836 = vpop.f32.mrb[0].mxu0
  %v1837 = vadd.f32 0.0, %v1836
  %v1838 = vpop.f32.mrb[0].mxu0
  %1839 = vmatprep.mubr.bf16.mxu0 0
  %1840 = vmatmul.mubr.bf16.gmra.mrb[0].mxu0 %v1735
  %v1841 = vpop.f32.mrb[0].mxu0
  %v1842 = vadd.f32 0.0, %v1841
  %v1843 = vpop.f32.mrb[0].mxu0
  %v1844 = vpop.f32.mrb[0].mxu0
  %v1845 = vadd.f32 0.0, %v1844
  %v1846 = vpop.f32.mrb[0].mxu0
  %1847 = vmatprep.mubr.bf16.mxu0 0
  %1848 = vmatmul.mubr.bf16.gmra.mrb[0].mxu0 %v1738
  %v1849 = vpop.f32.mrb[0].mxu0
  %v1850 = vadd.f32 0.0, %v1849
  %v1851 = vpop.f32.mrb[0].mxu0
  %v1852 = vpop.f32.mrb[0].mxu0
  %v1853 = vadd.f32 0.0, %v1852
  %v1854 = vpop.f32.mrb[0].mxu0
  %1855 = vmatprep.mubr.bf16.mxu0 0
  %1856 = vmatmul.mubr.bf16.gmra.mrb[0].mxu0 %v1741
  %v1857 = vpop.f32.mrb[0].mxu0
  %v1858 = vadd.f32 0.0, %v1857
  %v1859 = vpop.f32.mrb[0].mxu0
  %v1860 = vpop.f32.mrb[0].mxu0
  %v1861 = vadd.f32 0.0, %v1860
  %v1862 = vpop.f32.mrb[0].mxu0
  %1863 = vdwg.mxu0
  %1872 = vrot.lane.b32.xlu0 %v994, 96
  %v1873 = vpop.permute.xlu0 %1872
  %1874 = vrot.lane.b32.xlu0 %v995, 96
  %v1875 = vpop.permute.xlu0 %1874
  %1876 = vrot.lane.b32.xlu0 %v996, 96
  %v1877 = vpop.permute.xlu0 %1876
  %1878 = vrot.lane.b32.xlu0 %v997, 96
  %v1879 = vpop.permute.xlu0 %1878
  %1880 = vrot.lane.b32.xlu0 %v998, 96
  %v1881 = vpop.permute.xlu0 %1880
  %1882 = vrot.lane.b32.xlu0 %v999, 96
  %v1883 = vpop.permute.xlu0 %1882
  %1884 = vrot.lane.b32.xlu0 %v1000, 96
  %v1885 = vpop.permute.xlu0 %1884
  %1886 = vrot.lane.b32.xlu0 %v1001, 96
  %v1887 = vpop.permute.xlu0 %1886
  %v1889 = vsel %vm1042, %v994, 0
  %v1892 = vsel %vm1042, %v995, 0
  %v1895 = vsel %vm1042, %v996, 0
  %v1898 = vsel %vm1042, %v997, 0
  %v1901 = vsel %vm1042, %v998, 0
  %v1904 = vsel %vm1042, %v999, 0
  %v1907 = vsel %vm1042, %v1000, 0
  %v1910 = vsel %vm1042, %v1001, 0
  %v1913 = vsel %vm1042, %v1873, 0
  %v1916 = vsel %vm1042, %v1875, 0
  %v1919 = vsel %vm1042, %v1877, 0
  %v1922 = vsel %vm1042, %v1879, 0
  %v1925 = vsel %vm1042, %v1881, 0
  %v1928 = vsel %vm1042, %v1883, 0
  %v1931 = vsel %vm1042, %v1885, 0
  %v1934 = vsel %vm1042, %v1887, 0
  %1936 = vmatprep.subr.bf16.mxu0 0
  %1937 = vmatpush1.bf16.xpose.msra.mxu0 %v1913
  %1938 = vmatprep.subr.bf16.mxu0 0
  %1939 = vmatpush1.bf16.xpose.msra.mxu0 %v1916
  %1940 = vmatprep.subr.bf16.mxu0 0
  %1941 = vmatpush1.bf16.xpose.msra.mxu0 %v1919
  %1942 = vmatprep.subr.bf16.mxu0 0
  %1943 = vmatpush1.bf16.xpose.msra.mxu0 %v1922
  %1944 = vmatprep.subr.bf16.mxu0 0
  %1945 = vmatpush1.bf16.xpose.msra.mxu0 %v1925
  %1946 = vmatprep.subr.bf16.mxu0 0
  %1947 = vmatpush1.bf16.xpose.msra.mxu0 %v1928
  %1948 = vmatprep.subr.bf16.mxu0 0
  %1949 = vmatpush1.bf16.xpose.msra.mxu0 %v1931
  %1950 = vmatprep.subr.bf16.mxu0 0
  %1951 = vmatpush1.bf16.xpose.msra.mxu0 %v1934
  %1952 = vmatprep.subr.bf16.mxu0 0
  %1953 = vmatpush1.bf16.xpose.msra.mxu0 0
  %1954 = vmatprep.subr.bf16.mxu0 0
  %1955 = vmatpush1.bf16.xpose.msra.mxu0 0
  %1956 = vmatprep.subr.bf16.mxu0 0
  %1957 = vmatpush1.bf16.xpose.msra.mxu0 0
  %1958 = vmatprep.subr.bf16.mxu0 0
  %1959 = vmatpush1.bf16.xpose.msra.mxu0 0
  %1960 = vmatprep.subr.bf16.mxu0 0
  %1961 = vmatpush1.bf16.xpose.msra.mxu0 0
  %1962 = vmatprep.subr.bf16.mxu0 0
  %1963 = vmatpush1.bf16.xpose.msra.mxu0 0
  %1964 = vmatprep.subr.bf16.mxu0 0
  %1965 = vmatpush1.bf16.xpose.msra.mxu0 0
  %1966 = vmatprep.subr.bf16.mxu0 0
  %1967 = vmatpush1.bf16.xpose.msra.mxu0 0
  %1968 = vmatprep.mubr.bf16.mxu0 0
  %1969 = vmatmul.mubr.bf16.gmra.mrb[0].mxu0 %v1889
  %v1970 = vpop.f32.mrb[0].mxu0
  %v1971 = vadd.f32 0.0, %v1970
  %v1972 = vpop.f32.mrb[0].mxu0
  %v1973 = vpop.f32.mrb[0].mxu0
  %v1974 = vadd.f32 0.0, %v1973
  %v1975 = vpop.f32.mrb[0].mxu0
  %1976 = vmatprep.mubr.bf16.mxu0 0
  %1977 = vmatmul.mubr.bf16.gmra.mrb[0].mxu0 %v1892
  %v1978 = vpop.f32.mrb[0].mxu0
  %v1979 = vadd.f32 0.0, %v1978
  %v1980 = vpop.f32.mrb[0].mxu0
  %v1981 = vpop.f32.mrb[0].mxu0
  %v1982 = vadd.f32 0.0, %v1981
  %v1983 = vpop.f32.mrb[0].mxu0
  %1984 = vmatprep.mubr.bf16.mxu0 0
  %1985 = vmatmul.mubr.bf16.gmra.mrb[0].mxu0 %v1895
  %v1986 = vpop.f32.mrb[0].mxu0
  %v1987 = vadd.f32 0.0, %v1986
  %v1988 = vpop.f32.mrb[0].mxu0
  %v1989 = vpop.f32.mrb[0].mxu0
  %v1990 = vadd.f32 0.0, %v1989
  %v1991 = vpop.f32.mrb[0].mxu0
  %1992 = vmatprep.mubr.bf16.mxu0 0
  %1993 = vmatmul.mubr.bf16.gmra.mrb[0].mxu0 %v1898
  %v1994 = vpop.f32.mrb[0].mxu0
  %v1995 = vadd.f32 0.0, %v1994
  %v1996 = vpop.f32.mrb[0].mxu0
  %v1997 = vpop.f32.mrb[0].mxu0
  %v1998 = vadd.f32 0.0, %v1997
  %v1999 = vpop.f32.mrb[0].mxu0
  %2000 = vmatprep.mubr.bf16.mxu0 0
  %2001 = vmatmul.mubr.bf16.gmra.mrb[0].mxu0 %v1901
  %v2002 = vpop.f32.mrb[0].mxu0
  %v2003 = vadd.f32 0.0, %v2002
  %v2004 = vpop.f32.mrb[0].mxu0
  %v2005 = vpop.f32.mrb[0].mxu0
  %v2006 = vadd.f32 0.0, %v2005
  %v2007 = vpop.f32.mrb[0].mxu0
  %2008 = vmatprep.mubr.bf16.mxu0 0
  %2009 = vmatmul.mubr.bf16.gmra.mrb[0].mxu0 %v1904
  %v2010 = vpop.f32.mrb[0].mxu0
  %v2011 = vadd.f32 0.0, %v2010
  %v2012 = vpop.f32.mrb[0].mxu0
  %v2013 = vpop.f32.mrb[0].mxu0
  %v2014 = vadd.f32 0.0, %v2013
  %v2015 = vpop.f32.mrb[0].mxu0
  %2016 = vmatprep.mubr.bf16.mxu0 0
  %2017 = vmatmul.mubr.bf16.gmra.mrb[0].mxu0 %v1907
  %v2018 = vpop.f32.mrb[0].mxu0
  %v2019 = vadd.f32 0.0, %v2018
  %v2020 = vpop.f32.mrb[0].mxu0
  %v2021 = vpop.f32.mrb[0].mxu0
  %v2022 = vadd.f32 0.0, %v2021
  %v2023 = vpop.f32.mrb[0].mxu0
  %2024 = vmatprep.mubr.bf16.mxu0 0
  %2025 = vmatmul.mubr.bf16.gmra.mrb[0].mxu0 %v1910
  %v2026 = vpop.f32.mrb[0].mxu0
  %v2027 = vadd.f32 0.0, %v2026
  %v2028 = vpop.f32.mrb[0].mxu0
  %v2029 = vpop.f32.mrb[0].mxu0
  %v2030 = vadd.f32 0.0, %v2029
  %v2031 = vpop.f32.mrb[0].mxu0
  %2032 = vdwg.mxu0
  %2041 = vrot.lane.b32.xlu0 %v1002, 96
  %v2042 = vpop.permute.xlu0 %2041
  %2043 = vrot.lane.b32.xlu0 %v1003, 96
  %v2044 = vpop.permute.xlu0 %2043
  %2045 = vrot.lane.b32.xlu0 %v1004, 96
  %v2046 = vpop.permute.xlu0 %2045
  %2047 = vrot.lane.b32.xlu0 %v1005, 96
  %v2048 = vpop.permute.xlu0 %2047
  %2049 = vrot.lane.b32.xlu0 %v1006, 96
  %v2050 = vpop.permute.xlu0 %2049
  %2051 = vrot.lane.b32.xlu0 %v1007, 96
  %v2052 = vpop.permute.xlu0 %2051
  %2053 = vrot.lane.b32.xlu0 %v1008, 96
  %v2054 = vpop.permute.xlu0 %2053
  %2055 = vrot.lane.b32.xlu0 %v1009, 96
  %v2056 = vpop.permute.xlu0 %2055
  %v2058 = vsel %vm1042, %v1002, 0
  %v2061 = vsel %vm1042, %v1003, 0
  %v2064 = vsel %vm1042, %v1004, 0
  %v2067 = vsel %vm1042, %v1005, 0
  %v2070 = vsel %vm1042, %v1006, 0
  %v2073 = vsel %vm1042, %v1007, 0
  %v2076 = vsel %vm1042, %v1008, 0
  %v2079 = vsel %vm1042, %v1009, 0
  %v2082 = vsel %vm1042, %v2042, 0
  %v2085 = vsel %vm1042, %v2044, 0
  %v2088 = vsel %vm1042, %v2046, 0
  %v2091 = vsel %vm1042, %v2048, 0
  %v2094 = vsel %vm1042, %v2050, 0
  %v2097 = vsel %vm1042, %v2052, 0
  %v2100 = vsel %vm1042, %v2054, 0
  %v2103 = vsel %vm1042, %v2056, 0
  %2105 = vmatprep.subr.bf16.mxu0 0
  %2106 = vmatpush1.bf16.xpose.msra.mxu0 %v2082
  %2107 = vmatprep.subr.bf16.mxu0 0
  %2108 = vmatpush1.bf16.xpose.msra.mxu0 %v2085
  %2109 = vmatprep.subr.bf16.mxu0 0
  %2110 = vmatpush1.bf16.xpose.msra.mxu0 %v2088
  %2111 = vmatprep.subr.bf16.mxu0 0
  %2112 = vmatpush1.bf16.xpose.msra.mxu0 %v2091
  %2113 = vmatprep.subr.bf16.mxu0 0
  %2114 = vmatpush1.bf16.xpose.msra.mxu0 %v2094
  %2115 = vmatprep.subr.bf16.mxu0 0
  %2116 = vmatpush1.bf16.xpose.msra.mxu0 %v2097
  %2117 = vmatprep.subr.bf16.mxu0 0
  %2118 = vmatpush1.bf16.xpose.msra.mxu0 %v2100
  %2119 = vmatprep.subr.bf16.mxu0 0
  %2120 = vmatpush1.bf16.xpose.msra.mxu0 %v2103
  %2121 = vmatprep.subr.bf16.mxu0 0
  %2122 = vmatpush1.bf16.xpose.msra.mxu0 0
  %2123 = vmatprep.subr.bf16.mxu0 0
  %2124 = vmatpush1.bf16.xpose.msra.mxu0 0
  %2125 = vmatprep.subr.bf16.mxu0 0
  %2126 = vmatpush1.bf16.xpose.msra.mxu0 0
  %2127 = vmatprep.subr.bf16.mxu0 0
  %2128 = vmatpush1.bf16.xpose.msra.mxu0 0
  %2129 = vmatprep.subr.bf16.mxu0 0
  %2130 = vmatpush1.bf16.xpose.msra.mxu0 0
  %2131 = vmatprep.subr.bf16.mxu0 0
  %2132 = vmatpush1.bf16.xpose.msra.mxu0 0
  %2133 = vmatprep.subr.bf16.mxu0 0
  %2134 = vmatpush1.bf16.xpose.msra.mxu0 0
  %2135 = vmatprep.subr.bf16.mxu0 0
  %2136 = vmatpush1.bf16.xpose.msra.mxu0 0
  %2137 = vmatprep.mubr.bf16.mxu0 0
  %2138 = vmatmul.mubr.bf16.gmra.mrb[0].mxu0 %v2058
  %v2139 = vpop.f32.mrb[0].mxu0
  %v2140 = vadd.f32 0.0, %v2139
  %v2141 = vpop.f32.mrb[0].mxu0
  %v2142 = vpop.f32.mrb[0].mxu0
  %v2143 = vadd.f32 0.0, %v2142
  %v2144 = vpop.f32.mrb[0].mxu0
  %2145 = vmatprep.mubr.bf16.mxu0 0
  %2146 = vmatmul.mubr.bf16.gmra.mrb[0].mxu0 %v2061
  %v2147 = vpop.f32.mrb[0].mxu0
  %v2148 = vadd.f32 0.0, %v2147
  %v2149 = vpop.f32.mrb[0].mxu0
  %v2150 = vpop.f32.mrb[0].mxu0
  %v2151 = vadd.f32 0.0, %v2150
  %v2152 = vpop.f32.mrb[0].mxu0
  %2153 = vmatprep.mubr.bf16.mxu0 0
  %2154 = vmatmul.mubr.bf16.gmra.mrb[0].mxu0 %v2064
  %v2155 = vpop.f32.mrb[0].mxu0
  %v2156 = vadd.f32 0.0, %v2155
  %v2157 = vpop.f32.mrb[0].mxu0
  %v2158 = vpop.f32.mrb[0].mxu0
  %v2159 = vadd.f32 0.0, %v2158
  %v2160 = vpop.f32.mrb[0].mxu0
  %2161 = vmatprep.mubr.bf16.mxu0 0
  %2162 = vmatmul.mubr.bf16.gmra.mrb[0].mxu0 %v2067
  %v2163 = vpop.f32.mrb[0].mxu0
  %v2164 = vadd.f32 0.0, %v2163
  %v2165 = vpop.f32.mrb[0].mxu0
  %v2166 = vpop.f32.mrb[0].mxu0
  %v2167 = vadd.f32 0.0, %v2166
  %v2168 = vpop.f32.mrb[0].mxu0
  %2169 = vmatprep.mubr.bf16.mxu0 0
  %2170 = vmatmul.mubr.bf16.gmra.mrb[0].mxu0 %v2070
  %v2171 = vpop.f32.mrb[0].mxu0
  %v2172 = vadd.f32 0.0, %v2171
  %v2173 = vpop.f32.mrb[0].mxu0
  %v2174 = vpop.f32.mrb[0].mxu0
  %v2175 = vadd.f32 0.0, %v2174
  %v2176 = vpop.f32.mrb[0].mxu0
  %2177 = vmatprep.mubr.bf16.mxu0 0
  %2178 = vmatmul.mubr.bf16.gmra.mrb[0].mxu0 %v2073
  %v2179 = vpop.f32.mrb[0].mxu0
  %v2180 = vadd.f32 0.0, %v2179
  %v2181 = vpop.f32.mrb[0].mxu0
  %v2182 = vpop.f32.mrb[0].mxu0
  %v2183 = vadd.f32 0.0, %v2182
  %v2184 = vpop.f32.mrb[0].mxu0
  %2185 = vmatprep.mubr.bf16.mxu0 0
  %2186 = vmatmul.mubr.bf16.gmra.mrb[0].mxu0 %v2076
  %v2187 = vpop.f32.mrb[0].mxu0
  %v2188 = vadd.f32 0.0, %v2187
  %v2189 = vpop.f32.mrb[0].mxu0
  %v2190 = vpop.f32.mrb[0].mxu0
  %v2191 = vadd.f32 0.0, %v2190
  %v2192 = vpop.f32.mrb[0].mxu0
  %2193 = vmatprep.mubr.bf16.mxu0 0
  %2194 = vmatmul.mubr.bf16.gmra.mrb[0].mxu0 %v2079
  %v2195 = vpop.f32.mrb[0].mxu0
  %v2196 = vadd.f32 0.0, %v2195
  %v2197 = vpop.f32.mrb[0].mxu0
  %v2198 = vpop.f32.mrb[0].mxu0
  %v2199 = vadd.f32 0.0, %v2198
  %v2200 = vpop.f32.mrb[0].mxu0
  %2201 = vdwg.mxu0
  %2210 = vrot.lane.b32.xlu0 %v1010, 96
  %v2211 = vpop.permute.xlu0 %2210
  %2212 = vrot.lane.b32.xlu0 %v1011, 96
  %v2213 = vpop.permute.xlu0 %2212
  %2214 = vrot.lane.b32.xlu0 %v1012, 96
  %v2215 = vpop.permute.xlu0 %2214
  %2216 = vrot.lane.b32.xlu0 %v1013, 96
  %v2217 = vpop.permute.xlu0 %2216
  %2218 = vrot.lane.b32.xlu0 %v1014, 96
  %v2219 = vpop.permute.xlu0 %2218
  %2220 = vrot.lane.b32.xlu0 %v1015, 96
  %v2221 = vpop.permute.xlu0 %2220
  %2222 = vrot.lane.b32.xlu0 %v1016, 96
  %v2223 = vpop.permute.xlu0 %2222
  %2224 = vrot.lane.b32.xlu0 %v1017, 96
  %v2225 = vpop.permute.xlu0 %2224
  %v2227 = vsel %vm1042, %v1010, 0
  %v2230 = vsel %vm1042, %v1011, 0
  %v2233 = vsel %vm1042, %v1012, 0
  %v2236 = vsel %vm1042, %v1013, 0
  %v2239 = vsel %vm1042, %v1014, 0
  %v2242 = vsel %vm1042, %v1015, 0
  %v2245 = vsel %vm1042, %v1016, 0
  %v2248 = vsel %vm1042, %v1017, 0
  %v2251 = vsel %vm1042, %v2211, 0
  %v2254 = vsel %vm1042, %v2213, 0
  %v2257 = vsel %vm1042, %v2215, 0
  %v2260 = vsel %vm1042, %v2217, 0
  %v2263 = vsel %vm1042, %v2219, 0
  %v2266 = vsel %vm1042, %v2221, 0
  %v2269 = vsel %vm1042, %v2223, 0
  %v2272 = vsel %vm1042, %v2225, 0
  %2274 = vmatprep.subr.bf16.mxu0 0
  %2275 = vmatpush1.bf16.xpose.msra.mxu0 %v2251
  %2276 = vmatprep.subr.bf16.mxu0 0
  %2277 = vmatpush1.bf16.xpose.msra.mxu0 %v2254
  %2278 = vmatprep.subr.bf16.mxu0 0
  %2279 = vmatpush1.bf16.xpose.msra.mxu0 %v2257
  %2280 = vmatprep.subr.bf16.mxu0 0
  %2281 = vmatpush1.bf16.xpose.msra.mxu0 %v2260
  %2282 = vmatprep.subr.bf16.mxu0 0
  %2283 = vmatpush1.bf16.xpose.msra.mxu0 %v2263
  %2284 = vmatprep.subr.bf16.mxu0 0
  %2285 = vmatpush1.bf16.xpose.msra.mxu0 %v2266
  %2286 = vmatprep.subr.bf16.mxu0 0
  %2287 = vmatpush1.bf16.xpose.msra.mxu0 %v2269
  %2288 = vmatprep.subr.bf16.mxu0 0
  %2289 = vmatpush1.bf16.xpose.msra.mxu0 %v2272
  %2290 = vmatprep.subr.bf16.mxu0 0
  %2291 = vmatpush1.bf16.xpose.msra.mxu0 0
  %2292 = vmatprep.subr.bf16.mxu0 0
  %2293 = vmatpush1.bf16.xpose.msra.mxu0 0
  %2294 = vmatprep.subr.bf16.mxu0 0
  %2295 = vmatpush1.bf16.xpose.msra.mxu0 0
  %2296 = vmatprep.subr.bf16.mxu0 0
  %2297 = vmatpush1.bf16.xpose.msra.mxu0 0
  %2298 = vmatprep.subr.bf16.mxu0 0
  %2299 = vmatpush1.bf16.xpose.msra.mxu0 0
  %2300 = vmatprep.subr.bf16.mxu0 0
  %2301 = vmatpush1.bf16.xpose.msra.mxu0 0
  %2302 = vmatprep.subr.bf16.mxu0 0
  %2303 = vmatpush1.bf16.xpose.msra.mxu0 0
  %2304 = vmatprep.subr.bf16.mxu0 0
  %2305 = vmatpush1.bf16.xpose.msra.mxu0 0
  %2306 = vmatprep.mubr.bf16.mxu0 0
  %2307 = vmatmul.mubr.bf16.gmra.mrb[0].mxu0 %v2227
  %v2308 = vpop.f32.mrb[0].mxu0
  %v2309 = vadd.f32 0.0, %v2308
  %v2310 = vpop.f32.mrb[0].mxu0
  %v2311 = vpop.f32.mrb[0].mxu0
  %v2312 = vadd.f32 0.0, %v2311
  %v2313 = vpop.f32.mrb[0].mxu0
  %2314 = vmatprep.mubr.bf16.mxu0 0
  %2315 = vmatmul.mubr.bf16.gmra.mrb[0].mxu0 %v2230
  %v2316 = vpop.f32.mrb[0].mxu0
  %v2317 = vadd.f32 0.0, %v2316
  %v2318 = vpop.f32.mrb[0].mxu0
  %v2319 = vpop.f32.mrb[0].mxu0
  %v2320 = vadd.f32 0.0, %v2319
  %v2321 = vpop.f32.mrb[0].mxu0
  %2322 = vmatprep.mubr.bf16.mxu0 0
  %2323 = vmatmul.mubr.bf16.gmra.mrb[0].mxu0 %v2233
  %v2324 = vpop.f32.mrb[0].mxu0
  %v2325 = vadd.f32 0.0, %v2324
  %v2326 = vpop.f32.mrb[0].mxu0
  %v2327 = vpop.f32.mrb[0].mxu0
  %v2328 = vadd.f32 0.0, %v2327
  %v2329 = vpop.f32.mrb[0].mxu0
  %2330 = vmatprep.mubr.bf16.mxu0 0
  %2331 = vmatmul.mubr.bf16.gmra.mrb[0].mxu0 %v2236
  %v2332 = vpop.f32.mrb[0].mxu0
  %v2333 = vadd.f32 0.0, %v2332
  %v2334 = vpop.f32.mrb[0].mxu0
  %v2335 = vpop.f32.mrb[0].mxu0
  %v2336 = vadd.f32 0.0, %v2335
  %v2337 = vpop.f32.mrb[0].mxu0
  %2338 = vmatprep.mubr.bf16.mxu0 0
  %2339 = vmatmul.mubr.bf16.gmra.mrb[0].mxu0 %v2239
  %v2340 = vpop.f32.mrb[0].mxu0
  %v2341 = vadd.f32 0.0, %v2340
  %v2342 = vpop.f32.mrb[0].mxu0
  %v2343 = vpop.f32.mrb[0].mxu0
  %v2344 = vadd.f32 0.0, %v2343
  %v2345 = vpop.f32.mrb[0].mxu0
  %2346 = vmatprep.mubr.bf16.mxu0 0
  %2347 = vmatmul.mubr.bf16.gmra.mrb[0].mxu0 %v2242
  %v2348 = vpop.f32.mrb[0].mxu0
  %v2349 = vadd.f32 0.0, %v2348
  %v2350 = vpop.f32.mrb[0].mxu0
  %v2351 = vpop.f32.mrb[0].mxu0
  %v2352 = vadd.f32 0.0, %v2351
  %v2353 = vpop.f32.mrb[0].mxu0
  %2354 = vmatprep.mubr.bf16.mxu0 0
  %2355 = vmatmul.mubr.bf16.gmra.mrb[0].mxu0 %v2245
  %v2356 = vpop.f32.mrb[0].mxu0
  %v2357 = vadd.f32 0.0, %v2356
  %v2358 = vpop.f32.mrb[0].mxu0
  %v2359 = vpop.f32.mrb[0].mxu0
  %v2360 = vadd.f32 0.0, %v2359
  %v2361 = vpop.f32.mrb[0].mxu0
  %2362 = vmatprep.mubr.bf16.mxu0 0
  %2363 = vmatmul.mubr.bf16.gmra.mrb[0].mxu0 %v2248
  %v2364 = vpop.f32.mrb[0].mxu0
  %v2365 = vadd.f32 0.0, %v2364
  %v2366 = vpop.f32.mrb[0].mxu0
  %v2367 = vpop.f32.mrb[0].mxu0
  %v2368 = vadd.f32 0.0, %v2367
  %v2369 = vpop.f32.mrb[0].mxu0
  %2370 = vdwg.mxu0
  %2371 = vmax.xlane.f32.xlu0 %v1126
  %v2372 = vpop.xlane.xlu0 %2371
  %2373 = vmax.xlane.f32.xlu0 %v1129
  %v2374 = vpop.xlane.xlu0 %2373
  %2375 = vmax.xlane.f32.xlu0 %v1134
  %v2376 = vpop.xlane.xlu0 %2375
  %2377 = vmax.xlane.f32.xlu0 %v1137
  %v2378 = vpop.xlane.xlu0 %2377
  %2379 = vmax.xlane.f32.xlu0 %v1142
  %v2380 = vpop.xlane.xlu0 %2379
  %2381 = vmax.xlane.f32.xlu0 %v1145
  %v2382 = vpop.xlane.xlu0 %2381
  %2383 = vmax.xlane.f32.xlu0 %v1150
  %v2384 = vpop.xlane.xlu0 %2383
  %2385 = vmax.xlane.f32.xlu0 %v1153
  %v2386 = vpop.xlane.xlu0 %2385
  %2387 = vmax.xlane.f32.xlu0 %v1158
  %v2388 = vpop.xlane.xlu0 %2387
  %2389 = vmax.xlane.f32.xlu0 %v1161
  %v2390 = vpop.xlane.xlu0 %2389
  %2391 = vmax.xlane.f32.xlu0 %v1166
  %v2392 = vpop.xlane.xlu0 %2391
  %2393 = vmax.xlane.f32.xlu0 %v1169
  %v2394 = vpop.xlane.xlu0 %2393
  %2395 = vmax.xlane.f32.xlu0 %v1174
  %v2396 = vpop.xlane.xlu0 %2395
  %2397 = vmax.xlane.f32.xlu0 %v1177
  %v2398 = vpop.xlane.xlu0 %2397
  %2399 = vmax.xlane.f32.xlu0 %v1182
  %v2400 = vpop.xlane.xlu0 %2399
  %2401 = vmax.xlane.f32.xlu0 %v1185
  %v2402 = vpop.xlane.xlu0 %2401
  %2403 = vmax.xlane.f32.xlu0 %v1295
  %v2404 = vpop.xlane.xlu0 %2403
  %2405 = vmax.xlane.f32.xlu0 %v1298
  %v2406 = vpop.xlane.xlu0 %2405
  %2407 = vmax.xlane.f32.xlu0 %v1303
  %v2408 = vpop.xlane.xlu0 %2407
  %2409 = vmax.xlane.f32.xlu0 %v1306
  %v2410 = vpop.xlane.xlu0 %2409
  %2411 = vmax.xlane.f32.xlu0 %v1311
  %v2412 = vpop.xlane.xlu0 %2411
  %2413 = vmax.xlane.f32.xlu0 %v1314
  %v2414 = vpop.xlane.xlu0 %2413
  %2415 = vmax.xlane.f32.xlu0 %v1319
  %v2416 = vpop.xlane.xlu0 %2415
  %2417 = vmax.xlane.f32.xlu0 %v1322
  %v2418 = vpop.xlane.xlu0 %2417
  %2419 = vmax.xlane.f32.xlu0 %v1327
  %v2420 = vpop.xlane.xlu0 %2419
  %2421 = vmax.xlane.f32.xlu0 %v1330
  %v2422 = vpop.xlane.xlu0 %2421
  %2423 = vmax.xlane.f32.xlu0 %v1335
  %v2424 = vpop.xlane.xlu0 %2423
  %2425 = vmax.xlane.f32.xlu0 %v1338
  %v2426 = vpop.xlane.xlu0 %2425
  %2427 = vmax.xlane.f32.xlu0 %v1343
  %v2428 = vpop.xlane.xlu0 %2427
  %2429 = vmax.xlane.f32.xlu0 %v1346
  %v2430 = vpop.xlane.xlu0 %2429
  %2431 = vmax.xlane.f32.xlu0 %v1351
  %v2432 = vpop.xlane.xlu0 %2431
  %2433 = vmax.xlane.f32.xlu0 %v1354
  %v2434 = vpop.xlane.xlu0 %2433
  %2435 = vmax.xlane.f32.xlu0 %v1464
  %v2436 = vpop.xlane.xlu0 %2435
  %2437 = vmax.xlane.f32.xlu0 %v1467
  %v2438 = vpop.xlane.xlu0 %2437
  %2439 = vmax.xlane.f32.xlu0 %v1472
  %v2440 = vpop.xlane.xlu0 %2439
  %2441 = vmax.xlane.f32.xlu0 %v1475
  %v2442 = vpop.xlane.xlu0 %2441
  %2443 = vmax.xlane.f32.xlu0 %v1480
  %v2444 = vpop.xlane.xlu0 %2443
  %2445 = vmax.xlane.f32.xlu0 %v1483
  %v2446 = vpop.xlane.xlu0 %2445
  %2447 = vmax.xlane.f32.xlu0 %v1488
  %v2448 = vpop.xlane.xlu0 %2447
  %2449 = vmax.xlane.f32.xlu0 %v1491
  %v2450 = vpop.xlane.xlu0 %2449
  %2451 = vmax.xlane.f32.xlu0 %v1496
  %v2452 = vpop.xlane.xlu0 %2451
  %2453 = vmax.xlane.f32.xlu0 %v1499
  %v2454 = vpop.xlane.xlu0 %2453
  %2455 = vmax.xlane.f32.xlu0 %v1504
  %v2456 = vpop.xlane.xlu0 %2455
  %2457 = vmax.xlane.f32.xlu0 %v1507
  %v2458 = vpop.xlane.xlu0 %2457
  %2459 = vmax.xlane.f32.xlu0 %v1512
  %v2460 = vpop.xlane.xlu0 %2459
  %2461 = vmax.xlane.f32.xlu0 %v1515
  %v2462 = vpop.xlane.xlu0 %2461
  %2463 = vmax.xlane.f32.xlu0 %v1520
  %v2464 = vpop.xlane.xlu0 %2463
  %2465 = vmax.xlane.f32.xlu0 %v1523
  %v2466 = vpop.xlane.xlu0 %2465
  %2467 = vmax.xlane.f32.xlu0 %v1633
  %v2468 = vpop.xlane.xlu0 %2467
  %2469 = vmax.xlane.f32.xlu0 %v1636
  %v2470 = vpop.xlane.xlu0 %2469
  %2471 = vmax.xlane.f32.xlu0 %v1641
  %v2472 = vpop.xlane.xlu0 %2471
  %2473 = vmax.xlane.f32.xlu0 %v1644
  %v2474 = vpop.xlane.xlu0 %2473
  %2475 = vmax.xlane.f32.xlu0 %v1649
  %v2476 = vpop.xlane.xlu0 %2475
  %2477 = vmax.xlane.f32.xlu0 %v1652
  %v2478 = vpop.xlane.xlu0 %2477
  %2479 = vmax.xlane.f32.xlu0 %v1657
  %v2480 = vpop.xlane.xlu0 %2479
  %2481 = vmax.xlane.f32.xlu0 %v1660
  %v2482 = vpop.xlane.xlu0 %2481
  %2483 = vmax.xlane.f32.xlu0 %v1665
  %v2484 = vpop.xlane.xlu0 %2483
  %2485 = vmax.xlane.f32.xlu0 %v1668
  %v2486 = vpop.xlane.xlu0 %2485
  %2487 = vmax.xlane.f32.xlu0 %v1673
  %v2488 = vpop.xlane.xlu0 %2487
  %2489 = vmax.xlane.f32.xlu0 %v1676
  %v2490 = vpop.xlane.xlu0 %2489
  %2491 = vmax.xlane.f32.xlu0 %v1681
  %v2492 = vpop.xlane.xlu0 %2491
  %2493 = vmax.xlane.f32.xlu0 %v1684
  %v2494 = vpop.xlane.xlu0 %2493
  %2495 = vmax.xlane.f32.xlu0 %v1689
  %v2496 = vpop.xlane.xlu0 %2495
  %2497 = vmax.xlane.f32.xlu0 %v1692
  %v2498 = vpop.xlane.xlu0 %2497
  %2499 = vmax.xlane.f32.xlu0 %v1802
  %v2500 = vpop.xlane.xlu0 %2499
  %2501 = vmax.xlane.f32.xlu0 %v1805
  %v2502 = vpop.xlane.xlu0 %2501
  %2503 = vmax.xlane.f32.xlu0 %v1810
  %v2504 = vpop.xlane.xlu0 %2503
  %2505 = vmax.xlane.f32.xlu0 %v1813
  %v2506 = vpop.xlane.xlu0 %2505
  %2507 = vmax.xlane.f32.xlu0 %v1818
  %v2508 = vpop.xlane.xlu0 %2507
  %2509 = vmax.xlane.f32.xlu0 %v1821
  %v2510 = vpop.xlane.xlu0 %2509
  %2511 = vmax.xlane.f32.xlu0 %v1826
  %v2512 = vpop.xlane.xlu0 %2511
  %2513 = vmax.xlane.f32.xlu0 %v1829
  %v2514 = vpop.xlane.xlu0 %2513
  %2515 = vmax.xlane.f32.xlu0 %v1834
  %v2516 = vpop.xlane.xlu0 %2515
  %2517 = vmax.xlane.f32.xlu0 %v1837
  %v2518 = vpop.xlane.xlu0 %2517
  %2519 = vmax.xlane.f32.xlu0 %v1842
  %v2520 = vpop.xlane.xlu0 %2519
  %2521 = vmax.xlane.f32.xlu0 %v1845
  %v2522 = vpop.xlane.xlu0 %2521
  %2523 = vmax.xlane.f32.xlu0 %v1850
  %v2524 = vpop.xlane.xlu0 %2523
  %2525 = vmax.xlane.f32.xlu0 %v1853
  %v2526 = vpop.xlane.xlu0 %2525
  %2527 = vmax.xlane.f32.xlu0 %v1858
  %v2528 = vpop.xlane.xlu0 %2527
  %2529 = vmax.xlane.f32.xlu0 %v1861
  %v2530 = vpop.xlane.xlu0 %2529
  %2531 = vmax.xlane.f32.xlu0 %v1971
  %v2532 = vpop.xlane.xlu0 %2531
  %2533 = vmax.xlane.f32.xlu0 %v1974
  %v2534 = vpop.xlane.xlu0 %2533
  %2535 = vmax.xlane.f32.xlu0 %v1979
  %v2536 = vpop.xlane.xlu0 %2535
  %2537 = vmax.xlane.f32.xlu0 %v1982
  %v2538 = vpop.xlane.xlu0 %2537
  %2539 = vmax.xlane.f32.xlu0 %v1987
  %v2540 = vpop.xlane.xlu0 %2539
  %2541 = vmax.xlane.f32.xlu0 %v1990
  %v2542 = vpop.xlane.xlu0 %2541
  %2543 = vmax.xlane.f32.xlu0 %v1995
  %v2544 = vpop.xlane.xlu0 %2543
  %2545 = vmax.xlane.f32.xlu0 %v1998
  %v2546 = vpop.xlane.xlu0 %2545
  %2547 = vmax.xlane.f32.xlu0 %v2003
  %v2548 = vpop.xlane.xlu0 %2547
  %2549 = vmax.xlane.f32.xlu0 %v2006
  %v2550 = vpop.xlane.xlu0 %2549
  %2551 = vmax.xlane.f32.xlu0 %v2011
  %v2552 = vpop.xlane.xlu0 %2551
  %2553 = vmax.xlane.f32.xlu0 %v2014
  %v2554 = vpop.xlane.xlu0 %2553
  %2555 = vmax.xlane.f32.xlu0 %v2019
  %v2556 = vpop.xlane.xlu0 %2555
  %2557 = vmax.xlane.f32.xlu0 %v2022
  %v2558 = vpop.xlane.xlu0 %2557
  %2559 = vmax.xlane.f32.xlu0 %v2027
  %v2560 = vpop.xlane.xlu0 %2559
  %2561 = vmax.xlane.f32.xlu0 %v2030
  %v2562 = vpop.xlane.xlu0 %2561
  %2563 = vmax.xlane.f32.xlu0 %v2140
  %v2564 = vpop.xlane.xlu0 %2563
  %2565 = vmax.xlane.f32.xlu0 %v2143
  %v2566 = vpop.xlane.xlu0 %2565
  %2567 = vmax.xlane.f32.xlu0 %v2148
  %v2568 = vpop.xlane.xlu0 %2567
  %2569 = vmax.xlane.f32.xlu0 %v2151
  %v2570 = vpop.xlane.xlu0 %2569
  %2571 = vmax.xlane.f32.xlu0 %v2156
  %v2572 = vpop.xlane.xlu0 %2571
  %2573 = vmax.xlane.f32.xlu0 %v2159
  %v2574 = vpop.xlane.xlu0 %2573
  %2575 = vmax.xlane.f32.xlu0 %v2164
  %v2576 = vpop.xlane.xlu0 %2575
  %2577 = vmax.xlane.f32.xlu0 %v2167
  %v2578 = vpop.xlane.xlu0 %2577
  %2579 = vmax.xlane.f32.xlu0 %v2172
  %v2580 = vpop.xlane.xlu0 %2579
  %2581 = vmax.xlane.f32.xlu0 %v2175
  %v2582 = vpop.xlane.xlu0 %2581
  %2583 = vmax.xlane.f32.xlu0 %v2180
  %v2584 = vpop.xlane.xlu0 %2583
  %2585 = vmax.xlane.f32.xlu0 %v2183
  %v2586 = vpop.xlane.xlu0 %2585
  %2587 = vmax.xlane.f32.xlu0 %v2188
  %v2588 = vpop.xlane.xlu0 %2587
  %2589 = vmax.xlane.f32.xlu0 %v2191
  %v2590 = vpop.xlane.xlu0 %2589
  %2591 = vmax.xlane.f32.xlu0 %v2196
  %v2592 = vpop.xlane.xlu0 %2591
  %2593 = vmax.xlane.f32.xlu0 %v2199
  %v2594 = vpop.xlane.xlu0 %2593
  %2595 = vmax.xlane.f32.xlu0 %v2309
  %v2596 = vpop.xlane.xlu0 %2595
  %2597 = vmax.xlane.f32.xlu0 %v2312
  %v2598 = vpop.xlane.xlu0 %2597
  %2599 = vmax.xlane.f32.xlu0 %v2317
  %v2600 = vpop.xlane.xlu0 %2599
  %2601 = vmax.xlane.f32.xlu0 %v2320
  %v2602 = vpop.xlane.xlu0 %2601
  %2603 = vmax.xlane.f32.xlu0 %v2325
  %v2604 = vpop.xlane.xlu0 %2603
  %2605 = vmax.xlane.f32.xlu0 %v2328
  %v2606 = vpop.xlane.xlu0 %2605
  %2607 = vmax.xlane.f32.xlu0 %v2333
  %v2608 = vpop.xlane.xlu0 %2607
  %2609 = vmax.xlane.f32.xlu0 %v2336
  %v2610 = vpop.xlane.xlu0 %2609
  %2611 = vmax.xlane.f32.xlu0 %v2341
  %v2612 = vpop.xlane.xlu0 %2611
  %2613 = vmax.xlane.f32.xlu0 %v2344
  %v2614 = vpop.xlane.xlu0 %2613
  %2615 = vmax.xlane.f32.xlu0 %v2349
  %v2616 = vpop.xlane.xlu0 %2615
  %2617 = vmax.xlane.f32.xlu0 %v2352
  %v2618 = vpop.xlane.xlu0 %2617
  %2619 = vmax.xlane.f32.xlu0 %v2357
  %v2620 = vpop.xlane.xlu0 %2619
  %2621 = vmax.xlane.f32.xlu0 %v2360
  %v2622 = vpop.xlane.xlu0 %2621
  %2623 = vmax.xlane.f32.xlu0 %v2365
  %v2624 = vpop.xlane.xlu0 %2623
  %2625 = vmax.xlane.f32.xlu0 %v2368
  %v2626 = vpop.xlane.xlu0 %2625
  %v2627 = vsub.f32 %v1126, %v2372
  %v2628 = vsub.f32 %v1129, %v2374
  %v2629 = vsub.f32 %v1134, %v2376
  %v2630 = vsub.f32 %v1137, %v2378
  %v2631 = vsub.f32 %v1142, %v2380
  %v2632 = vsub.f32 %v1145, %v2382
  %v2633 = vsub.f32 %v1150, %v2384
  %v2634 = vsub.f32 %v1153, %v2386
  %v2635 = vsub.f32 %v1158, %v2388
  %v2636 = vsub.f32 %v1161, %v2390
  %v2637 = vsub.f32 %v1166, %v2392
  %v2638 = vsub.f32 %v1169, %v2394
  %v2639 = vsub.f32 %v1174, %v2396
  %v2640 = vsub.f32 %v1177, %v2398
  %v2641 = vsub.f32 %v1182, %v2400
  %v2642 = vsub.f32 %v1185, %v2402
  %v2643 = vsub.f32 %v1295, %v2404
  %v2644 = vsub.f32 %v1298, %v2406
  %v2645 = vsub.f32 %v1303, %v2408
  %v2646 = vsub.f32 %v1306, %v2410
  %v2647 = vsub.f32 %v1311, %v2412
  %v2648 = vsub.f32 %v1314, %v2414
  %v2649 = vsub.f32 %v1319, %v2416
  %v2650 = vsub.f32 %v1322, %v2418
  %v2651 = vsub.f32 %v1327, %v2420
  %v2652 = vsub.f32 %v1330, %v2422
  %v2653 = vsub.f32 %v1335, %v2424
  %v2654 = vsub.f32 %v1338, %v2426
  %v2655 = vsub.f32 %v1343, %v2428
  %v2656 = vsub.f32 %v1346, %v2430
  %v2657 = vsub.f32 %v1351, %v2432
  %v2658 = vsub.f32 %v1354, %v2434
  %v2659 = vsub.f32 %v1464, %v2436
  %v2660 = vsub.f32 %v1467, %v2438
  %v2661 = vsub.f32 %v1472, %v2440
  %v2662 = vsub.f32 %v1475, %v2442
  %v2663 = vsub.f32 %v1480, %v2444
  %v2664 = vsub.f32 %v1483, %v2446
  %v2665 = vsub.f32 %v1488, %v2448
  %v2666 = vsub.f32 %v1491, %v2450
  %v2667 = vsub.f32 %v1496, %v2452
  %v2668 = vsub.f32 %v1499, %v2454
  %v2669 = vsub.f32 %v1504, %v2456
  %v2670 = vsub.f32 %v1507, %v2458
  %v2671 = vsub.f32 %v1512, %v2460
  %v2672 = vsub.f32 %v1515, %v2462
  %v2673 = vsub.f32 %v1520, %v2464
  %v2674 = vsub.f32 %v1523, %v2466
  %v2675 = vsub.f32 %v1633, %v2468
  %v2676 = vsub.f32 %v1636, %v2470
  %v2677 = vsub.f32 %v1641, %v2472
  %v2678 = vsub.f32 %v1644, %v2474
  %v2679 = vsub.f32 %v1649, %v2476
  %v2680 = vsub.f32 %v1652, %v2478
  %v2681 = vsub.f32 %v1657, %v2480
  %v2682 = vsub.f32 %v1660, %v2482
  %v2683 = vsub.f32 %v1665, %v2484
  %v2684 = vsub.f32 %v1668, %v2486
  %v2685 = vsub.f32 %v1673, %v2488
  %v2686 = vsub.f32 %v1676, %v2490
  %v2687 = vsub.f32 %v1681, %v2492
  %v2688 = vsub.f32 %v1684, %v2494
  %v2689 = vsub.f32 %v1689, %v2496
  %v2690 = vsub.f32 %v1692, %v2498
  %v2691 = vsub.f32 %v1802, %v2500
  %v2692 = vsub.f32 %v1805, %v2502
  %v2693 = vsub.f32 %v1810, %v2504
  %v2694 = vsub.f32 %v1813, %v2506
  %v2695 = vsub.f32 %v1818, %v2508
  %v2696 = vsub.f32 %v1821, %v2510
  %v2697 = vsub.f32 %v1826, %v2512
  %v2698 = vsub.f32 %v1829, %v2514
  %v2699 = vsub.f32 %v1834, %v2516
  %v2700 = vsub.f32 %v1837, %v2518
  %v2701 = vsub.f32 %v1842, %v2520
  %v2702 = vsub.f32 %v1845, %v2522
  %v2703 = vsub.f32 %v1850, %v2524
  %v2704 = vsub.f32 %v1853, %v2526
  %v2705 = vsub.f32 %v1858, %v2528
  %v2706 = vsub.f32 %v1861, %v2530
  %v2707 = vsub.f32 %v1971, %v2532
  %v2708 = vsub.f32 %v1974, %v2534
  %v2709 = vsub.f32 %v1979, %v2536
  %v2710 = vsub.f32 %v1982, %v2538
  %v2711 = vsub.f32 %v1987, %v2540
  %v2712 = vsub.f32 %v1990, %v2542
  %v2713 = vsub.f32 %v1995, %v2544
  %v2714 = vsub.f32 %v1998, %v2546
  %v2715 = vsub.f32 %v2003, %v2548
  %v2716 = vsub.f32 %v2006, %v2550
  %v2717 = vsub.f32 %v2011, %v2552
  %v2718 = vsub.f32 %v2014, %v2554
  %v2719 = vsub.f32 %v2019, %v2556
  %v2720 = vsub.f32 %v2022, %v2558
  %v2721 = vsub.f32 %v2027, %v2560
  %v2722 = vsub.f32 %v2030, %v2562
  %v2723 = vsub.f32 %v2140, %v2564
  %v2724 = vsub.f32 %v2143, %v2566
  %v2725 = vsub.f32 %v2148, %v2568
  %v2726 = vsub.f32 %v2151, %v2570
  %v2727 = vsub.f32 %v2156, %v2572
  %v2728 = vsub.f32 %v2159, %v2574
  %v2729 = vsub.f32 %v2164, %v2576
  %v2730 = vsub.f32 %v2167, %v2578
  %v2731 = vsub.f32 %v2172, %v2580
  %v2732 = vsub.f32 %v2175, %v2582
  %v2733 = vsub.f32 %v2180, %v2584
  %v2734 = vsub.f32 %v2183, %v2586
  %v2735 = vsub.f32 %v2188, %v2588
  %v2736 = vsub.f32 %v2191, %v2590
  %v2737 = vsub.f32 %v2196, %v2592
  %v2738 = vsub.f32 %v2199, %v2594
  %v2739 = vsub.f32 %v2309, %v2596
  %v2740 = vsub.f32 %v2312, %v2598
  %v2741 = vsub.f32 %v2317, %v2600
  %v2742 = vsub.f32 %v2320, %v2602
  %v2743 = vsub.f32 %v2325, %v2604
  %v2744 = vsub.f32 %v2328, %v2606
  %v2745 = vsub.f32 %v2333, %v2608
  %v2746 = vsub.f32 %v2336, %v2610
  %v2747 = vsub.f32 %v2341, %v2612
  %v2748 = vsub.f32 %v2344, %v2614
  %v2749 = vsub.f32 %v2349, %v2616
  %v2750 = vsub.f32 %v2352, %v2618
  %v2751 = vsub.f32 %v2357, %v2620
  %v2752 = vsub.f32 %v2360, %v2622
  %v2753 = vsub.f32 %v2365, %v2624
  %v2754 = vsub.f32 %v2368, %v2626
  %v2755 = vmul.f32 %v2627, 1.442695
  %v2756 = vpow.pop %v2755
  %v2757 = vmul.f32 %v2628, 1.442695
  %v2758 = vpow.pop %v2757
  %v2759 = vmul.f32 %v2629, 1.442695
  %v2760 = vpow.pop %v2759
  %v2761 = vmul.f32 %v2630, 1.442695
  %v2762 = vpow.pop %v2761
  %v2763 = vmul.f32 %v2631, 1.442695
  %v2764 = vpow.pop %v2763
  %v2765 = vmul.f32 %v2632, 1.442695
  %v2766 = vpow.pop %v2765
  %v2767 = vmul.f32 %v2633, 1.442695
  %v2768 = vpow.pop %v2767
  %v2769 = vmul.f32 %v2634, 1.442695
  %v2770 = vpow.pop %v2769
  %v2771 = vmul.f32 %v2635, 1.442695
  %v2772 = vpow.pop %v2771
  %v2773 = vmul.f32 %v2636, 1.442695
  %v2774 = vpow.pop %v2773
  %v2775 = vmul.f32 %v2637, 1.442695
  %v2776 = vpow.pop %v2775
  %v2777 = vmul.f32 %v2638, 1.442695
  %v2778 = vpow.pop %v2777
  %v2779 = vmul.f32 %v2639, 1.442695
  %v2780 = vpow.pop %v2779
  %v2781 = vmul.f32 %v2640, 1.442695
  %v2782 = vpow.pop %v2781
  %v2783 = vmul.f32 %v2641, 1.442695
  %v2784 = vpow.pop %v2783
  %v2785 = vmul.f32 %v2642, 1.442695
  %v2786 = vpow.pop %v2785
  %v2787 = vmul.f32 %v2643, 1.442695
  %v2788 = vpow.pop %v2787
  %v2789 = vmul.f32 %v2644, 1.442695
  %v2790 = vpow.pop %v2789
  %v2791 = vmul.f32 %v2645, 1.442695
  %v2792 = vpow.pop %v2791
  %v2793 = vmul.f32 %v2646, 1.442695
  %v2794 = vpow.pop %v2793
  %v2795 = vmul.f32 %v2647, 1.442695
  %v2796 = vpow.pop %v2795
  %v2797 = vmul.f32 %v2648, 1.442695
  %v2798 = vpow.pop %v2797
  %v2799 = vmul.f32 %v2649, 1.442695
  %v2800 = vpow.pop %v2799
  %v2801 = vmul.f32 %v2650, 1.442695
  %v2802 = vpow.pop %v2801
  %v2803 = vmul.f32 %v2651, 1.442695
  %v2804 = vpow.pop %v2803
  %v2805 = vmul.f32 %v2652, 1.442695
  %v2806 = vpow.pop %v2805
  %v2807 = vmul.f32 %v2653, 1.442695
  %v2808 = vpow.pop %v2807
  %v2809 = vmul.f32 %v2654, 1.442695
  %v2810 = vpow.pop %v2809
  %v2811 = vmul.f32 %v2655, 1.442695
  %v2812 = vpow.pop %v2811
  %v2813 = vmul.f32 %v2656, 1.442695
  %v2814 = vpow.pop %v2813
  %v2815 = vmul.f32 %v2657, 1.442695
  %v2816 = vpow.pop %v2815
  %v2817 = vmul.f32 %v2658, 1.442695
  %v2818 = vpow.pop %v2817
  %v2819 = vmul.f32 %v2659, 1.442695
  %v2820 = vpow.pop %v2819
  %v2821 = vmul.f32 %v2660, 1.442695
  %v2822 = vpow.pop %v2821
  %v2823 = vmul.f32 %v2661, 1.442695
  %v2824 = vpow.pop %v2823
  %v2825 = vmul.f32 %v2662, 1.442695
  %v2826 = vpow.pop %v2825
  %v2827 = vmul.f32 %v2663, 1.442695
  %v2828 = vpow.pop %v2827
  %v2829 = vmul.f32 %v2664, 1.442695
  %v2830 = vpow.pop %v2829
  %v2831 = vmul.f32 %v2665, 1.442695
  %v2832 = vpow.pop %v2831
  %v2833 = vmul.f32 %v2666, 1.442695
  %v2834 = vpow.pop %v2833
  %v2835 = vmul.f32 %v2667, 1.442695
  %v2836 = vpow.pop %v2835
  %v2837 = vmul.f32 %v2668, 1.442695
  %v2838 = vpow.pop %v2837
  %v2839 = vmul.f32 %v2669, 1.442695
  %v2840 = vpow.pop %v2839
  %v2841 = vmul.f32 %v2670, 1.442695
  %v2842 = vpow.pop %v2841
  %v2843 = vmul.f32 %v2671, 1.442695
  %v2844 = vpow.pop %v2843
  %v2845 = vmul.f32 %v2672, 1.442695
  %v2846 = vpow.pop %v2845
  %v2847 = vmul.f32 %v2673, 1.442695
  %v2848 = vpow.pop %v2847
  %v2849 = vmul.f32 %v2674, 1.442695
  %v2850 = vpow.pop %v2849
  %v2851 = vmul.f32 %v2675, 1.442695
  %v2852 = vpow.pop %v2851
  %v2853 = vmul.f32 %v2676, 1.442695
  %v2854 = vpow.pop %v2853
  %v2855 = vmul.f32 %v2677, 1.442695
  %v2856 = vpow.pop %v2855
  %v2857 = vmul.f32 %v2678, 1.442695
  %v2858 = vpow.pop %v2857
  %v2859 = vmul.f32 %v2679, 1.442695
  %v2860 = vpow.pop %v2859
  %v2861 = vmul.f32 %v2680, 1.442695
  %v2862 = vpow.pop %v2861
  %v2863 = vmul.f32 %v2681, 1.442695
  %v2864 = vpow.pop %v2863
  %v2865 = vmul.f32 %v2682, 1.442695
  %v2866 = vpow.pop %v2865
  %v2867 = vmul.f32 %v2683, 1.442695
  %v2868 = vpow.pop %v2867
  %v2869 = vmul.f32 %v2684, 1.442695
  %v2870 = vpow.pop %v2869
  %v2871 = vmul.f32 %v2685, 1.442695
  %v2872 = vpow.pop %v2871
  %v2873 = vmul.f32 %v2686, 1.442695
  %v2874 = vpow.pop %v2873
  %v2875 = vmul.f32 %v2687, 1.442695
  %v2876 = vpow.pop %v2875
  %v2877 = vmul.f32 %v2688, 1.442695
  %v2878 = vpow.pop %v2877
  %v2879 = vmul.f32 %v2689, 1.442695
  %v2880 = vpow.pop %v2879
  %v2881 = vmul.f32 %v2690, 1.442695
  %v2882 = vpow.pop %v2881
  %v2883 = vmul.f32 %v2691, 1.442695
  %v2884 = vpow.pop %v2883
  %v2885 = vmul.f32 %v2692, 1.442695
  %v2886 = vpow.pop %v2885
  %v2887 = vmul.f32 %v2693, 1.442695
  %v2888 = vpow.pop %v2887
  %v2889 = vmul.f32 %v2694, 1.442695
  %v2890 = vpow.pop %v2889
  %v2891 = vmul.f32 %v2695, 1.442695
  %v2892 = vpow.pop %v2891
  %v2893 = vmul.f32 %v2696, 1.442695
  %v2894 = vpow.pop %v2893
  %v2895 = vmul.f32 %v2697, 1.442695
  %v2896 = vpow.pop %v2895
  %v2897 = vmul.f32 %v2698, 1.442695
  %v2898 = vpow.pop %v2897
  %v2899 = vmul.f32 %v2699, 1.442695
  %v2900 = vpow.pop %v2899
  %v2901 = vmul.f32 %v2700, 1.442695
  %v2902 = vpow.pop %v2901
  %v2903 = vmul.f32 %v2701, 1.442695
  %v2904 = vpow.pop %v2903
  %v2905 = vmul.f32 %v2702, 1.442695
  %v2906 = vpow.pop %v2905
  %v2907 = vmul.f32 %v2703, 1.442695
  %v2908 = vpow.pop %v2907
  %v2909 = vmul.f32 %v2704, 1.442695
  %v2910 = vpow.pop %v2909
  %v2911 = vmul.f32 %v2705, 1.442695
  %v2912 = vpow.pop %v2911
  %v2913 = vmul.f32 %v2706, 1.442695
  %v2914 = vpow.pop %v2913
  %v2915 = vmul.f32 %v2707, 1.442695
  %v2916 = vpow.pop %v2915
  %v2917 = vmul.f32 %v2708, 1.442695
  %v2918 = vpow.pop %v2917
  %v2919 = vmul.f32 %v2709, 1.442695
  %v2920 = vpow.pop %v2919
  %v2921 = vmul.f32 %v2710, 1.442695
  %v2922 = vpow.pop %v2921
  %v2923 = vmul.f32 %v2711, 1.442695
  %v2924 = vpow.pop %v2923
  %v2925 = vmul.f32 %v2712, 1.442695
  %v2926 = vpow.pop %v2925
  %v2927 = vmul.f32 %v2713, 1.442695
  %v2928 = vpow.pop %v2927
  %v2929 = vmul.f32 %v2714, 1.442695
  %v2930 = vpow.pop %v2929
  %v2931 = vmul.f32 %v2715, 1.442695
  %v2932 = vpow.pop %v2931
  %v2933 = vmul.f32 %v2716, 1.442695
  %v2934 = vpow.pop %v2933
  %v2935 = vmul.f32 %v2717, 1.442695
  %v2936 = vpow.pop %v2935
  %v2937 = vmul.f32 %v2718, 1.442695
  %v2938 = vpow.pop %v2937
  %v2939 = vmul.f32 %v2719, 1.442695
  %v2940 = vpow.pop %v2939
  %v2941 = vmul.f32 %v2720, 1.442695
  %v2942 = vpow.pop %v2941
  %v2943 = vmul.f32 %v2721, 1.442695
  %v2944 = vpow.pop %v2943
  %v2945 = vmul.f32 %v2722, 1.442695
  %v2946 = vpow.pop %v2945
  %v2947 = vmul.f32 %v2723, 1.442695
  %v2948 = vpow.pop %v2947
  %v2949 = vmul.f32 %v2724, 1.442695
  %v2950 = vpow.pop %v2949
  %v2951 = vmul.f32 %v2725, 1.442695
  %v2952 = vpow.pop %v2951
  %v2953 = vmul.f32 %v2726, 1.442695
  %v2954 = vpow.pop %v2953
  %v2955 = vmul.f32 %v2727, 1.442695
  %v2956 = vpow.pop %v2955
  %v2957 = vmul.f32 %v2728, 1.442695
  %v2958 = vpow.pop %v2957
  %v2959 = vmul.f32 %v2729, 1.442695
  %v2960 = vpow.pop %v2959
  %v2961 = vmul.f32 %v2730, 1.442695
  %v2962 = vpow.pop %v2961
  %v2963 = vmul.f32 %v2731, 1.442695
  %v2964 = vpow.pop %v2963
  %v2965 = vmul.f32 %v2732, 1.442695
  %v2966 = vpow.pop %v2965
  %v2967 = vmul.f32 %v2733, 1.442695
  %v2968 = vpow.pop %v2967
  %v2969 = vmul.f32 %v2734, 1.442695
  %v2970 = vpow.pop %v2969
  %v2971 = vmul.f32 %v2735, 1.442695
  %v2972 = vpow.pop %v2971
  %v2973 = vmul.f32 %v2736, 1.442695
  %v2974 = vpow.pop %v2973
  %v2975 = vmul.f32 %v2737, 1.442695
  %v2976 = vpow.pop %v2975
  %v2977 = vmul.f32 %v2738, 1.442695
  %v2978 = vpow.pop %v2977
  %v2979 = vmul.f32 %v2739, 1.442695
  %v2980 = vpow.pop %v2979
  %v2981 = vmul.f32 %v2740, 1.442695
  %v2982 = vpow.pop %v2981
  %v2983 = vmul.f32 %v2741, 1.442695
  %v2984 = vpow.pop %v2983
  %v2985 = vmul.f32 %v2742, 1.442695
  %v2986 = vpow.pop %v2985
  %v2987 = vmul.f32 %v2743, 1.442695
  %v2988 = vpow.pop %v2987
  %v2989 = vmul.f32 %v2744, 1.442695
  %v2990 = vpow.pop %v2989
  %v2991 = vmul.f32 %v2745, 1.442695
  %v2992 = vpow.pop %v2991
  %v2993 = vmul.f32 %v2746, 1.442695
  %v2994 = vpow.pop %v2993
  %v2995 = vmul.f32 %v2747, 1.442695
  %v2996 = vpow.pop %v2995
  %v2997 = vmul.f32 %v2748, 1.442695
  %v2998 = vpow.pop %v2997
  %v2999 = vmul.f32 %v2749, 1.442695
  %v3000 = vpow.pop %v2999
  %v3001 = vmul.f32 %v2750, 1.442695
  %v3002 = vpow.pop %v3001
  %v3003 = vmul.f32 %v2751, 1.442695
  %v3004 = vpow.pop %v3003
  %v3005 = vmul.f32 %v2752, 1.442695
  %v3006 = vpow.pop %v3005
  %v3007 = vmul.f32 %v2753, 1.442695
  %v3008 = vpow.pop %v3007
  %v3009 = vmul.f32 %v2754, 1.442695
  %v3010 = vpow.pop %v3009
  %3011 = vadd.xlane.f32.xlu0 %v2756
  %v3012 = vpop.xlane.xlu0 %3011
  %3013 = vadd.xlane.f32.xlu0 %v2758
  %v3014 = vpop.xlane.xlu0 %3013
  %3015 = vadd.xlane.f32.xlu0 %v2760
  %v3016 = vpop.xlane.xlu0 %3015
  %3017 = vadd.xlane.f32.xlu0 %v2762
  %v3018 = vpop.xlane.xlu0 %3017
  %3019 = vadd.xlane.f32.xlu0 %v2764
  %v3020 = vpop.xlane.xlu0 %3019
  %3021 = vadd.xlane.f32.xlu0 %v2766
  %v3022 = vpop.xlane.xlu0 %3021
  %3023 = vadd.xlane.f32.xlu0 %v2768
  %v3024 = vpop.xlane.xlu0 %3023
  %3025 = vadd.xlane.f32.xlu0 %v2770
  %v3026 = vpop.xlane.xlu0 %3025
  %3027 = vadd.xlane.f32.xlu0 %v2772
  %v3028 = vpop.xlane.xlu0 %3027
  %3029 = vadd.xlane.f32.xlu0 %v2774
  %v3030 = vpop.xlane.xlu0 %3029
  %3031 = vadd.xlane.f32.xlu0 %v2776
  %v3032 = vpop.xlane.xlu0 %3031
  %3033 = vadd.xlane.f32.xlu0 %v2778
  %v3034 = vpop.xlane.xlu0 %3033
  %3035 = vadd.xlane.f32.xlu0 %v2780
  %v3036 = vpop.xlane.xlu0 %3035
  %3037 = vadd.xlane.f32.xlu0 %v2782
  %v3038 = vpop.xlane.xlu0 %3037
  %3039 = vadd.xlane.f32.xlu0 %v2784
  %v3040 = vpop.xlane.xlu0 %3039
  %3041 = vadd.xlane.f32.xlu0 %v2786
  %v3042 = vpop.xlane.xlu0 %3041
  %3043 = vadd.xlane.f32.xlu0 %v2788
  %v3044 = vpop.xlane.xlu0 %3043
  %3045 = vadd.xlane.f32.xlu0 %v2790
  %v3046 = vpop.xlane.xlu0 %3045
  %3047 = vadd.xlane.f32.xlu0 %v2792
  %v3048 = vpop.xlane.xlu0 %3047
  %3049 = vadd.xlane.f32.xlu0 %v2794
  %v3050 = vpop.xlane.xlu0 %3049
  %3051 = vadd.xlane.f32.xlu0 %v2796
  %v3052 = vpop.xlane.xlu0 %3051
  %3053 = vadd.xlane.f32.xlu0 %v2798
  %v3054 = vpop.xlane.xlu0 %3053
  %3055 = vadd.xlane.f32.xlu0 %v2800
  %v3056 = vpop.xlane.xlu0 %3055
  %3057 = vadd.xlane.f32.xlu0 %v2802
  %v3058 = vpop.xlane.xlu0 %3057
  %3059 = vadd.xlane.f32.xlu0 %v2804
  %v3060 = vpop.xlane.xlu0 %3059
  %3061 = vadd.xlane.f32.xlu0 %v2806
  %v3062 = vpop.xlane.xlu0 %3061
  %3063 = vadd.xlane.f32.xlu0 %v2808
  %v3064 = vpop.xlane.xlu0 %3063
  %3065 = vadd.xlane.f32.xlu0 %v2810
  %v3066 = vpop.xlane.xlu0 %3065
  %3067 = vadd.xlane.f32.xlu0 %v2812
  %v3068 = vpop.xlane.xlu0 %3067
  %3069 = vadd.xlane.f32.xlu0 %v2814
  %v3070 = vpop.xlane.xlu0 %3069
  %3071 = vadd.xlane.f32.xlu0 %v2816
  %v3072 = vpop.xlane.xlu0 %3071
  %3073 = vadd.xlane.f32.xlu0 %v2818
  %v3074 = vpop.xlane.xlu0 %3073
  %3075 = vadd.xlane.f32.xlu0 %v2820
  %v3076 = vpop.xlane.xlu0 %3075
  %3077 = vadd.xlane.f32.xlu0 %v2822
  %v3078 = vpop.xlane.xlu0 %3077
  %3079 = vadd.xlane.f32.xlu0 %v2824
  %v3080 = vpop.xlane.xlu0 %3079
  %3081 = vadd.xlane.f32.xlu0 %v2826
  %v3082 = vpop.xlane.xlu0 %3081
  %3083 = vadd.xlane.f32.xlu0 %v2828
  %v3084 = vpop.xlane.xlu0 %3083
  %3085 = vadd.xlane.f32.xlu0 %v2830
  %v3086 = vpop.xlane.xlu0 %3085
  %3087 = vadd.xlane.f32.xlu0 %v2832
  %v3088 = vpop.xlane.xlu0 %3087
  %3089 = vadd.xlane.f32.xlu0 %v2834
  %v3090 = vpop.xlane.xlu0 %3089
  %3091 = vadd.xlane.f32.xlu0 %v2836
  %v3092 = vpop.xlane.xlu0 %3091
  %3093 = vadd.xlane.f32.xlu0 %v2838
  %v3094 = vpop.xlane.xlu0 %3093
  %3095 = vadd.xlane.f32.xlu0 %v2840
  %v3096 = vpop.xlane.xlu0 %3095
  %3097 = vadd.xlane.f32.xlu0 %v2842
  %v3098 = vpop.xlane.xlu0 %3097
  %3099 = vadd.xlane.f32.xlu0 %v2844
  %v3100 = vpop.xlane.xlu0 %3099
  %3101 = vadd.xlane.f32.xlu0 %v2846
  %v3102 = vpop.xlane.xlu0 %3101
  %3103 = vadd.xlane.f32.xlu0 %v2848
  %v3104 = vpop.xlane.xlu0 %3103
  %3105 = vadd.xlane.f32.xlu0 %v2850
  %v3106 = vpop.xlane.xlu0 %3105
  %3107 = vadd.xlane.f32.xlu0 %v2852
  %v3108 = vpop.xlane.xlu0 %3107
  %3109 = vadd.xlane.f32.xlu0 %v2854
  %v3110 = vpop.xlane.xlu0 %3109
  %3111 = vadd.xlane.f32.xlu0 %v2856
  %v3112 = vpop.xlane.xlu0 %3111
  %3113 = vadd.xlane.f32.xlu0 %v2858
  %v3114 = vpop.xlane.xlu0 %3113
  %3115 = vadd.xlane.f32.xlu0 %v2860
  %v3116 = vpop.xlane.xlu0 %3115
  %3117 = vadd.xlane.f32.xlu0 %v2862
  %v3118 = vpop.xlane.xlu0 %3117
  %3119 = vadd.xlane.f32.xlu0 %v2864
  %v3120 = vpop.xlane.xlu0 %3119
  %3121 = vadd.xlane.f32.xlu0 %v2866
  %v3122 = vpop.xlane.xlu0 %3121
  %3123 = vadd.xlane.f32.xlu0 %v2868
  %v3124 = vpop.xlane.xlu0 %3123
  %3125 = vadd.xlane.f32.xlu0 %v2870
  %v3126 = vpop.xlane.xlu0 %3125
  %3127 = vadd.xlane.f32.xlu0 %v2872
  %v3128 = vpop.xlane.xlu0 %3127
  %3129 = vadd.xlane.f32.xlu0 %v2874
  %v3130 = vpop.xlane.xlu0 %3129
  %3131 = vadd.xlane.f32.xlu0 %v2876
  %v3132 = vpop.xlane.xlu0 %3131
  %3133 = vadd.xlane.f32.xlu0 %v2878
  %v3134 = vpop.xlane.xlu0 %3133
  %3135 = vadd.xlane.f32.xlu0 %v2880
  %v3136 = vpop.xlane.xlu0 %3135
  %3137 = vadd.xlane.f32.xlu0 %v2882
  %v3138 = vpop.xlane.xlu0 %3137
  %3139 = vadd.xlane.f32.xlu0 %v2884
  %v3140 = vpop.xlane.xlu0 %3139
  %3141 = vadd.xlane.f32.xlu0 %v2886
  %v3142 = vpop.xlane.xlu0 %3141
  %3143 = vadd.xlane.f32.xlu0 %v2888
  %v3144 = vpop.xlane.xlu0 %3143
  %3145 = vadd.xlane.f32.xlu0 %v2890
  %v3146 = vpop.xlane.xlu0 %3145
  %3147 = vadd.xlane.f32.xlu0 %v2892
  %v3148 = vpop.xlane.xlu0 %3147
  %3149 = vadd.xlane.f32.xlu0 %v2894
  %v3150 = vpop.xlane.xlu0 %3149
  %3151 = vadd.xlane.f32.xlu0 %v2896
  %v3152 = vpop.xlane.xlu0 %3151
  %3153 = vadd.xlane.f32.xlu0 %v2898
  %v3154 = vpop.xlane.xlu0 %3153
  %3155 = vadd.xlane.f32.xlu0 %v2900
  %v3156 = vpop.xlane.xlu0 %3155
  %3157 = vadd.xlane.f32.xlu0 %v2902
  %v3158 = vpop.xlane.xlu0 %3157
  %3159 = vadd.xlane.f32.xlu0 %v2904
  %v3160 = vpop.xlane.xlu0 %3159
  %3161 = vadd.xlane.f32.xlu0 %v2906
  %v3162 = vpop.xlane.xlu0 %3161
  %3163 = vadd.xlane.f32.xlu0 %v2908
  %v3164 = vpop.xlane.xlu0 %3163
  %3165 = vadd.xlane.f32.xlu0 %v2910
  %v3166 = vpop.xlane.xlu0 %3165
  %3167 = vadd.xlane.f32.xlu0 %v2912
  %v3168 = vpop.xlane.xlu0 %3167
  %3169 = vadd.xlane.f32.xlu0 %v2914
  %v3170 = vpop.xlane.xlu0 %3169
  %3171 = vadd.xlane.f32.xlu0 %v2916
  %v3172 = vpop.xlane.xlu0 %3171
  %3173 = vadd.xlane.f32.xlu0 %v2918
  %v3174 = vpop.xlane.xlu0 %3173
  %3175 = vadd.xlane.f32.xlu0 %v2920
  %v3176 = vpop.xlane.xlu0 %3175
  %3177 = vadd.xlane.f32.xlu0 %v2922
  %v3178 = vpop.xlane.xlu0 %3177
  %3179 = vadd.xlane.f32.xlu0 %v2924
  %v3180 = vpop.xlane.xlu0 %3179
  %3181 = vadd.xlane.f32.xlu0 %v2926
  %v3182 = vpop.xlane.xlu0 %3181
  %3183 = vadd.xlane.f32.xlu0 %v2928
  %v3184 = vpop.xlane.xlu0 %3183
  %3185 = vadd.xlane.f32.xlu0 %v2930
  %v3186 = vpop.xlane.xlu0 %3185
  %3187 = vadd.xlane.f32.xlu0 %v2932
  %v3188 = vpop.xlane.xlu0 %3187
  %3189 = vadd.xlane.f32.xlu0 %v2934
  %v3190 = vpop.xlane.xlu0 %3189
  %3191 = vadd.xlane.f32.xlu0 %v2936
  %v3192 = vpop.xlane.xlu0 %3191
  %3193 = vadd.xlane.f32.xlu0 %v2938
  %v3194 = vpop.xlane.xlu0 %3193
  %3195 = vadd.xlane.f32.xlu0 %v2940
  %v3196 = vpop.xlane.xlu0 %3195
  %3197 = vadd.xlane.f32.xlu0 %v2942
  %v3198 = vpop.xlane.xlu0 %3197
  %3199 = vadd.xlane.f32.xlu0 %v2944
  %v3200 = vpop.xlane.xlu0 %3199
  %3201 = vadd.xlane.f32.xlu0 %v2946
  %v3202 = vpop.xlane.xlu0 %3201
  %3203 = vadd.xlane.f32.xlu0 %v2948
  %v3204 = vpop.xlane.xlu0 %3203
  %3205 = vadd.xlane.f32.xlu0 %v2950
  %v3206 = vpop.xlane.xlu0 %3205
  %3207 = vadd.xlane.f32.xlu0 %v2952
  %v3208 = vpop.xlane.xlu0 %3207
  %3209 = vadd.xlane.f32.xlu0 %v2954
  %v3210 = vpop.xlane.xlu0 %3209
  %3211 = vadd.xlane.f32.xlu0 %v2956
  %v3212 = vpop.xlane.xlu0 %3211
  %3213 = vadd.xlane.f32.xlu0 %v2958
  %v3214 = vpop.xlane.xlu0 %3213
  %3215 = vadd.xlane.f32.xlu0 %v2960
  %v3216 = vpop.xlane.xlu0 %3215
  %3217 = vadd.xlane.f32.xlu0 %v2962
  %v3218 = vpop.xlane.xlu0 %3217
  %3219 = vadd.xlane.f32.xlu0 %v2964
  %v3220 = vpop.xlane.xlu0 %3219
  %3221 = vadd.xlane.f32.xlu0 %v2966
  %v3222 = vpop.xlane.xlu0 %3221
  %3223 = vadd.xlane.f32.xlu0 %v2968
  %v3224 = vpop.xlane.xlu0 %3223
  %3225 = vadd.xlane.f32.xlu0 %v2970
  %v3226 = vpop.xlane.xlu0 %3225
  %3227 = vadd.xlane.f32.xlu0 %v2972
  %v3228 = vpop.xlane.xlu0 %3227
  %3229 = vadd.xlane.f32.xlu0 %v2974
  %v3230 = vpop.xlane.xlu0 %3229
  %3231 = vadd.xlane.f32.xlu0 %v2976
  %v3232 = vpop.xlane.xlu0 %3231
  %3233 = vadd.xlane.f32.xlu0 %v2978
  %v3234 = vpop.xlane.xlu0 %3233
  %3235 = vadd.xlane.f32.xlu0 %v2980
  %v3236 = vpop.xlane.xlu0 %3235
  %3237 = vadd.xlane.f32.xlu0 %v2982
  %v3238 = vpop.xlane.xlu0 %3237
  %3239 = vadd.xlane.f32.xlu0 %v2984
  %v3240 = vpop.xlane.xlu0 %3239
  %3241 = vadd.xlane.f32.xlu0 %v2986
  %v3242 = vpop.xlane.xlu0 %3241
  %3243 = vadd.xlane.f32.xlu0 %v2988
  %v3244 = vpop.xlane.xlu0 %3243
  %3245 = vadd.xlane.f32.xlu0 %v2990
  %v3246 = vpop.xlane.xlu0 %3245
  %3247 = vadd.xlane.f32.xlu0 %v2992
  %v3248 = vpop.xlane.xlu0 %3247
  %3249 = vadd.xlane.f32.xlu0 %v2994
  %v3250 = vpop.xlane.xlu0 %3249
  %3251 = vadd.xlane.f32.xlu0 %v2996
  %v3252 = vpop.xlane.xlu0 %3251
  %3253 = vadd.xlane.f32.xlu0 %v2998
  %v3254 = vpop.xlane.xlu0 %3253
  %3255 = vadd.xlane.f32.xlu0 %v3000
  %v3256 = vpop.xlane.xlu0 %3255
  %3257 = vadd.xlane.f32.xlu0 %v3002
  %v3258 = vpop.xlane.xlu0 %3257
  %3259 = vadd.xlane.f32.xlu0 %v3004
  %v3260 = vpop.xlane.xlu0 %3259
  %3261 = vadd.xlane.f32.xlu0 %v3006
  %v3262 = vpop.xlane.xlu0 %3261
  %3263 = vadd.xlane.f32.xlu0 %v3008
  %v3264 = vpop.xlane.xlu0 %3263
  %3265 = vadd.xlane.f32.xlu0 %v3010
  %v3266 = vpop.xlane.xlu0 %3265
  %v3267 = vrcp.pop %v3012
  %v3268 = vrcp.pop %v3014
  %v3269 = vrcp.pop %v3016
  %v3270 = vrcp.pop %v3018
  %v3271 = vrcp.pop %v3020
  %v3272 = vrcp.pop %v3022
  %v3273 = vrcp.pop %v3024
  %v3274 = vrcp.pop %v3026
  %v3275 = vrcp.pop %v3028
  %v3276 = vrcp.pop %v3030
  %v3277 = vrcp.pop %v3032
  %v3278 = vrcp.pop %v3034
  %v3279 = vrcp.pop %v3036
  %v3280 = vrcp.pop %v3038
  %v3281 = vrcp.pop %v3040
  %v3282 = vrcp.pop %v3042
  %v3283 = vrcp.pop %v3044
  %v3284 = vrcp.pop %v3046
  %v3285 = vrcp.pop %v3048
  %v3286 = vrcp.pop %v3050
  %v3287 = vrcp.pop %v3052
  %v3288 = vrcp.pop %v3054
  %v3289 = vrcp.pop %v3056
  %v3290 = vrcp.pop %v3058
  %v3291 = vrcp.pop %v3060
  %v3292 = vrcp.pop %v3062
  %v3293 = vrcp.pop %v3064
  %v3294 = vrcp.pop %v3066
  %v3295 = vrcp.pop %v3068
  %v3296 = vrcp.pop %v3070
  %v3297 = vrcp.pop %v3072
  %v3298 = vrcp.pop %v3074
  %v3299 = vrcp.pop %v3076
  %v3300 = vrcp.pop %v3078
  %v3301 = vrcp.pop %v3080
  %v3302 = vrcp.pop %v3082
  %v3303 = vrcp.pop %v3084
  %v3304 = vrcp.pop %v3086
  %v3305 = vrcp.pop %v3088
  %v3306 = vrcp.pop %v3090
  %v3307 = vrcp.pop %v3092
  %v3308 = vrcp.pop %v3094
  %v3309 = vrcp.pop %v3096
  %v3310 = vrcp.pop %v3098
  %v3311 = vrcp.pop %v3100
  %v3312 = vrcp.pop %v3102
  %v3313 = vrcp.pop %v3104
  %v3314 = vrcp.pop %v3106
  %v3315 = vrcp.pop %v3108
  %v3316 = vrcp.pop %v3110
  %v3317 = vrcp.pop %v3112
  %v3318 = vrcp.pop %v3114
  %v3319 = vrcp.pop %v3116
  %v3320 = vrcp.pop %v3118
  %v3321 = vrcp.pop %v3120
  %v3322 = vrcp.pop %v3122
  %v3323 = vrcp.pop %v3124
  %v3324 = vrcp.pop %v3126
  %v3325 = vrcp.pop %v3128
  %v3326 = vrcp.pop %v3130
  %v3327 = vrcp.pop %v3132
  %v3328 = vrcp.pop %v3134
  %v3329 = vrcp.pop %v3136
  %v3330 = vrcp.pop %v3138
  %v3331 = vrcp.pop %v3140
  %v3332 = vrcp.pop %v3142
  %v3333 = vrcp.pop %v3144
  %v3334 = vrcp.pop %v3146
  %v3335 = vrcp.pop %v3148
  %v3336 = vrcp.pop %v3150
  %v3337 = vrcp.pop %v3152
  %v3338 = vrcp.pop %v3154
  %v3339 = vrcp.pop %v3156
  %v3340 = vrcp.pop %v3158
  %v3341 = vrcp.pop %v3160
  %v3342 = vrcp.pop %v3162
  %v3343 = vrcp.pop %v3164
  %v3344 = vrcp.pop %v3166
  %v3345 = vrcp.pop %v3168
  %v3346 = vrcp.pop %v3170
  %v3347 = vrcp.pop %v3172
  %v3348 = vrcp.pop %v3174
  %v3349 = vrcp.pop %v3176
  %v3350 = vrcp.pop %v3178
  %v3351 = vrcp.pop %v3180
  %v3352 = vrcp.pop %v3182
  %v3353 = vrcp.pop %v3184
  %v3354 = vrcp.pop %v3186
  %v3355 = vrcp.pop %v3188
  %v3356 = vrcp.pop %v3190
  %v3357 = vrcp.pop %v3192
  %v3358 = vrcp.pop %v3194
  %v3359 = vrcp.pop %v3196
  %v3360 = vrcp.pop %v3198
  %v3361 = vrcp.pop %v3200
  %v3362 = vrcp.pop %v3202
  %v3363 = vrcp.pop %v3204
  %v3364 = vrcp.pop %v3206
  %v3365 = vrcp.pop %v3208
  %v3366 = vrcp.pop %v3210
  %v3367 = vrcp.pop %v3212
  %v3368 = vrcp.pop %v3214
  %v3369 = vrcp.pop %v3216
  %v3370 = vrcp.pop %v3218
  %v3371 = vrcp.pop %v3220
  %v3372 = vrcp.pop %v3222
  %v3373 = vrcp.pop %v3224
  %v3374 = vrcp.pop %v3226
  %v3375 = vrcp.pop %v3228
  %v3376 = vrcp.pop %v3230
  %v3377 = vrcp.pop %v3232
  %v3378 = vrcp.pop %v3234
  %v3379 = vrcp.pop %v3236
  %v3380 = vrcp.pop %v3238
  %v3381 = vrcp.pop %v3240
  %v3382 = vrcp.pop %v3242
  %v3383 = vrcp.pop %v3244
  %v3384 = vrcp.pop %v3246
  %v3385 = vrcp.pop %v3248
  %v3386 = vrcp.pop %v3250
  %v3387 = vrcp.pop %v3252
  %v3388 = vrcp.pop %v3254
  %v3389 = vrcp.pop %v3256
  %v3390 = vrcp.pop %v3258
  %v3391 = vrcp.pop %v3260
  %v3392 = vrcp.pop %v3262
  %v3393 = vrcp.pop %v3264
  %v3394 = vrcp.pop %v3266
  %v3395 = vmul.f32 %v2756, %v3267
  %v3396 = vmul.f32 %v2758, %v3268
  %v3397 = vmul.f32 %v2760, %v3269
  %v3398 = vmul.f32 %v2762, %v3270
  %v3399 = vmul.f32 %v2764, %v3271
  %v3400 = vmul.f32 %v2766, %v3272
  %v3401 = vmul.f32 %v2768, %v3273
  %v3402 = vmul.f32 %v2770, %v3274
  %v3403 = vmul.f32 %v2772, %v3275
  %v3404 = vmul.f32 %v2774, %v3276
  %v3405 = vmul.f32 %v2776, %v3277
  %v3406 = vmul.f32 %v2778, %v3278
  %v3407 = vmul.f32 %v2780, %v3279
  %v3408 = vmul.f32 %v2782, %v3280
  %v3409 = vmul.f32 %v2784, %v3281
  %v3410 = vmul.f32 %v2786, %v3282
  %v3411 = vmul.f32 %v2788, %v3283
  %v3412 = vmul.f32 %v2790, %v3284
  %v3413 = vmul.f32 %v2792, %v3285
  %v3414 = vmul.f32 %v2794, %v3286
  %v3415 = vmul.f32 %v2796, %v3287
  %v3416 = vmul.f32 %v2798, %v3288
  %v3417 = vmul.f32 %v2800, %v3289
  %v3418 = vmul.f32 %v2802, %v3290
  %v3419 = vmul.f32 %v2804, %v3291
  %v3420 = vmul.f32 %v2806, %v3292
  %v3421 = vmul.f32 %v2808, %v3293
  %v3422 = vmul.f32 %v2810, %v3294
  %v3423 = vmul.f32 %v2812, %v3295
  %v3424 = vmul.f32 %v2814, %v3296
  %v3425 = vmul.f32 %v2816, %v3297
  %v3426 = vmul.f32 %v2818, %v3298
  %v3427 = vmul.f32 %v2820, %v3299
  %v3428 = vmul.f32 %v2822, %v3300
  %v3429 = vmul.f32 %v2824, %v3301
  %v3430 = vmul.f32 %v2826, %v3302
  %v3431 = vmul.f32 %v2828, %v3303
  %v3432 = vmul.f32 %v2830, %v3304
  %v3433 = vmul.f32 %v2832, %v3305
  %v3434 = vmul.f32 %v2834, %v3306
  %v3435 = vmul.f32 %v2836, %v3307
  %v3436 = vmul.f32 %v2838, %v3308
  %v3437 = vmul.f32 %v2840, %v3309
  %v3438 = vmul.f32 %v2842, %v3310
  %v3439 = vmul.f32 %v2844, %v3311
  %v3440 = vmul.f32 %v2846, %v3312
  %v3441 = vmul.f32 %v2848, %v3313
  %v3442 = vmul.f32 %v2850, %v3314
  %v3443 = vmul.f32 %v2852, %v3315
  %v3444 = vmul.f32 %v2854, %v3316
  %v3445 = vmul.f32 %v2856, %v3317
  %v3446 = vmul.f32 %v2858, %v3318
  %v3447 = vmul.f32 %v2860, %v3319
  %v3448 = vmul.f32 %v2862, %v3320
  %v3449 = vmul.f32 %v2864, %v3321
  %v3450 = vmul.f32 %v2866, %v3322
  %v3451 = vmul.f32 %v2868, %v3323
  %v3452 = vmul.f32 %v2870, %v3324
  %v3453 = vmul.f32 %v2872, %v3325
  %v3454 = vmul.f32 %v2874, %v3326
  %v3455 = vmul.f32 %v2876, %v3327
  %v3456 = vmul.f32 %v2878, %v3328
  %v3457 = vmul.f32 %v2880, %v3329
  %v3458 = vmul.f32 %v2882, %v3330
  %v3459 = vmul.f32 %v2884, %v3331
  %v3460 = vmul.f32 %v2886, %v3332
  %v3461 = vmul.f32 %v2888, %v3333
  %v3462 = vmul.f32 %v2890, %v3334
  %v3463 = vmul.f32 %v2892, %v3335
  %v3464 = vmul.f32 %v2894, %v3336
  %v3465 = vmul.f32 %v2896, %v3337
  %v3466 = vmul.f32 %v2898, %v3338
  %v3467 = vmul.f32 %v2900, %v3339
  %v3468 = vmul.f32 %v2902, %v3340
  %v3469 = vmul.f32 %v2904, %v3341
  %v3470 = vmul.f32 %v2906, %v3342
  %v3471 = vmul.f32 %v2908, %v3343
  %v3472 = vmul.f32 %v2910, %v3344
  %v3473 = vmul.f32 %v2912, %v3345
  %v3474 = vmul.f32 %v2914, %v3346
  %v3475 = vmul.f32 %v2916, %v3347
  %v3476 = vmul.f32 %v2918, %v3348
  %v3477 = vmul.f32 %v2920, %v3349
  %v3478 = vmul.f32 %v2922, %v3350
  %v3479 = vmul.f32 %v2924, %v3351
  %v3480 = vmul.f32 %v2926, %v3352
  %v3481 = vmul.f32 %v2928, %v3353
  %v3482 = vmul.f32 %v2930, %v3354
  %v3483 = vmul.f32 %v2932, %v3355
  %v3484 = vmul.f32 %v2934, %v3356
  %v3485 = vmul.f32 %v2936, %v3357
  %v3486 = vmul.f32 %v2938, %v3358
  %v3487 = vmul.f32 %v2940, %v3359
  %v3488 = vmul.f32 %v2942, %v3360
  %v3489 = vmul.f32 %v2944, %v3361
  %v3490 = vmul.f32 %v2946, %v3362
  %v3491 = vmul.f32 %v2948, %v3363
  %v3492 = vmul.f32 %v2950, %v3364
  %v3493 = vmul.f32 %v2952, %v3365
  %v3494 = vmul.f32 %v2954, %v3366
  %v3495 = vmul.f32 %v2956, %v3367
  %v3496 = vmul.f32 %v2958, %v3368
  %v3497 = vmul.f32 %v2960, %v3369
  %v3498 = vmul.f32 %v2962, %v3370
  %v3499 = vmul.f32 %v2964, %v3371
  %v3500 = vmul.f32 %v2966, %v3372
  %v3501 = vmul.f32 %v2968, %v3373
  %v3502 = vmul.f32 %v2970, %v3374
  %v3503 = vmul.f32 %v2972, %v3375
  %v3504 = vmul.f32 %v2974, %v3376
  %v3505 = vmul.f32 %v2976, %v3377
  %v3506 = vmul.f32 %v2978, %v3378
  %v3507 = vmul.f32 %v2980, %v3379
  %v3508 = vmul.f32 %v2982, %v3380
  %v3509 = vmul.f32 %v2984, %v3381
  %v3510 = vmul.f32 %v2986, %v3382
  %v3511 = vmul.f32 %v2988, %v3383
  %v3512 = vmul.f32 %v2990, %v3384
  %v3513 = vmul.f32 %v2992, %v3385
  %v3514 = vmul.f32 %v2994, %v3386
  %v3515 = vmul.f32 %v2996, %v3387
  %v3516 = vmul.f32 %v2998, %v3388
  %v3517 = vmul.f32 %v3000, %v3389
  %v3518 = vmul.f32 %v3002, %v3390
  %v3519 = vmul.f32 %v3004, %v3391
  %v3520 = vmul.f32 %v3006, %v3392
  %v3521 = vmul.f32 %v3008, %v3393
  %v3522 = vmul.f32 %v3010, %v3394
  %v3523 = vpack.c.bf16 %v3396, %v3395
  %v3524 = vpack.c.bf16 %v3398, %v3397
  %v3525 = vpack.c.bf16 %v3400, %v3399
  %v3526 = vpack.c.bf16 %v3402, %v3401
  %v3527 = vpack.c.bf16 %v3404, %v3403
  %v3528 = vpack.c.bf16 %v3406, %v3405
  %v3529 = vpack.c.bf16 %v3408, %v3407
  %v3530 = vpack.c.bf16 %v3410, %v3409
  %v3531 = vpack.c.bf16 %v3412, %v3411
  %v3532 = vpack.c.bf16 %v3414, %v3413
  %v3533 = vpack.c.bf16 %v3416, %v3415
  %v3534 = vpack.c.bf16 %v3418, %v3417
  %v3535 = vpack.c.bf16 %v3420, %v3419
  %v3536 = vpack.c.bf16 %v3422, %v3421
  %v3537 = vpack.c.bf16 %v3424, %v3423
  %v3538 = vpack.c.bf16 %v3426, %v3425
  %v3539 = vpack.c.bf16 %v3428, %v3427
  %v3540 = vpack.c.bf16 %v3430, %v3429
  %v3541 = vpack.c.bf16 %v3432, %v3431
  %v3542 = vpack.c.bf16 %v3434, %v3433
  %v3543 = vpack.c.bf16 %v3436, %v3435
  %v3544 = vpack.c.bf16 %v3438, %v3437
  %v3545 = vpack.c.bf16 %v3440, %v3439
  %v3546 = vpack.c.bf16 %v3442, %v3441
  %v3547 = vpack.c.bf16 %v3444, %v3443
  %v3548 = vpack.c.bf16 %v3446, %v3445
  %v3549 = vpack.c.bf16 %v3448, %v3447
  %v3550 = vpack.c.bf16 %v3450, %v3449
  %v3551 = vpack.c.bf16 %v3452, %v3451
  %v3552 = vpack.c.bf16 %v3454, %v3453
  %v3553 = vpack.c.bf16 %v3456, %v3455
  %v3554 = vpack.c.bf16 %v3458, %v3457
  %v3555 = vpack.c.bf16 %v3460, %v3459
  %v3556 = vpack.c.bf16 %v3462, %v3461
  %v3557 = vpack.c.bf16 %v3464, %v3463
  %v3558 = vpack.c.bf16 %v3466, %v3465
  %v3559 = vpack.c.bf16 %v3468, %v3467
  %v3560 = vpack.c.bf16 %v3470, %v3469
  %v3561 = vpack.c.bf16 %v3472, %v3471
  %v3562 = vpack.c.bf16 %v3474, %v3473
  %v3563 = vpack.c.bf16 %v3476, %v3475
  %v3564 = vpack.c.bf16 %v3478, %v3477
  %v3565 = vpack.c.bf16 %v3480, %v3479
  %v3566 = vpack.c.bf16 %v3482, %v3481
  %v3567 = vpack.c.bf16 %v3484, %v3483
  %v3568 = vpack.c.bf16 %v3486, %v3485
  %v3569 = vpack.c.bf16 %v3488, %v3487
  %v3570 = vpack.c.bf16 %v3490, %v3489
  %v3571 = vpack.c.bf16 %v3492, %v3491
  %v3572 = vpack.c.bf16 %v3494, %v3493
  %v3573 = vpack.c.bf16 %v3496, %v3495
  %v3574 = vpack.c.bf16 %v3498, %v3497
  %v3575 = vpack.c.bf16 %v3500, %v3499
  %v3576 = vpack.c.bf16 %v3502, %v3501
  %v3577 = vpack.c.bf16 %v3504, %v3503
  %v3578 = vpack.c.bf16 %v3506, %v3505
  %v3579 = vpack.c.bf16 %v3508, %v3507
  %v3580 = vpack.c.bf16 %v3510, %v3509
  %v3581 = vpack.c.bf16 %v3512, %v3511
  %v3582 = vpack.c.bf16 %v3514, %v3513
  %v3583 = vpack.c.bf16 %v3516, %v3515
  %v3584 = vpack.c.bf16 %v3518, %v3517
  %v3585 = vpack.c.bf16 %v3520, %v3519
  %v3586 = vpack.c.bf16 %v3522, %v3521
  %3587 = vrot.lane.b32.xlu0 %v954, 64
  %v3588 = vpop.permute.xlu0 %3587
  %3589 = vrot.lane.b32.xlu0 %v955, 64
  %v3590 = vpop.permute.xlu0 %3589
  %3591 = vrot.lane.b32.xlu0 %v956, 64
  %v3592 = vpop.permute.xlu0 %3591
  %3593 = vrot.lane.b32.xlu0 %v957, 64
  %v3594 = vpop.permute.xlu0 %3593
  %3595 = vrot.lane.b32.xlu0 %v958, 64
  %v3596 = vpop.permute.xlu0 %3595
  %3597 = vrot.lane.b32.xlu0 %v959, 64
  %v3598 = vpop.permute.xlu0 %3597
  %3599 = vrot.lane.b32.xlu0 %v960, 64
  %v3600 = vpop.permute.xlu0 %3599
  %3601 = vrot.lane.b32.xlu0 %v961, 64
  %v3602 = vpop.permute.xlu0 %3601
  %3611 = vmatprep.subr.bf16.mxu0 0
  %3612 = vmatpush1.bf16.msra.mxu0 %v3588
  %3613 = vmatprep.subr.bf16.mxu0 0
  %3614 = vmatpush1.bf16.msra.mxu0 %v3590
  %3615 = vmatprep.subr.bf16.mxu0 0
  %3616 = vmatpush1.bf16.msra.mxu0 %v3592
  %3617 = vmatprep.subr.bf16.mxu0 0
  %3618 = vmatpush1.bf16.msra.mxu0 %v3594
  %3619 = vmatprep.subr.bf16.mxu0 0
  %3620 = vmatpush1.bf16.msra.mxu0 %v3596
  %3621 = vmatprep.subr.bf16.mxu0 0
  %3622 = vmatpush1.bf16.msra.mxu0 %v3598
  %3623 = vmatprep.subr.bf16.mxu0 0
  %3624 = vmatpush1.bf16.msra.mxu0 %v3600
  %3625 = vmatprep.subr.bf16.mxu0 0
  %3626 = vmatpush1.bf16.msra.mxu0 %v3602
  %3627 = vmatprep.subr.bf16.mxu0 0
  %3628 = vmatpush1.bf16.msra.mxu0 0
  %3629 = vmatprep.subr.bf16.mxu0 0
  %3630 = vmatpush1.bf16.msra.mxu0 0
  %3631 = vmatprep.subr.bf16.mxu0 0
  %3632 = vmatpush1.bf16.msra.mxu0 0
  %3633 = vmatprep.subr.bf16.mxu0 0
  %3634 = vmatpush1.bf16.msra.mxu0 0
  %3635 = vmatprep.subr.bf16.mxu0 0
  %3636 = vmatpush1.bf16.msra.mxu0 0
  %3637 = vmatprep.subr.bf16.mxu0 0
  %3638 = vmatpush1.bf16.msra.mxu0 0
  %3639 = vmatprep.subr.bf16.mxu0 0
  %3640 = vmatpush1.bf16.msra.mxu0 0
  %3641 = vmatprep.subr.bf16.mxu0 0
  %3642 = vmatpush1.bf16.msra.mxu0 0
  %3643 = vmatprep.mubr.bf16.mxu0 0
  %3644 = vmatmul.mubr.bf16.gmra.mrb[0].mxu0 %v3523
  %v3645 = vpop.f32.mrb[0].mxu0
  %v3646 = vadd.f32 0.0, %v3645
  %v3647 = vpop.f32.mrb[0].mxu0
  %v3648 = vpop.f32.mrb[0].mxu0
  %v3649 = vadd.f32 0.0, %v3648
  %v3650 = vpop.f32.mrb[0].mxu0
  %3651 = vmatprep.mubr.bf16.mxu0 0
  %3652 = vmatmul.mubr.bf16.gmra.mrb[0].mxu0 %v3524
  %v3653 = vpop.f32.mrb[0].mxu0
  %v3654 = vadd.f32 0.0, %v3653
  %v3655 = vpop.f32.mrb[0].mxu0
  %v3656 = vpop.f32.mrb[0].mxu0
  %v3657 = vadd.f32 0.0, %v3656
  %v3658 = vpop.f32.mrb[0].mxu0
  %3659 = vmatprep.mubr.bf16.mxu0 0
  %3660 = vmatmul.mubr.bf16.gmra.mrb[0].mxu0 %v3525
  %v3661 = vpop.f32.mrb[0].mxu0
  %v3662 = vadd.f32 0.0, %v3661
  %v3663 = vpop.f32.mrb[0].mxu0
  %v3664 = vpop.f32.mrb[0].mxu0
  %v3665 = vadd.f32 0.0, %v3664
  %v3666 = vpop.f32.mrb[0].mxu0
  %3667 = vmatprep.mubr.bf16.mxu0 0
  %3668 = vmatmul.mubr.bf16.gmra.mrb[0].mxu0 %v3526
  %v3669 = vpop.f32.mrb[0].mxu0
  %v3670 = vadd.f32 0.0, %v3669
  %v3671 = vpop.f32.mrb[0].mxu0
  %v3672 = vpop.f32.mrb[0].mxu0
  %v3673 = vadd.f32 0.0, %v3672
  %v3674 = vpop.f32.mrb[0].mxu0
  %3675 = vmatprep.mubr.bf16.mxu0 0
  %3676 = vmatmul.mubr.bf16.gmra.mrb[0].mxu0 %v3527
  %v3677 = vpop.f32.mrb[0].mxu0
  %v3678 = vadd.f32 0.0, %v3677
  %v3679 = vpop.f32.mrb[0].mxu0
  %v3680 = vpop.f32.mrb[0].mxu0
  %v3681 = vadd.f32 0.0, %v3680
  %v3682 = vpop.f32.mrb[0].mxu0
  %3683 = vmatprep.mubr.bf16.mxu0 0
  %3684 = vmatmul.mubr.bf16.gmra.mrb[0].mxu0 %v3528
  %v3685 = vpop.f32.mrb[0].mxu0
  %v3686 = vadd.f32 0.0, %v3685
  %v3687 = vpop.f32.mrb[0].mxu0
  %v3688 = vpop.f32.mrb[0].mxu0
  %v3689 = vadd.f32 0.0, %v3688
  %v3690 = vpop.f32.mrb[0].mxu0
  %3691 = vmatprep.mubr.bf16.mxu0 0
  %3692 = vmatmul.mubr.bf16.gmra.mrb[0].mxu0 %v3529
  %v3693 = vpop.f32.mrb[0].mxu0
  %v3694 = vadd.f32 0.0, %v3693
  %v3695 = vpop.f32.mrb[0].mxu0
  %v3696 = vpop.f32.mrb[0].mxu0
  %v3697 = vadd.f32 0.0, %v3696
  %v3698 = vpop.f32.mrb[0].mxu0
  %3699 = vmatprep.mubr.bf16.mxu0 0
  %3700 = vmatmul.mubr.bf16.gmra.mrb[0].mxu0 %v3530
  %v3701 = vpop.f32.mrb[0].mxu0
  %v3702 = vadd.f32 0.0, %v3701
  %v3703 = vpop.f32.mrb[0].mxu0
  %v3704 = vpop.f32.mrb[0].mxu0
  %v3705 = vadd.f32 0.0, %v3704
  %v3706 = vpop.f32.mrb[0].mxu0
  %3707 = vdwg.mxu0
  %3708 = vrot.lane.b32.xlu0 %v962, 64
  %v3709 = vpop.permute.xlu0 %3708
  %3710 = vrot.lane.b32.xlu0 %v963, 64
  %v3711 = vpop.permute.xlu0 %3710
  %3712 = vrot.lane.b32.xlu0 %v964, 64
  %v3713 = vpop.permute.xlu0 %3712
  %3714 = vrot.lane.b32.xlu0 %v965, 64
  %v3715 = vpop.permute.xlu0 %3714
  %3716 = vrot.lane.b32.xlu0 %v966, 64
  %v3717 = vpop.permute.xlu0 %3716
  %3718 = vrot.lane.b32.xlu0 %v967, 64
  %v3719 = vpop.permute.xlu0 %3718
  %3720 = vrot.lane.b32.xlu0 %v968, 64
  %v3721 = vpop.permute.xlu0 %3720
  %3722 = vrot.lane.b32.xlu0 %v969, 64
  %v3723 = vpop.permute.xlu0 %3722
  %3732 = vmatprep.subr.bf16.mxu0 0
  %3733 = vmatpush1.bf16.msra.mxu0 %v3709
  %3734 = vmatprep.subr.bf16.mxu0 0
  %3735 = vmatpush1.bf16.msra.mxu0 %v3711
  %3736 = vmatprep.subr.bf16.mxu0 0
  %3737 = vmatpush1.bf16.msra.mxu0 %v3713
  %3738 = vmatprep.subr.bf16.mxu0 0
  %3739 = vmatpush1.bf16.msra.mxu0 %v3715
  %3740 = vmatprep.subr.bf16.mxu0 0
  %3741 = vmatpush1.bf16.msra.mxu0 %v3717
  %3742 = vmatprep.subr.bf16.mxu0 0
  %3743 = vmatpush1.bf16.msra.mxu0 %v3719
  %3744 = vmatprep.subr.bf16.mxu0 0
  %3745 = vmatpush1.bf16.msra.mxu0 %v3721
  %3746 = vmatprep.subr.bf16.mxu0 0
  %3747 = vmatpush1.bf16.msra.mxu0 %v3723
  %3748 = vmatprep.subr.bf16.mxu0 0
  %3749 = vmatpush1.bf16.msra.mxu0 0
  %3750 = vmatprep.subr.bf16.mxu0 0
  %3751 = vmatpush1.bf16.msra.mxu0 0
  %3752 = vmatprep.subr.bf16.mxu0 0
  %3753 = vmatpush1.bf16.msra.mxu0 0
  %3754 = vmatprep.subr.bf16.mxu0 0
  %3755 = vmatpush1.bf16.msra.mxu0 0
  %3756 = vmatprep.subr.bf16.mxu0 0
  %3757 = vmatpush1.bf16.msra.mxu0 0
  %3758 = vmatprep.subr.bf16.mxu0 0
  %3759 = vmatpush1.bf16.msra.mxu0 0
  %3760 = vmatprep.subr.bf16.mxu0 0
  %3761 = vmatpush1.bf16.msra.mxu0 0
  %3762 = vmatprep.subr.bf16.mxu0 0
  %3763 = vmatpush1.bf16.msra.mxu0 0
  %3764 = vmatprep.mubr.bf16.mxu0 0
  %3765 = vmatmul.mubr.bf16.gmra.mrb[0].mxu0 %v3531
  %v3766 = vpop.f32.mrb[0].mxu0
  %v3767 = vadd.f32 0.0, %v3766
  %v3768 = vpop.f32.mrb[0].mxu0
  %v3769 = vpop.f32.mrb[0].mxu0
  %v3770 = vadd.f32 0.0, %v3769
  %v3771 = vpop.f32.mrb[0].mxu0
  %3772 = vmatprep.mubr.bf16.mxu0 0
  %3773 = vmatmul.mubr.bf16.gmra.mrb[0].mxu0 %v3532
  %v3774 = vpop.f32.mrb[0].mxu0
  %v3775 = vadd.f32 0.0, %v3774
  %v3776 = vpop.f32.mrb[0].mxu0
  %v3777 = vpop.f32.mrb[0].mxu0
  %v3778 = vadd.f32 0.0, %v3777
  %v3779 = vpop.f32.mrb[0].mxu0
  %3780 = vmatprep.mubr.bf16.mxu0 0
  %3781 = vmatmul.mubr.bf16.gmra.mrb[0].mxu0 %v3533
  %v3782 = vpop.f32.mrb[0].mxu0
  %v3783 = vadd.f32 0.0, %v3782
  %v3784 = vpop.f32.mrb[0].mxu0
  %v3785 = vpop.f32.mrb[0].mxu0
  %v3786 = vadd.f32 0.0, %v3785
  %v3787 = vpop.f32.mrb[0].mxu0
  %3788 = vmatprep.mubr.bf16.mxu0 0
  %3789 = vmatmul.mubr.bf16.gmra.mrb[0].mxu0 %v3534
  %v3790 = vpop.f32.mrb[0].mxu0
  %v3791 = vadd.f32 0.0, %v3790
  %v3792 = vpop.f32.mrb[0].mxu0
  %v3793 = vpop.f32.mrb[0].mxu0
  %v3794 = vadd.f32 0.0, %v3793
  %v3795 = vpop.f32.mrb[0].mxu0
  %3796 = vmatprep.mubr.bf16.mxu0 0
  %3797 = vmatmul.mubr.bf16.gmra.mrb[0].mxu0 %v3535
  %v3798 = vpop.f32.mrb[0].mxu0
  %v3799 = vadd.f32 0.0, %v3798
  %v3800 = vpop.f32.mrb[0].mxu0
  %v3801 = vpop.f32.mrb[0].mxu0
  %v3802 = vadd.f32 0.0, %v3801
  %v3803 = vpop.f32.mrb[0].mxu0
  %3804 = vmatprep.mubr.bf16.mxu0 0
  %3805 = vmatmul.mubr.bf16.gmra.mrb[0].mxu0 %v3536
  %v3806 = vpop.f32.mrb[0].mxu0
  %v3807 = vadd.f32 0.0, %v3806
  %v3808 = vpop.f32.mrb[0].mxu0
  %v3809 = vpop.f32.mrb[0].mxu0
  %v3810 = vadd.f32 0.0, %v3809
  %v3811 = vpop.f32.mrb[0].mxu0
  %3812 = vmatprep.mubr.bf16.mxu0 0
  %3813 = vmatmul.mubr.bf16.gmra.mrb[0].mxu0 %v3537
  %v3814 = vpop.f32.mrb[0].mxu0
  %v3815 = vadd.f32 0.0, %v3814
  %v3816 = vpop.f32.mrb[0].mxu0
  %v3817 = vpop.f32.mrb[0].mxu0
  %v3818 = vadd.f32 0.0, %v3817
  %v3819 = vpop.f32.mrb[0].mxu0
  %3820 = vmatprep.mubr.bf16.mxu0 0
  %3821 = vmatmul.mubr.bf16.gmra.mrb[0].mxu0 %v3538
  %v3822 = vpop.f32.mrb[0].mxu0
  %v3823 = vadd.f32 0.0, %v3822
  %v3824 = vpop.f32.mrb[0].mxu0
  %v3825 = vpop.f32.mrb[0].mxu0
  %v3826 = vadd.f32 0.0, %v3825
  %v3827 = vpop.f32.mrb[0].mxu0
  %3828 = vdwg.mxu0
  %3829 = vrot.lane.b32.xlu0 %v970, 64
  %v3830 = vpop.permute.xlu0 %3829
  %3831 = vrot.lane.b32.xlu0 %v971, 64
  %v3832 = vpop.permute.xlu0 %3831
  %3833 = vrot.lane.b32.xlu0 %v972, 64
  %v3834 = vpop.permute.xlu0 %3833
  %3835 = vrot.lane.b32.xlu0 %v973, 64
  %v3836 = vpop.permute.xlu0 %3835
  %3837 = vrot.lane.b32.xlu0 %v974, 64
  %v3838 = vpop.permute.xlu0 %3837
  %3839 = vrot.lane.b32.xlu0 %v975, 64
  %v3840 = vpop.permute.xlu0 %3839
  %3841 = vrot.lane.b32.xlu0 %v976, 64
  %v3842 = vpop.permute.xlu0 %3841
  %3843 = vrot.lane.b32.xlu0 %v977, 64
  %v3844 = vpop.permute.xlu0 %3843
  %3853 = vmatprep.subr.bf16.mxu0 0
  %3854 = vmatpush1.bf16.msra.mxu0 %v3830
  %3855 = vmatprep.subr.bf16.mxu0 0
  %3856 = vmatpush1.bf16.msra.mxu0 %v3832
  %3857 = vmatprep.subr.bf16.mxu0 0
  %3858 = vmatpush1.bf16.msra.mxu0 %v3834
  %3859 = vmatprep.subr.bf16.mxu0 0
  %3860 = vmatpush1.bf16.msra.mxu0 %v3836
  %3861 = vmatprep.subr.bf16.mxu0 0
  %3862 = vmatpush1.bf16.msra.mxu0 %v3838
  %3863 = vmatprep.subr.bf16.mxu0 0
  %3864 = vmatpush1.bf16.msra.mxu0 %v3840
  %3865 = vmatprep.subr.bf16.mxu0 0
  %3866 = vmatpush1.bf16.msra.mxu0 %v3842
  %3867 = vmatprep.subr.bf16.mxu0 0
  %3868 = vmatpush1.bf16.msra.mxu0 %v3844
  %3869 = vmatprep.subr.bf16.mxu0 0
  %3870 = vmatpush1.bf16.msra.mxu0 0
  %3871 = vmatprep.subr.bf16.mxu0 0
  %3872 = vmatpush1.bf16.msra.mxu0 0
  %3873 = vmatprep.subr.bf16.mxu0 0
  %3874 = vmatpush1.bf16.msra.mxu0 0
  %3875 = vmatprep.subr.bf16.mxu0 0
  %3876 = vmatpush1.bf16.msra.mxu0 0
  %3877 = vmatprep.subr.bf16.mxu0 0
  %3878 = vmatpush1.bf16.msra.mxu0 0
  %3879 = vmatprep.subr.bf16.mxu0 0
  %3880 = vmatpush1.bf16.msra.mxu0 0
  %3881 = vmatprep.subr.bf16.mxu0 0
  %3882 = vmatpush1.bf16.msra.mxu0 0
  %3883 = vmatprep.subr.bf16.mxu0 0
  %3884 = vmatpush1.bf16.msra.mxu0 0
  %3885 = vmatprep.mubr.bf16.mxu0 0
  %3886 = vmatmul.mubr.bf16.gmra.mrb[0].mxu0 %v3539
  %v3887 = vpop.f32.mrb[0].mxu0
  %v3888 = vadd.f32 0.0, %v3887
  %v3889 = vpop.f32.mrb[0].mxu0
  %v3890 = vpop.f32.mrb[0].mxu0
  %v3891 = vadd.f32 0.0, %v3890
  %v3892 = vpop.f32.mrb[0].mxu0
  %3893 = vmatprep.mubr.bf16.mxu0 0
  %3894 = vmatmul.mubr.bf16.gmra.mrb[0].mxu0 %v3540
  %v3895 = vpop.f32.mrb[0].mxu0
  %v3896 = vadd.f32 0.0, %v3895
  %v3897 = vpop.f32.mrb[0].mxu0
  %v3898 = vpop.f32.mrb[0].mxu0
  %v3899 = vadd.f32 0.0, %v3898
  %v3900 = vpop.f32.mrb[0].mxu0
  %3901 = vmatprep.mubr.bf16.mxu0 0
  %3902 = vmatmul.mubr.bf16.gmra.mrb[0].mxu0 %v3541
  %v3903 = vpop.f32.mrb[0].mxu0
  %v3904 = vadd.f32 0.0, %v3903
  %v3905 = vpop.f32.mrb[0].mxu0
  %v3906 = vpop.f32.mrb[0].mxu0
  %v3907 = vadd.f32 0.0, %v3906
  %v3908 = vpop.f32.mrb[0].mxu0
  %3909 = vmatprep.mubr.bf16.mxu0 0
  %3910 = vmatmul.mubr.bf16.gmra.mrb[0].mxu0 %v3542
  %v3911 = vpop.f32.mrb[0].mxu0
  %v3912 = vadd.f32 0.0, %v3911
  %v3913 = vpop.f32.mrb[0].mxu0
  %v3914 = vpop.f32.mrb[0].mxu0
  %v3915 = vadd.f32 0.0, %v3914
  %v3916 = vpop.f32.mrb[0].mxu0
  %3917 = vmatprep.mubr.bf16.mxu0 0
  %3918 = vmatmul.mubr.bf16.gmra.mrb[0].mxu0 %v3543
  %v3919 = vpop.f32.mrb[0].mxu0
  %v3920 = vadd.f32 0.0, %v3919
  %v3921 = vpop.f32.mrb[0].mxu0
  %v3922 = vpop.f32.mrb[0].mxu0
  %v3923 = vadd.f32 0.0, %v3922
  %v3924 = vpop.f32.mrb[0].mxu0
  %3925 = vmatprep.mubr.bf16.mxu0 0
  %3926 = vmatmul.mubr.bf16.gmra.mrb[0].mxu0 %v3544
  %v3927 = vpop.f32.mrb[0].mxu0
  %v3928 = vadd.f32 0.0, %v3927
  %v3929 = vpop.f32.mrb[0].mxu0
  %v3930 = vpop.f32.mrb[0].mxu0
  %v3931 = vadd.f32 0.0, %v3930
  %v3932 = vpop.f32.mrb[0].mxu0
  %3933 = vmatprep.mubr.bf16.mxu0 0
  %3934 = vmatmul.mubr.bf16.gmra.mrb[0].mxu0 %v3545
  %v3935 = vpop.f32.mrb[0].mxu0
  %v3936 = vadd.f32 0.0, %v3935
  %v3937 = vpop.f32.mrb[0].mxu0
  %v3938 = vpop.f32.mrb[0].mxu0
  %v3939 = vadd.f32 0.0, %v3938
  %v3940 = vpop.f32.mrb[0].mxu0
  %3941 = vmatprep.mubr.bf16.mxu0 0
  %3942 = vmatmul.mubr.bf16.gmra.mrb[0].mxu0 %v3546
  %v3943 = vpop.f32.mrb[0].mxu0
  %v3944 = vadd.f32 0.0, %v3943
  %v3945 = vpop.f32.mrb[0].mxu0
  %v3946 = vpop.f32.mrb[0].mxu0
  %v3947 = vadd.f32 0.0, %v3946
  %v3948 = vpop.f32.mrb[0].mxu0
  %3949 = vdwg.mxu0
  %3950 = vrot.lane.b32.xlu0 %v978, 64
  %v3951 = vpop.permute.xlu0 %3950
  %3952 = vrot.lane.b32.xlu0 %v979, 64
  %v3953 = vpop.permute.xlu0 %3952
  %3954 = vrot.lane.b32.xlu0 %v980, 64
  %v3955 = vpop.permute.xlu0 %3954
  %3956 = vrot.lane.b32.xlu0 %v981, 64
  %v3957 = vpop.permute.xlu0 %3956
  %3958 = vrot.lane.b32.xlu0 %v982, 64
  %v3959 = vpop.permute.xlu0 %3958
  %3960 = vrot.lane.b32.xlu0 %v983, 64
  %v3961 = vpop.permute.xlu0 %3960
  %3962 = vrot.lane.b32.xlu0 %v984, 64
  %v3963 = vpop.permute.xlu0 %3962
  %3964 = vrot.lane.b32.xlu0 %v985, 64
  %v3965 = vpop.permute.xlu0 %3964
  %3974 = vmatprep.subr.bf16.mxu0 0
  %3975 = vmatpush1.bf16.msra.mxu0 %v3951
  %3976 = vmatprep.subr.bf16.mxu0 0
  %3977 = vmatpush1.bf16.msra.mxu0 %v3953
  %3978 = vmatprep.subr.bf16.mxu0 0
  %3979 = vmatpush1.bf16.msra.mxu0 %v3955
  %3980 = vmatprep.subr.bf16.mxu0 0
  %3981 = vmatpush1.bf16.msra.mxu0 %v3957
  %3982 = vmatprep.subr.bf16.mxu0 0
  %3983 = vmatpush1.bf16.msra.mxu0 %v3959
  %3984 = vmatprep.subr.bf16.mxu0 0
  %3985 = vmatpush1.bf16.msra.mxu0 %v3961
  %3986 = vmatprep.subr.bf16.mxu0 0
  %3987 = vmatpush1.bf16.msra.mxu0 %v3963
  %3988 = vmatprep.subr.bf16.mxu0 0
  %3989 = vmatpush1.bf16.msra.mxu0 %v3965
  %3990 = vmatprep.subr.bf16.mxu0 0
  %3991 = vmatpush1.bf16.msra.mxu0 0
  %3992 = vmatprep.subr.bf16.mxu0 0
  %3993 = vmatpush1.bf16.msra.mxu0 0
  %3994 = vmatprep.subr.bf16.mxu0 0
  %3995 = vmatpush1.bf16.msra.mxu0 0
  %3996 = vmatprep.subr.bf16.mxu0 0
  %3997 = vmatpush1.bf16.msra.mxu0 0
  %3998 = vmatprep.subr.bf16.mxu0 0
  %3999 = vmatpush1.bf16.msra.mxu0 0
  %4000 = vmatprep.subr.bf16.mxu0 0
  %4001 = vmatpush1.bf16.msra.mxu0 0
  %4002 = vmatprep.subr.bf16.mxu0 0
  %4003 = vmatpush1.bf16.msra.mxu0 0
  %4004 = vmatprep.subr.bf16.mxu0 0
  %4005 = vmatpush1.bf16.msra.mxu0 0
  %4006 = vmatprep.mubr.bf16.mxu0 0
  %4007 = vmatmul.mubr.bf16.gmra.mrb[0].mxu0 %v3547
  %v4008 = vpop.f32.mrb[0].mxu0
  %v4009 = vadd.f32 0.0, %v4008
  %v4010 = vpop.f32.mrb[0].mxu0
  %v4011 = vpop.f32.mrb[0].mxu0
  %v4012 = vadd.f32 0.0, %v4011
  %v4013 = vpop.f32.mrb[0].mxu0
  %4014 = vmatprep.mubr.bf16.mxu0 0
  %4015 = vmatmul.mubr.bf16.gmra.mrb[0].mxu0 %v3548
  %v4016 = vpop.f32.mrb[0].mxu0
  %v4017 = vadd.f32 0.0, %v4016
  %v4018 = vpop.f32.mrb[0].mxu0
  %v4019 = vpop.f32.mrb[0].mxu0
  %v4020 = vadd.f32 0.0, %v4019
  %v4021 = vpop.f32.mrb[0].mxu0
  %4022 = vmatprep.mubr.bf16.mxu0 0
  %4023 = vmatmul.mubr.bf16.gmra.mrb[0].mxu0 %v3549
  %v4024 = vpop.f32.mrb[0].mxu0
  %v4025 = vadd.f32 0.0, %v4024
  %v4026 = vpop.f32.mrb[0].mxu0
  %v4027 = vpop.f32.mrb[0].mxu0
  %v4028 = vadd.f32 0.0, %v4027
  %v4029 = vpop.f32.mrb[0].mxu0
  %4030 = vmatprep.mubr.bf16.mxu0 0
  %4031 = vmatmul.mubr.bf16.gmra.mrb[0].mxu0 %v3550
  %v4032 = vpop.f32.mrb[0].mxu0
  %v4033 = vadd.f32 0.0, %v4032
  %v4034 = vpop.f32.mrb[0].mxu0
  %v4035 = vpop.f32.mrb[0].mxu0
  %v4036 = vadd.f32 0.0, %v4035
  %v4037 = vpop.f32.mrb[0].mxu0
  %4038 = vmatprep.mubr.bf16.mxu0 0
  %4039 = vmatmul.mubr.bf16.gmra.mrb[0].mxu0 %v3551
  %v4040 = vpop.f32.mrb[0].mxu0
  %v4041 = vadd.f32 0.0, %v4040
  %v4042 = vpop.f32.mrb[0].mxu0
  %v4043 = vpop.f32.mrb[0].mxu0
  %v4044 = vadd.f32 0.0, %v4043
  %v4045 = vpop.f32.mrb[0].mxu0
  %4046 = vmatprep.mubr.bf16.mxu0 0
  %4047 = vmatmul.mubr.bf16.gmra.mrb[0].mxu0 %v3552
  %v4048 = vpop.f32.mrb[0].mxu0
  %v4049 = vadd.f32 0.0, %v4048
  %v4050 = vpop.f32.mrb[0].mxu0
  %v4051 = vpop.f32.mrb[0].mxu0
  %v4052 = vadd.f32 0.0, %v4051
  %v4053 = vpop.f32.mrb[0].mxu0
  %4054 = vmatprep.mubr.bf16.mxu0 0
  %4055 = vmatmul.mubr.bf16.gmra.mrb[0].mxu0 %v3553
  %v4056 = vpop.f32.mrb[0].mxu0
  %v4057 = vadd.f32 0.0, %v4056
  %v4058 = vpop.f32.mrb[0].mxu0
  %v4059 = vpop.f32.mrb[0].mxu0
  %v4060 = vadd.f32 0.0, %v4059
  %v4061 = vpop.f32.mrb[0].mxu0
  %4062 = vmatprep.mubr.bf16.mxu0 0
  %4063 = vmatmul.mubr.bf16.gmra.mrb[0].mxu0 %v3554
  %v4064 = vpop.f32.mrb[0].mxu0
  %v4065 = vadd.f32 0.0, %v4064
  %v4066 = vpop.f32.mrb[0].mxu0
  %v4067 = vpop.f32.mrb[0].mxu0
  %v4068 = vadd.f32 0.0, %v4067
  %v4069 = vpop.f32.mrb[0].mxu0
  %4070 = vdwg.mxu0
  %4071 = vrot.lane.b32.xlu0 %v986, 64
  %v4072 = vpop.permute.xlu0 %4071
  %4073 = vrot.lane.b32.xlu0 %v987, 64
  %v4074 = vpop.permute.xlu0 %4073
  %4075 = vrot.lane.b32.xlu0 %v988, 64
  %v4076 = vpop.permute.xlu0 %4075
  %4077 = vrot.lane.b32.xlu0 %v989, 64
  %v4078 = vpop.permute.xlu0 %4077
  %4079 = vrot.lane.b32.xlu0 %v990, 64
  %v4080 = vpop.permute.xlu0 %4079
  %4081 = vrot.lane.b32.xlu0 %v991, 64
  %v4082 = vpop.permute.xlu0 %4081
  %4083 = vrot.lane.b32.xlu0 %v992, 64
  %v4084 = vpop.permute.xlu0 %4083
  %4085 = vrot.lane.b32.xlu0 %v993, 64
  %v4086 = vpop.permute.xlu0 %4085
  %4095 = vmatprep.subr.bf16.mxu0 0
  %4096 = vmatpush1.bf16.msra.mxu0 %v4072
  %4097 = vmatprep.subr.bf16.mxu0 0
  %4098 = vmatpush1.bf16.msra.mxu0 %v4074
  %4099 = vmatprep.subr.bf16.mxu0 0
  %4100 = vmatpush1.bf16.msra.mxu0 %v4076
  %4101 = vmatprep.subr.bf16.mxu0 0
  %4102 = vmatpush1.bf16.msra.mxu0 %v4078
  %4103 = vmatprep.subr.bf16.mxu0 0
  %4104 = vmatpush1.bf16.msra.mxu0 %v4080
  %4105 = vmatprep.subr.bf16.mxu0 0
  %4106 = vmatpush1.bf16.msra.mxu0 %v4082
  %4107 = vmatprep.subr.bf16.mxu0 0
  %4108 = vmatpush1.bf16.msra.mxu0 %v4084
  %4109 = vmatprep.subr.bf16.mxu0 0
  %4110 = vmatpush1.bf16.msra.mxu0 %v4086
  %4111 = vmatprep.subr.bf16.mxu0 0
  %4112 = vmatpush1.bf16.msra.mxu0 0
  %4113 = vmatprep.subr.bf16.mxu0 0
  %4114 = vmatpush1.bf16.msra.mxu0 0
  %4115 = vmatprep.subr.bf16.mxu0 0
  %4116 = vmatpush1.bf16.msra.mxu0 0
  %4117 = vmatprep.subr.bf16.mxu0 0
  %4118 = vmatpush1.bf16.msra.mxu0 0
  %4119 = vmatprep.subr.bf16.mxu0 0
  %4120 = vmatpush1.bf16.msra.mxu0 0
  %4121 = vmatprep.subr.bf16.mxu0 0
  %4122 = vmatpush1.bf16.msra.mxu0 0
  %4123 = vmatprep.subr.bf16.mxu0 0
  %4124 = vmatpush1.bf16.msra.mxu0 0
  %4125 = vmatprep.subr.bf16.mxu0 0
  %4126 = vmatpush1.bf16.msra.mxu0 0
  %4127 = vmatprep.mubr.bf16.mxu0 0
  %4128 = vmatmul.mubr.bf16.gmra.mrb[0].mxu0 %v3555
  %v4129 = vpop.f32.mrb[0].mxu0
  %v4130 = vadd.f32 0.0, %v4129
  %v4131 = vpop.f32.mrb[0].mxu0
  %v4132 = vpop.f32.mrb[0].mxu0
  %v4133 = vadd.f32 0.0, %v4132
  %v4134 = vpop.f32.mrb[0].mxu0
  %4135 = vmatprep.mubr.bf16.mxu0 0
  %4136 = vmatmul.mubr.bf16.gmra.mrb[0].mxu0 %v3556
  %v4137 = vpop.f32.mrb[0].mxu0
  %v4138 = vadd.f32 0.0, %v4137
  %v4139 = vpop.f32.mrb[0].mxu0
  %v4140 = vpop.f32.mrb[0].mxu0
  %v4141 = vadd.f32 0.0, %v4140
  %v4142 = vpop.f32.mrb[0].mxu0
  %4143 = vmatprep.mubr.bf16.mxu0 0
  %4144 = vmatmul.mubr.bf16.gmra.mrb[0].mxu0 %v3557
  %v4145 = vpop.f32.mrb[0].mxu0
  %v4146 = vadd.f32 0.0, %v4145
  %v4147 = vpop.f32.mrb[0].mxu0
  %v4148 = vpop.f32.mrb[0].mxu0
  %v4149 = vadd.f32 0.0, %v4148
  %v4150 = vpop.f32.mrb[0].mxu0
  %4151 = vmatprep.mubr.bf16.mxu0 0
  %4152 = vmatmul.mubr.bf16.gmra.mrb[0].mxu0 %v3558
  %v4153 = vpop.f32.mrb[0].mxu0
  %v4154 = vadd.f32 0.0, %v4153
  %v4155 = vpop.f32.mrb[0].mxu0
  %v4156 = vpop.f32.mrb[0].mxu0
  %v4157 = vadd.f32 0.0, %v4156
  %v4158 = vpop.f32.mrb[0].mxu0
  %4159 = vmatprep.mubr.bf16.mxu0 0
  %4160 = vmatmul.mubr.bf16.gmra.mrb[0].mxu0 %v3559
  %v4161 = vpop.f32.mrb[0].mxu0
  %v4162 = vadd.f32 0.0, %v4161
  %v4163 = vpop.f32.mrb[0].mxu0
  %v4164 = vpop.f32.mrb[0].mxu0
  %v4165 = vadd.f32 0.0, %v4164
  %v4166 = vpop.f32.mrb[0].mxu0
  %4167 = vmatprep.mubr.bf16.mxu0 0
  %4168 = vmatmul.mubr.bf16.gmra.mrb[0].mxu0 %v3560
  %v4169 = vpop.f32.mrb[0].mxu0
  %v4170 = vadd.f32 0.0, %v4169
  %v4171 = vpop.f32.mrb[0].mxu0
  %v4172 = vpop.f32.mrb[0].mxu0
  %v4173 = vadd.f32 0.0, %v4172
  %v4174 = vpop.f32.mrb[0].mxu0
  %4175 = vmatprep.mubr.bf16.mxu0 0
  %4176 = vmatmul.mubr.bf16.gmra.mrb[0].mxu0 %v3561
  %v4177 = vpop.f32.mrb[0].mxu0
  %v4178 = vadd.f32 0.0, %v4177
  %v4179 = vpop.f32.mrb[0].mxu0
  %v4180 = vpop.f32.mrb[0].mxu0
  %v4181 = vadd.f32 0.0, %v4180
  %v4182 = vpop.f32.mrb[0].mxu0
  %4183 = vmatprep.mubr.bf16.mxu0 0
  %4184 = vmatmul.mubr.bf16.gmra.mrb[0].mxu0 %v3562
  %v4185 = vpop.f32.mrb[0].mxu0
  %v4186 = vadd.f32 0.0, %v4185
  %v4187 = vpop.f32.mrb[0].mxu0
  %v4188 = vpop.f32.mrb[0].mxu0
  %v4189 = vadd.f32 0.0, %v4188
  %v4190 = vpop.f32.mrb[0].mxu0
  %4191 = vdwg.mxu0
  %4192 = vrot.lane.b32.xlu0 %v994, 64
  %v4193 = vpop.permute.xlu0 %4192
  %4194 = vrot.lane.b32.xlu0 %v995, 64
  %v4195 = vpop.permute.xlu0 %4194
  %4196 = vrot.lane.b32.xlu0 %v996, 64
  %v4197 = vpop.permute.xlu0 %4196
  %4198 = vrot.lane.b32.xlu0 %v997, 64
  %v4199 = vpop.permute.xlu0 %4198
  %4200 = vrot.lane.b32.xlu0 %v998, 64
  %v4201 = vpop.permute.xlu0 %4200
  %4202 = vrot.lane.b32.xlu0 %v999, 64
  %v4203 = vpop.permute.xlu0 %4202
  %4204 = vrot.lane.b32.xlu0 %v1000, 64
  %v4205 = vpop.permute.xlu0 %4204
  %4206 = vrot.lane.b32.xlu0 %v1001, 64
  %v4207 = vpop.permute.xlu0 %4206
  %4216 = vmatprep.subr.bf16.mxu0 0
  %4217 = vmatpush1.bf16.msra.mxu0 %v4193
  %4218 = vmatprep.subr.bf16.mxu0 0
  %4219 = vmatpush1.bf16.msra.mxu0 %v4195
  %4220 = vmatprep.subr.bf16.mxu0 0
  %4221 = vmatpush1.bf16.msra.mxu0 %v4197
  %4222 = vmatprep.subr.bf16.mxu0 0
  %4223 = vmatpush1.bf16.msra.mxu0 %v4199
  %4224 = vmatprep.subr.bf16.mxu0 0
  %4225 = vmatpush1.bf16.msra.mxu0 %v4201
  %4226 = vmatprep.subr.bf16.mxu0 0
  %4227 = vmatpush1.bf16.msra.mxu0 %v4203
  %4228 = vmatprep.subr.bf16.mxu0 0
  %4229 = vmatpush1.bf16.msra.mxu0 %v4205
  %4230 = vmatprep.subr.bf16.mxu0 0
  %4231 = vmatpush1.bf16.msra.mxu0 %v4207
  %4232 = vmatprep.subr.bf16.mxu0 0
  %4233 = vmatpush1.bf16.msra.mxu0 0
  %4234 = vmatprep.subr.bf16.mxu0 0
  %4235 = vmatpush1.bf16.msra.mxu0 0
  %4236 = vmatprep.subr.bf16.mxu0 0
  %4237 = vmatpush1.bf16.msra.mxu0 0
  %4238 = vmatprep.subr.bf16.mxu0 0
  %4239 = vmatpush1.bf16.msra.mxu0 0
  %4240 = vmatprep.subr.bf16.mxu0 0
  %4241 = vmatpush1.bf16.msra.mxu0 0
  %4242 = vmatprep.subr.bf16.mxu0 0
  %4243 = vmatpush1.bf16.msra.mxu0 0
  %4244 = vmatprep.subr.bf16.mxu0 0
  %4245 = vmatpush1.bf16.msra.mxu0 0
  %4246 = vmatprep.subr.bf16.mxu0 0
  %4247 = vmatpush1.bf16.msra.mxu0 0
  %4248 = vmatprep.mubr.bf16.mxu0 0
  %4249 = vmatmul.mubr.bf16.gmra.mrb[0].mxu0 %v3563
  %v4250 = vpop.f32.mrb[0].mxu0
  %v4251 = vadd.f32 0.0, %v4250
  %v4252 = vpop.f32.mrb[0].mxu0
  %v4253 = vpop.f32.mrb[0].mxu0
  %v4254 = vadd.f32 0.0, %v4253
  %v4255 = vpop.f32.mrb[0].mxu0
  %4256 = vmatprep.mubr.bf16.mxu0 0
  %4257 = vmatmul.mubr.bf16.gmra.mrb[0].mxu0 %v3564
  %v4258 = vpop.f32.mrb[0].mxu0
  %v4259 = vadd.f32 0.0, %v4258
  %v4260 = vpop.f32.mrb[0].mxu0
  %v4261 = vpop.f32.mrb[0].mxu0
  %v4262 = vadd.f32 0.0, %v4261
  %v4263 = vpop.f32.mrb[0].mxu0
  %4264 = vmatprep.mubr.bf16.mxu0 0
  %4265 = vmatmul.mubr.bf16.gmra.mrb[0].mxu0 %v3565
  %v4266 = vpop.f32.mrb[0].mxu0
  %v4267 = vadd.f32 0.0, %v4266
  %v4268 = vpop.f32.mrb[0].mxu0
  %v4269 = vpop.f32.mrb[0].mxu0
  %v4270 = vadd.f32 0.0, %v4269
  %v4271 = vpop.f32.mrb[0].mxu0
  %4272 = vmatprep.mubr.bf16.mxu0 0
  %4273 = vmatmul.mubr.bf16.gmra.mrb[0].mxu0 %v3566
  %v4274 = vpop.f32.mrb[0].mxu0
  %v4275 = vadd.f32 0.0, %v4274
  %v4276 = vpop.f32.mrb[0].mxu0
  %v4277 = vpop.f32.mrb[0].mxu0
  %v4278 = vadd.f32 0.0, %v4277
  %v4279 = vpop.f32.mrb[0].mxu0
  %4280 = vmatprep.mubr.bf16.mxu0 0
  %4281 = vmatmul.mubr.bf16.gmra.mrb[0].mxu0 %v3567
  %v4282 = vpop.f32.mrb[0].mxu0
  %v4283 = vadd.f32 0.0, %v4282
  %v4284 = vpop.f32.mrb[0].mxu0
  %v4285 = vpop.f32.mrb[0].mxu0
  %v4286 = vadd.f32 0.0, %v4285
  %v4287 = vpop.f32.mrb[0].mxu0
  %4288 = vmatprep.mubr.bf16.mxu0 0
  %4289 = vmatmul.mubr.bf16.gmra.mrb[0].mxu0 %v3568
  %v4290 = vpop.f32.mrb[0].mxu0
  %v4291 = vadd.f32 0.0, %v4290
  %v4292 = vpop.f32.mrb[0].mxu0
  %v4293 = vpop.f32.mrb[0].mxu0
  %v4294 = vadd.f32 0.0, %v4293
  %v4295 = vpop.f32.mrb[0].mxu0
  %4296 = vmatprep.mubr.bf16.mxu0 0
  %4297 = vmatmul.mubr.bf16.gmra.mrb[0].mxu0 %v3569
  %v4298 = vpop.f32.mrb[0].mxu0
  %v4299 = vadd.f32 0.0, %v4298
  %v4300 = vpop.f32.mrb[0].mxu0
  %v4301 = vpop.f32.mrb[0].mxu0
  %v4302 = vadd.f32 0.0, %v4301
  %v4303 = vpop.f32.mrb[0].mxu0
  %4304 = vmatprep.mubr.bf16.mxu0 0
  %4305 = vmatmul.mubr.bf16.gmra.mrb[0].mxu0 %v3570
  %v4306 = vpop.f32.mrb[0].mxu0
  %v4307 = vadd.f32 0.0, %v4306
  %v4308 = vpop.f32.mrb[0].mxu0
  %v4309 = vpop.f32.mrb[0].mxu0
  %v4310 = vadd.f32 0.0, %v4309
  %v4311 = vpop.f32.mrb[0].mxu0
  %4312 = vdwg.mxu0
  %4313 = vrot.lane.b32.xlu0 %v1002, 64
  %v4314 = vpop.permute.xlu0 %4313
  %4315 = vrot.lane.b32.xlu0 %v1003, 64
  %v4316 = vpop.permute.xlu0 %4315
  %4317 = vrot.lane.b32.xlu0 %v1004, 64
  %v4318 = vpop.permute.xlu0 %4317
  %4319 = vrot.lane.b32.xlu0 %v1005, 64
  %v4320 = vpop.permute.xlu0 %4319
  %4321 = vrot.lane.b32.xlu0 %v1006, 64
  %v4322 = vpop.permute.xlu0 %4321
  %4323 = vrot.lane.b32.xlu0 %v1007, 64
  %v4324 = vpop.permute.xlu0 %4323
  %4325 = vrot.lane.b32.xlu0 %v1008, 64
  %v4326 = vpop.permute.xlu0 %4325
  %4327 = vrot.lane.b32.xlu0 %v1009, 64
  %v4328 = vpop.permute.xlu0 %4327
  %4337 = vmatprep.subr.bf16.mxu0 0
  %4338 = vmatpush1.bf16.msra.mxu0 %v4314
  %4339 = vmatprep.subr.bf16.mxu0 0
  %4340 = vmatpush1.bf16.msra.mxu0 %v4316
  %4341 = vmatprep.subr.bf16.mxu0 0
  %4342 = vmatpush1.bf16.msra.mxu0 %v4318
  %4343 = vmatprep.subr.bf16.mxu0 0
  %4344 = vmatpush1.bf16.msra.mxu0 %v4320
  %4345 = vmatprep.subr.bf16.mxu0 0
  %4346 = vmatpush1.bf16.msra.mxu0 %v4322
  %4347 = vmatprep.subr.bf16.mxu0 0
  %4348 = vmatpush1.bf16.msra.mxu0 %v4324
  %4349 = vmatprep.subr.bf16.mxu0 0
  %4350 = vmatpush1.bf16.msra.mxu0 %v4326
  %4351 = vmatprep.subr.bf16.mxu0 0
  %4352 = vmatpush1.bf16.msra.mxu0 %v4328
  %4353 = vmatprep.subr.bf16.mxu0 0
  %4354 = vmatpush1.bf16.msra.mxu0 0
  %4355 = vmatprep.subr.bf16.mxu0 0
  %4356 = vmatpush1.bf16.msra.mxu0 0
  %4357 = vmatprep.subr.bf16.mxu0 0
  %4358 = vmatpush1.bf16.msra.mxu0 0
  %4359 = vmatprep.subr.bf16.mxu0 0
  %4360 = vmatpush1.bf16.msra.mxu0 0
  %4361 = vmatprep.subr.bf16.mxu0 0
  %4362 = vmatpush1.bf16.msra.mxu0 0
  %4363 = vmatprep.subr.bf16.mxu0 0
  %4364 = vmatpush1.bf16.msra.mxu0 0
  %4365 = vmatprep.subr.bf16.mxu0 0
  %4366 = vmatpush1.bf16.msra.mxu0 0
  %4367 = vmatprep.subr.bf16.mxu0 0
  %4368 = vmatpush1.bf16.msra.mxu0 0
  %4369 = vmatprep.mubr.bf16.mxu0 0
  %4370 = vmatmul.mubr.bf16.gmra.mrb[0].mxu0 %v3571
  %v4371 = vpop.f32.mrb[0].mxu0
  %v4372 = vadd.f32 0.0, %v4371
  %v4373 = vpop.f32.mrb[0].mxu0
  %v4374 = vpop.f32.mrb[0].mxu0
  %v4375 = vadd.f32 0.0, %v4374
  %v4376 = vpop.f32.mrb[0].mxu0
  %4377 = vmatprep.mubr.bf16.mxu0 0
  %4378 = vmatmul.mubr.bf16.gmra.mrb[0].mxu0 %v3572
  %v4379 = vpop.f32.mrb[0].mxu0
  %v4380 = vadd.f32 0.0, %v4379
  %v4381 = vpop.f32.mrb[0].mxu0
  %v4382 = vpop.f32.mrb[0].mxu0
  %v4383 = vadd.f32 0.0, %v4382
  %v4384 = vpop.f32.mrb[0].mxu0
  %4385 = vmatprep.mubr.bf16.mxu0 0
  %4386 = vmatmul.mubr.bf16.gmra.mrb[0].mxu0 %v3573
  %v4387 = vpop.f32.mrb[0].mxu0
  %v4388 = vadd.f32 0.0, %v4387
  %v4389 = vpop.f32.mrb[0].mxu0
  %v4390 = vpop.f32.mrb[0].mxu0
  %v4391 = vadd.f32 0.0, %v4390
  %v4392 = vpop.f32.mrb[0].mxu0
  %4393 = vmatprep.mubr.bf16.mxu0 0
  %4394 = vmatmul.mubr.bf16.gmra.mrb[0].mxu0 %v3574
  %v4395 = vpop.f32.mrb[0].mxu0
  %v4396 = vadd.f32 0.0, %v4395
  %v4397 = vpop.f32.mrb[0].mxu0
  %v4398 = vpop.f32.mrb[0].mxu0
  %v4399 = vadd.f32 0.0, %v4398
  %v4400 = vpop.f32.mrb[0].mxu0
  %4401 = vmatprep.mubr.bf16.mxu0 0
  %4402 = vmatmul.mubr.bf16.gmra.mrb[0].mxu0 %v3575
  %v4403 = vpop.f32.mrb[0].mxu0
  %v4404 = vadd.f32 0.0, %v4403
  %v4405 = vpop.f32.mrb[0].mxu0
  %v4406 = vpop.f32.mrb[0].mxu0
  %v4407 = vadd.f32 0.0, %v4406
  %v4408 = vpop.f32.mrb[0].mxu0
  %4409 = vmatprep.mubr.bf16.mxu0 0
  %4410 = vmatmul.mubr.bf16.gmra.mrb[0].mxu0 %v3576
  %v4411 = vpop.f32.mrb[0].mxu0
  %v4412 = vadd.f32 0.0, %v4411
  %v4413 = vpop.f32.mrb[0].mxu0
  %v4414 = vpop.f32.mrb[0].mxu0
  %v4415 = vadd.f32 0.0, %v4414
  %v4416 = vpop.f32.mrb[0].mxu0
  %4417 = vmatprep.mubr.bf16.mxu0 0
  %4418 = vmatmul.mubr.bf16.gmra.mrb[0].mxu0 %v3577
  %v4419 = vpop.f32.mrb[0].mxu0
  %v4420 = vadd.f32 0.0, %v4419
  %v4421 = vpop.f32.mrb[0].mxu0
  %v4422 = vpop.f32.mrb[0].mxu0
  %v4423 = vadd.f32 0.0, %v4422
  %v4424 = vpop.f32.mrb[0].mxu0
  %4425 = vmatprep.mubr.bf16.mxu0 0
  %4426 = vmatmul.mubr.bf16.gmra.mrb[0].mxu0 %v3578
  %v4427 = vpop.f32.mrb[0].mxu0
  %v4428 = vadd.f32 0.0, %v4427
  %v4429 = vpop.f32.mrb[0].mxu0
  %v4430 = vpop.f32.mrb[0].mxu0
  %v4431 = vadd.f32 0.0, %v4430
  %v4432 = vpop.f32.mrb[0].mxu0
  %4433 = vdwg.mxu0
  %4434 = vrot.lane.b32.xlu0 %v1010, 64
  %v4435 = vpop.permute.xlu0 %4434
  %4436 = vrot.lane.b32.xlu0 %v1011, 64
  %v4437 = vpop.permute.xlu0 %4436
  %4438 = vrot.lane.b32.xlu0 %v1012, 64
  %v4439 = vpop.permute.xlu0 %4438
  %4440 = vrot.lane.b32.xlu0 %v1013, 64
  %v4441 = vpop.permute.xlu0 %4440
  %4442 = vrot.lane.b32.xlu0 %v1014, 64
  %v4443 = vpop.permute.xlu0 %4442
  %4444 = vrot.lane.b32.xlu0 %v1015, 64
  %v4445 = vpop.permute.xlu0 %4444
  %4446 = vrot.lane.b32.xlu0 %v1016, 64
  %v4447 = vpop.permute.xlu0 %4446
  %4448 = vrot.lane.b32.xlu0 %v1017, 64
  %v4449 = vpop.permute.xlu0 %4448
  %4458 = vmatprep.subr.bf16.mxu0 0
  %4459 = vmatpush1.bf16.msra.mxu0 %v4435
  %4460 = vmatprep.subr.bf16.mxu0 0
  %4461 = vmatpush1.bf16.msra.mxu0 %v4437
  %4462 = vmatprep.subr.bf16.mxu0 0
  %4463 = vmatpush1.bf16.msra.mxu0 %v4439
  %4464 = vmatprep.subr.bf16.mxu0 0
  %4465 = vmatpush1.bf16.msra.mxu0 %v4441
  %4466 = vmatprep.subr.bf16.mxu0 0
  %4467 = vmatpush1.bf16.msra.mxu0 %v4443
  %4468 = vmatprep.subr.bf16.mxu0 0
  %4469 = vmatpush1.bf16.msra.mxu0 %v4445
  %4470 = vmatprep.subr.bf16.mxu0 0
  %4471 = vmatpush1.bf16.msra.mxu0 %v4447
  %4472 = vmatprep.subr.bf16.mxu0 0
  %4473 = vmatpush1.bf16.msra.mxu0 %v4449
  %4474 = vmatprep.subr.bf16.mxu0 0
  %4475 = vmatpush1.bf16.msra.mxu0 0
  %4476 = vmatprep.subr.bf16.mxu0 0
  %4477 = vmatpush1.bf16.msra.mxu0 0
  %4478 = vmatprep.subr.bf16.mxu0 0
  %4479 = vmatpush1.bf16.msra.mxu0 0
  %4480 = vmatprep.subr.bf16.mxu0 0
  %4481 = vmatpush1.bf16.msra.mxu0 0
  %4482 = vmatprep.subr.bf16.mxu0 0
  %4483 = vmatpush1.bf16.msra.mxu0 0
  %4484 = vmatprep.subr.bf16.mxu0 0
  %4485 = vmatpush1.bf16.msra.mxu0 0
  %4486 = vmatprep.subr.bf16.mxu0 0
  %4487 = vmatpush1.bf16.msra.mxu0 0
  %4488 = vmatprep.subr.bf16.mxu0 0
  %4489 = vmatpush1.bf16.msra.mxu0 0
  %4490 = vmatprep.mubr.bf16.mxu0 0
  %4491 = vmatmul.mubr.bf16.gmra.mrb[0].mxu0 %v3579
  %v4492 = vpop.f32.mrb[0].mxu0
  %v4493 = vadd.f32 0.0, %v4492
  %v4494 = vpop.f32.mrb[0].mxu0
  %v4495 = vpop.f32.mrb[0].mxu0
  %v4496 = vadd.f32 0.0, %v4495
  %v4497 = vpop.f32.mrb[0].mxu0
  %4498 = vmatprep.mubr.bf16.mxu0 0
  %4499 = vmatmul.mubr.bf16.gmra.mrb[0].mxu0 %v3580
  %v4500 = vpop.f32.mrb[0].mxu0
  %v4501 = vadd.f32 0.0, %v4500
  %v4502 = vpop.f32.mrb[0].mxu0
  %v4503 = vpop.f32.mrb[0].mxu0
  %v4504 = vadd.f32 0.0, %v4503
  %v4505 = vpop.f32.mrb[0].mxu0
  %4506 = vmatprep.mubr.bf16.mxu0 0
  %4507 = vmatmul.mubr.bf16.gmra.mrb[0].mxu0 %v3581
  %v4508 = vpop.f32.mrb[0].mxu0
  %v4509 = vadd.f32 0.0, %v4508
  %v4510 = vpop.f32.mrb[0].mxu0
  %v4511 = vpop.f32.mrb[0].mxu0
  %v4512 = vadd.f32 0.0, %v4511
  %v4513 = vpop.f32.mrb[0].mxu0
  %4514 = vmatprep.mubr.bf16.mxu0 0
  %4515 = vmatmul.mubr.bf16.gmra.mrb[0].mxu0 %v3582
  %v4516 = vpop.f32.mrb[0].mxu0
  %v4517 = vadd.f32 0.0, %v4516
  %v4518 = vpop.f32.mrb[0].mxu0
  %v4519 = vpop.f32.mrb[0].mxu0
  %v4520 = vadd.f32 0.0, %v4519
  %v4521 = vpop.f32.mrb[0].mxu0
  %4522 = vmatprep.mubr.bf16.mxu0 0
  %4523 = vmatmul.mubr.bf16.gmra.mrb[0].mxu0 %v3583
  %v4524 = vpop.f32.mrb[0].mxu0
  %v4525 = vadd.f32 0.0, %v4524
  %v4526 = vpop.f32.mrb[0].mxu0
  %v4527 = vpop.f32.mrb[0].mxu0
  %v4528 = vadd.f32 0.0, %v4527
  %v4529 = vpop.f32.mrb[0].mxu0
  %4530 = vmatprep.mubr.bf16.mxu0 0
  %4531 = vmatmul.mubr.bf16.gmra.mrb[0].mxu0 %v3584
  %v4532 = vpop.f32.mrb[0].mxu0
  %v4533 = vadd.f32 0.0, %v4532
  %v4534 = vpop.f32.mrb[0].mxu0
  %v4535 = vpop.f32.mrb[0].mxu0
  %v4536 = vadd.f32 0.0, %v4535
  %v4537 = vpop.f32.mrb[0].mxu0
  %4538 = vmatprep.mubr.bf16.mxu0 0
  %4539 = vmatmul.mubr.bf16.gmra.mrb[0].mxu0 %v3585
  %v4540 = vpop.f32.mrb[0].mxu0
  %v4541 = vadd.f32 0.0, %v4540
  %v4542 = vpop.f32.mrb[0].mxu0
  %v4543 = vpop.f32.mrb[0].mxu0
  %v4544 = vadd.f32 0.0, %v4543
  %v4545 = vpop.f32.mrb[0].mxu0
  %4546 = vmatprep.mubr.bf16.mxu0 0
  %4547 = vmatmul.mubr.bf16.gmra.mrb[0].mxu0 %v3586
  %v4548 = vpop.f32.mrb[0].mxu0
  %v4549 = vadd.f32 0.0, %v4548
  %v4550 = vpop.f32.mrb[0].mxu0
  %v4551 = vpop.f32.mrb[0].mxu0
  %v4552 = vadd.f32 0.0, %v4551
  %v4553 = vpop.f32.mrb[0].mxu0
  %4554 = vdwg.mxu0
  %4555 = vst.msk [vmem:[%s2] sm:$0xff] %vm1042, %v3646
  %4556 = vst.msk [vmem:[%s2 + $0x8] sm:$0xff] %vm1042, %v3649
  %4557 = vst.msk [vmem:[%s2 + $0x10] sm:$0xff] %vm1042, %v3654
  %4558 = vst.msk [vmem:[%s2 + $0x18] sm:$0xff] %vm1042, %v3657
  %4559 = vst.msk [vmem:[%s2 + $0x20] sm:$0xff] %vm1042, %v3662
  %4560 = vst.msk [vmem:[%s2 + $0x28] sm:$0xff] %vm1042, %v3665
  %4561 = vst.msk [vmem:[%s2 + $0x30] sm:$0xff] %vm1042, %v3670
  %4562 = vst.msk [vmem:[%s2 + $0x38] sm:$0xff] %vm1042, %v3673
  %4563 = vst.msk [vmem:[%s2 + $0x40] sm:$0xff] %vm1042, %v3678
  %4564 = vst.msk [vmem:[%s2 + $0x48] sm:$0xff] %vm1042, %v3681
  %4565 = vst.msk [vmem:[%s2 + $0x50] sm:$0xff] %vm1042, %v3686
  %4566 = vst.msk [vmem:[%s2 + $0x58] sm:$0xff] %vm1042, %v3689
  %4567 = vst.msk [vmem:[%s2 + $0x60] sm:$0xff] %vm1042, %v3694
  %4568 = vst.msk [vmem:[%s2 + $0x68] sm:$0xff] %vm1042, %v3697
  %4569 = vst.msk [vmem:[%s2 + $0x70] sm:$0xff] %vm1042, %v3702
  %4570 = vst.msk [vmem:[%s2 + $0x78] sm:$0xff] %vm1042, %v3705
  %4571 = vst.msk [vmem:[%s2 + $0x80] sm:$0xff] %vm1042, %v3767
  %4572 = vst.msk [vmem:[%s2 + $0x88] sm:$0xff] %vm1042, %v3770
  %4573 = vst.msk [vmem:[%s2 + $0x90] sm:$0xff] %vm1042, %v3775
  %4574 = vst.msk [vmem:[%s2 + $0x98] sm:$0xff] %vm1042, %v3778
  %4575 = vst.msk [vmem:[%s2 + $0xa0] sm:$0xff] %vm1042, %v3783
  %4576 = vst.msk [vmem:[%s2 + $0xa8] sm:$0xff] %vm1042, %v3786
  %4577 = vst.msk [vmem:[%s2 + $0xb0] sm:$0xff] %vm1042, %v3791
  %4578 = vst.msk [vmem:[%s2 + $0xb8] sm:$0xff] %vm1042, %v3794
  %4579 = vst.msk [vmem:[%s2 + $0xc0] sm:$0xff] %vm1042, %v3799
  %4580 = vst.msk [vmem:[%s2 + $0xc8] sm:$0xff] %vm1042, %v3802
  %4581 = vst.msk [vmem:[%s2 + $0xd0] sm:$0xff] %vm1042, %v3807
  %4582 = vst.msk [vmem:[%s2 + $0xd8] sm:$0xff] %vm1042, %v3810
  %4583 = vst.msk [vmem:[%s2 + $0xe0] sm:$0xff] %vm1042, %v3815
  %4584 = vst.msk [vmem:[%s2 + $0xe8] sm:$0xff] %vm1042, %v3818
  %4585 = vst.msk [vmem:[%s2 + $0xf0] sm:$0xff] %vm1042, %v3823
  %4586 = vst.msk [vmem:[%s2 + $0xf8] sm:$0xff] %vm1042, %v3826
  %4587 = vst.msk [vmem:[%s2 + $0x100] sm:$0xff] %vm1042, %v3888
  %4588 = vst.msk [vmem:[%s2 + $0x108] sm:$0xff] %vm1042, %v3891
  %4589 = vst.msk [vmem:[%s2 + $0x110] sm:$0xff] %vm1042, %v3896
  %4590 = vst.msk [vmem:[%s2 + $0x118] sm:$0xff] %vm1042, %v3899
  %4591 = vst.msk [vmem:[%s2 + $0x120] sm:$0xff] %vm1042, %v3904
  %4592 = vst.msk [vmem:[%s2 + $0x128] sm:$0xff] %vm1042, %v3907
  %4593 = vst.msk [vmem:[%s2 + $0x130] sm:$0xff] %vm1042, %v3912
  %4594 = vst.msk [vmem:[%s2 + $0x138] sm:$0xff] %vm1042, %v3915
  %4595 = vst.msk [vmem:[%s2 + $0x140] sm:$0xff] %vm1042, %v3920
  %4596 = vst.msk [vmem:[%s2 + $0x148] sm:$0xff] %vm1042, %v3923
  %4597 = vst.msk [vmem:[%s2 + $0x150] sm:$0xff] %vm1042, %v3928
  %4598 = vst.msk [vmem:[%s2 + $0x158] sm:$0xff] %vm1042, %v3931
  %4599 = vst.msk [vmem:[%s2 + $0x160] sm:$0xff] %vm1042, %v3936
  %4600 = vst.msk [vmem:[%s2 + $0x168] sm:$0xff] %vm1042, %v3939
  %4601 = vst.msk [vmem:[%s2 + $0x170] sm:$0xff] %vm1042, %v3944
  %4602 = vst.msk [vmem:[%s2 + $0x178] sm:$0xff] %vm1042, %v3947
  %4603 = vst.msk [vmem:[%s2 + $0x180] sm:$0xff] %vm1042, %v4009
  %4604 = vst.msk [vmem:[%s2 + $0x188] sm:$0xff] %vm1042, %v4012
  %4605 = vst.msk [vmem:[%s2 + $0x190] sm:$0xff] %vm1042, %v4017
  %4606 = vst.msk [vmem:[%s2 + $0x198] sm:$0xff] %vm1042, %v4020
  %4607 = vst.msk [vmem:[%s2 + $0x1a0] sm:$0xff] %vm1042, %v4025
  %4608 = vst.msk [vmem:[%s2 + $0x1a8] sm:$0xff] %vm1042, %v4028
  %4609 = vst.msk [vmem:[%s2 + $0x1b0] sm:$0xff] %vm1042, %v4033
  %4610 = vst.msk [vmem:[%s2 + $0x1b8] sm:$0xff] %vm1042, %v4036
  %4611 = vst.msk [vmem:[%s2 + $0x1c0] sm:$0xff] %vm1042, %v4041
  %4612 = vst.msk [vmem:[%s2 + $0x1c8] sm:$0xff] %vm1042, %v4044
  %4613 = vst.msk [vmem:[%s2 + $0x1d0] sm:$0xff] %vm1042, %v4049
  %4614 = vst.msk [vmem:[%s2 + $0x1d8] sm:$0xff] %vm1042, %v4052
  %4615 = vst.msk [vmem:[%s2 + $0x1e0] sm:$0xff] %vm1042, %v4057
  %4616 = vst.msk [vmem:[%s2 + $0x1e8] sm:$0xff] %vm1042, %v4060
  %4617 = vst.msk [vmem:[%s2 + $0x1f0] sm:$0xff] %vm1042, %v4065
  %4618 = vst.msk [vmem:[%s2 + $0x1f8] sm:$0xff] %vm1042, %v4068
  %4619 = vst.msk [vmem:[%s2 + $0x200] sm:$0xff] %vm1042, %v4130
  %4620 = vst.msk [vmem:[%s2 + $0x208] sm:$0xff] %vm1042, %v4133
  %4621 = vst.msk [vmem:[%s2 + $0x210] sm:$0xff] %vm1042, %v4138
  %4622 = vst.msk [vmem:[%s2 + $0x218] sm:$0xff] %vm1042, %v4141
  %4623 = vst.msk [vmem:[%s2 + $0x220] sm:$0xff] %vm1042, %v4146
  %4624 = vst.msk [vmem:[%s2 + $0x228] sm:$0xff] %vm1042, %v4149
  %4625 = vst.msk [vmem:[%s2 + $0x230] sm:$0xff] %vm1042, %v4154
  %4626 = vst.msk [vmem:[%s2 + $0x238] sm:$0xff] %vm1042, %v4157
  %4627 = vst.msk [vmem:[%s2 + $0x240] sm:$0xff] %vm1042, %v4162
  %4628 = vst.msk [vmem:[%s2 + $0x248] sm:$0xff] %vm1042, %v4165
  %4629 = vst.msk [vmem:[%s2 + $0x250] sm:$0xff] %vm1042, %v4170
  %4630 = vst.msk [vmem:[%s2 + $0x258] sm:$0xff] %vm1042, %v4173
  %4631 = vst.msk [vmem:[%s2 + $0x260] sm:$0xff] %vm1042, %v4178
  %4632 = vst.msk [vmem:[%s2 + $0x268] sm:$0xff] %vm1042, %v4181
  %4633 = vst.msk [vmem:[%s2 + $0x270] sm:$0xff] %vm1042, %v4186
  %4634 = vst.msk [vmem:[%s2 + $0x278] sm:$0xff] %vm1042, %v4189
  %4635 = vst.msk [vmem:[%s2 + $0x280] sm:$0xff] %vm1042, %v4251
  %4636 = vst.msk [vmem:[%s2 + $0x288] sm:$0xff] %vm1042, %v4254
  %4637 = vst.msk [vmem:[%s2 + $0x290] sm:$0xff] %vm1042, %v4259
  %4638 = vst.msk [vmem:[%s2 + $0x298] sm:$0xff] %vm1042, %v4262
  %4639 = vst.msk [vmem:[%s2 + $0x2a0] sm:$0xff] %vm1042, %v4267
  %4640 = vst.msk [vmem:[%s2 + $0x2a8] sm:$0xff] %vm1042, %v4270
  %4641 = vst.msk [vmem:[%s2 + $0x2b0] sm:$0xff] %vm1042, %v4275
  %4642 = vst.msk [vmem:[%s2 + $0x2b8] sm:$0xff] %vm1042, %v4278
  %4643 = vst.msk [vmem:[%s2 + $0x2c0] sm:$0xff] %vm1042, %v4283
  %4644 = vst.msk [vmem:[%s2 + $0x2c8] sm:$0xff] %vm1042, %v4286
  %4645 = vst.msk [vmem:[%s2 + $0x2d0] sm:$0xff] %vm1042, %v4291
  %4646 = vst.msk [vmem:[%s2 + $0x2d8] sm:$0xff] %vm1042, %v4294
  %4647 = vst.msk [vmem:[%s2 + $0x2e0] sm:$0xff] %vm1042, %v4299
  %4648 = vst.msk [vmem:[%s2 + $0x2e8] sm:$0xff] %vm1042, %v4302
  %4649 = vst.msk [vmem:[%s2 + $0x2f0] sm:$0xff] %vm1042, %v4307
  %4650 = vst.msk [vmem:[%s2 + $0x2f8] sm:$0xff] %vm1042, %v4310
  %4651 = vst.msk [vmem:[%s2 + $0x300] sm:$0xff] %vm1042, %v4372
  %4652 = vst.msk [vmem:[%s2 + $0x308] sm:$0xff] %vm1042, %v4375
  %4653 = vst.msk [vmem:[%s2 + $0x310] sm:$0xff] %vm1042, %v4380
  %4654 = vst.msk [vmem:[%s2 + $0x318] sm:$0xff] %vm1042, %v4383
  %4655 = vst.msk [vmem:[%s2 + $0x320] sm:$0xff] %vm1042, %v4388
  %4656 = vst.msk [vmem:[%s2 + $0x328] sm:$0xff] %vm1042, %v4391
  %4657 = vst.msk [vmem:[%s2 + $0x330] sm:$0xff] %vm1042, %v4396
  %4658 = vst.msk [vmem:[%s2 + $0x338] sm:$0xff] %vm1042, %v4399
  %4659 = vst.msk [vmem:[%s2 + $0x340] sm:$0xff] %vm1042, %v4404
  %4660 = vst.msk [vmem:[%s2 + $0x348] sm:$0xff] %vm1042, %v4407
  %4661 = vst.msk [vmem:[%s2 + $0x350] sm:$0xff] %vm1042, %v4412
  %4662 = vst.msk [vmem:[%s2 + $0x358] sm:$0xff] %vm1042, %v4415
  %4663 = vst.msk [vmem:[%s2 + $0x360] sm:$0xff] %vm1042, %v4420
  %4664 = vst.msk [vmem:[%s2 + $0x368] sm:$0xff] %vm1042, %v4423
  %4665 = vst.msk [vmem:[%s2 + $0x370] sm:$0xff] %vm1042, %v4428
  %4666 = vst.msk [vmem:[%s2 + $0x378] sm:$0xff] %vm1042, %v4431
  %4667 = vst.msk [vmem:[%s2 + $0x380] sm:$0xff] %vm1042, %v4493
  %4668 = vst.msk [vmem:[%s2 + $0x388] sm:$0xff] %vm1042, %v4496
  %4669 = vst.msk [vmem:[%s2 + $0x390] sm:$0xff] %vm1042, %v4501
  %4670 = vst.msk [vmem:[%s2 + $0x398] sm:$0xff] %vm1042, %v4504
  %4671 = vst.msk [vmem:[%s2 + $0x3a0] sm:$0xff] %vm1042, %v4509
  %4672 = vst.msk [vmem:[%s2 + $0x3a8] sm:$0xff] %vm1042, %v4512
  %4673 = vst.msk [vmem:[%s2 + $0x3b0] sm:$0xff] %vm1042, %v4517
  %4674 = vst.msk [vmem:[%s2 + $0x3b8] sm:$0xff] %vm1042, %v4520
  %4675 = vst.msk [vmem:[%s2 + $0x3c0] sm:$0xff] %vm1042, %v4525
  %4676 = vst.msk [vmem:[%s2 + $0x3c8] sm:$0xff] %vm1042, %v4528
  %4677 = vst.msk [vmem:[%s2 + $0x3d0] sm:$0xff] %vm1042, %v4533
  %4678 = vst.msk [vmem:[%s2 + $0x3d8] sm:$0xff] %vm1042, %v4536
  %4679 = vst.msk [vmem:[%s2 + $0x3e0] sm:$0xff] %vm1042, %v4541
  %4680 = vst.msk [vmem:[%s2 + $0x3e8] sm:$0xff] %vm1042, %v4544
  %4681 = vst.msk [vmem:[%s2 + $0x3f0] sm:$0xff] %vm1042, %v4549
  %4682 = vst.msk [vmem:[%s2 + $0x3f8] sm:$0xff] %vm1042, %v4552
  // Predicated region
  $region10: #{tpu_custom_call.1} parent=0 // pred_check
    _
  $region11: #{tpu_custom_call.1} parent=0 // pred_check_branch
    %4684 = sbr.rel (0) target = $region13
  $region12: #{tpu_custom_call.1} parent=0 // pred_region
    _
  $region13: #{tpu_custom_call.1} parent=0 // pred_fallthru
    _
  // Predicated region
  $region14: #{tpu_custom_call.1} parent=0 // pred_check
    _
  $region15: #{tpu_custom_call.1} parent=0 // pred_check_branch
    %4686 = sbr.rel (0) target = $region17
  $region16: #{tpu_custom_call.1} parent=0 // pred_region
    _
  $region17: #{tpu_custom_call.1} parent=0 // pred_fallthru
    _

</llo_original>
